<compile_context>
chip_gen: v6e
topology: v6e:2x2x1
jax: 0.10.0
libtpu: 0.0.40
codegen_flags: <defaults>
</compile_context>

<pallas_src>
import functools
import math

import jax
import jax.numpy as jnp
from jax.experimental import pallas as pl
from jax.experimental.pallas import tpu as pltpu


# ----------------------------- fused forward kernel ------------------------------

def _bert_forward_kernel(
    x_ref, mask_ref, emb_g_ref, emb_b_ref,
    wqkv_ref, bqkv_ref, wo_ref, bo_ref,
    ln1_g_ref, ln1_b_ref, w1_ref, b1_ref,
    w2_ref, b2_ref, ln2_g_ref, ln2_b_ref,
    pool_w_ref, pool_b_ref, out_w_ref, out_b_ref,
    o_ref, *, B, S, H, nh, n_layers, eps):
    """Whole InterestClassifier forward on VMEM-resident data.

    x_ref   : [B*S, H]  summed embeddings (pre-LayerNorm)
    mask_ref: [B, S]    additive attention mask (0 / -1e4)
    o_ref   : [B, C]    logits
    Per-layer params are stacked along a leading L axis and indexed statically.
    """
    dh = H // nh
    scale = 1.0 / math.sqrt(dh)

    def ln(x, g, b):
        mu = jnp.mean(x, axis=-1, keepdims=True)
        var = jnp.mean(jnp.square(x - mu), axis=-1, keepdims=True)
        return (x - mu) * jax.lax.rsqrt(var + eps) * g + b

    def gelu(y):
        # tanh-approx GELU (BERT reference uses erf-GELU; small numeric drift).
        # TODO(synk): erf-GELU if exact parity with HF BERT is required.
        return 0.5 * y * (1.0 + jnp.tanh(0.7978845608028654 * (y + 0.044715 * y * y * y)))

    # --- embedding LayerNorm ---
    x = ln(x_ref[...], emb_g_ref[...], emb_b_ref[...])          # [B*S, H]
    mask = mask_ref[...]                                         # [B, S]

    # --- transformer encoder layers (static unroll) ---
    for l in range(n_layers):
        # fused Q/K/V projection: one MXU pass, 3H-wide lanes
        qkv = jnp.dot(x, wqkv_ref[l], preferred_element_type=jnp.float32) + bqkv_ref[l]

        wo_l = wo_ref[l]                                         # [H, H]
        attn = jnp.zeros((B * S, H), jnp.float32)
        for h in range(nh):                                      # static per-head loop, VMEM-resident
            q_h = qkv[:, h * dh:(h + 1) * dh].reshape(B, S, dh)
            k_h = qkv[:, H + h * dh:H + (h + 1) * dh].reshape(B, S, dh)
            v_h = qkv[:, 2 * H + h * dh:2 * H + (h + 1) * dh].reshape(B, S, dh)

            s = jnp.einsum("bqd,bkd->bqk", q_h, k_h,
                           preferred_element_type=jnp.float32) * scale
            s = s + mask[:, None, :]
            s = s - jnp.max(s, axis=-1, keepdims=True)
            p = jnp.exp(s)
            p = p * pl.reciprocal(jnp.sum(p, axis=-1, keepdims=True), approx=True)
            ctx_h = jnp.einsum("bqk,bkd->bqd", p, v_h,
                               preferred_element_type=jnp.float32)   # [B, S, dh]

            # merge-heads folded into the output projection (no concatenation/transpose)
            attn = attn + jnp.dot(ctx_h.reshape(B * S, dh),
                                  wo_l[h * dh:(h + 1) * dh, :],
                                  preferred_element_type=jnp.float32)
        attn = attn + bo_ref[l]
        x = ln(attn + x, ln1_g_ref[l], ln1_b_ref[l])

        ffn = gelu(jnp.dot(x, w1_ref[l], preferred_element_type=jnp.float32) + b1_ref[l])
        ffn = jnp.dot(ffn, w2_ref[l], preferred_element_type=jnp.float32) + b2_ref[l]
        x = ln(ffn + x, ln2_g_ref[l], ln2_b_ref[l])

    # --- BERT pooler: tanh(Linear(hidden[:, 0])) ---
    cls = x.reshape(B, S, H)[:, 0, :]                            # [B, H]
    pooled = jnp.tanh(jnp.dot(cls, pool_w_ref[...],
                              preferred_element_type=jnp.float32) + pool_b_ref[...])

    # Dropout(p=0.3) is identity at inference (eval mode).
    # TODO(synk): training-mode dropout (PRNG masking + 1/(1-p) scaling) not implemented.

    # --- classification head ---
    o_ref[...] = (jnp.dot(pooled, out_w_ref[...],
                          preferred_element_type=jnp.float32) + out_b_ref[...])


# ----------------------------- model definition ----------------------------

CFG = dict(vocab=100, max_pos=16, hidden=32, n_heads=4, ffn=64, n_layers=2, n_classes=3)


def init_params(key, cfg):
    H, F, V, P = cfg["hidden"], cfg["ffn"], cfg["vocab"], cfg["max_pos"]
    L, C = cfg["n_layers"], cfg["n_classes"]
    keys = iter(jax.random.split(key, 32))
    nrm = lambda shape: 0.02 * jax.random.normal(next(keys), shape, dtype=jnp.float32)

    return {
        "word_emb": nrm((V, H)),
        "pos_emb": nrm((P, H)),
        "type_emb": nrm((2, H)),
        "emb_ln_g": jnp.ones((H,), jnp.float32),
        "emb_ln_b": jnp.zeros((H,), jnp.float32),
        # stacked, QKV-fused encoder-layer parameters
        "wqkv": nrm((L, H, 3 * H)),
        "bqkv": jnp.zeros((L, 1, 3 * H), jnp.float32),
        "wo": nrm((L, H, H)),
        "bo": jnp.zeros((L, 1, H), jnp.float32),
        "ln1_g": jnp.ones((L, 1, H), jnp.float32),
        "ln1_b": jnp.zeros((L, 1, H), jnp.float32),
        "w1": nrm((L, H, F)),
        "b1": jnp.zeros((L, 1, F), jnp.float32),
        "w2": nrm((L, F, H)),
        "b2": jnp.zeros((L, 1, H), jnp.float32),
        "ln2_g": jnp.ones((L, 1, H), jnp.float32),
        "ln2_b": jnp.zeros((L, 1, H), jnp.float32),
        "pool_w": nrm((H, H)),
        "pool_b": jnp.zeros((H,), jnp.float32),
        "out_w": nrm((H, C)),
        "out_b": jnp.zeros((C,), jnp.float32),
    }


def interest_classifier_forward(params, input_ids, attention_mask, cfg):
    B, S = input_ids.shape
    H, nh, L, C = cfg["hidden"], cfg["n_heads"], cfg["n_layers"], cfg["n_classes"]

    # --- BERT embeddings (data-dependent gather stays in plain JAX glue) ---
    x = (params["word_emb"][input_ids]
         + params["pos_emb"][:S][None, :, :]
         + params["type_emb"][0][None, None, :])                 # [B, S, H]
    x = x.reshape(B * S, H).astype(jnp.float32)

    # BERT-style extended additive attention mask.
    mask_add = (1.0 - attention_mask.astype(jnp.float32)) * -10000.0   # [B, S]

    vmem = pl.BlockSpec(memory_space=pltpu.MemorySpace.VMEM)
    inputs = (
        x, mask_add,
        params["emb_ln_g"].reshape(1, H), params["emb_ln_b"].reshape(1, H),
        params["wqkv"], params["bqkv"],
        params["wo"], params["bo"],
        params["ln1_g"], params["ln1_b"],
        params["w1"], params["b1"],
        params["w2"], params["b2"],
        params["ln2_g"], params["ln2_b"],
        params["pool_w"], params["pool_b"].reshape(1, H),
        params["out_w"], params["out_b"].reshape(1, C),
    )

    kernel = functools.partial(
        _bert_forward_kernel, B=B, S=S, H=H, nh=nh, n_layers=L, eps=1e-12)

    return pl.pallas_call(
        kernel,
        out_shape=jax.ShapeDtypeStruct((B, C), jnp.float32),
        in_specs=[vmem] * len(inputs),
        out_specs=vmem,
    )(*inputs)


# --------------------------------- main -------------------------------------

if __name__ == "__main__":
    key = jax.random.PRNGKey(0)
    pkey, ikey = jax.random.split(key)

    params = init_params(pkey, CFG)

    B, S = 2, 8
    input_ids = jax.random.randint(ikey, (B, S), 0, CFG["vocab"], dtype=jnp.int32)
    attention_mask = jnp.ones((B, S), dtype=jnp.int32).at[1, 6:].set(0)  # some padding

    forward = jax.jit(functools.partial(interest_classifier_forward, cfg=CFG))
    logits = forward(params, input_ids, attention_mask)
    logits = jax.block_until_ready(logits)

    assert logits.shape == (B, CFG["n_classes"])
    assert bool(jnp.all(jnp.isfinite(logits)))
    print("KERNEL_OK")
</pallas_src>

<mosaic_0001>
module attributes {stable_mosaic.version = 11 : i64} {
  func.func @_bert_forward_kernel(%arg0: memref<16x32xf32, #tpu.memory_space<vmem>>, %arg1: memref<2x8xf32, #tpu.memory_space<vmem>>, %arg2: memref<1x32xf32, #tpu.memory_space<vmem>>, %arg3: memref<1x32xf32, #tpu.memory_space<vmem>>, %arg4: memref<2x32x96xf32, #tpu.memory_space<vmem>>, %arg5: memref<2x1x96xf32, #tpu.memory_space<vmem>>, %arg6: memref<2x32x32xf32, #tpu.memory_space<vmem>>, %arg7: memref<2x1x32xf32, #tpu.memory_space<vmem>>, %arg8: memref<2x1x32xf32, #tpu.memory_space<vmem>>, %arg9: memref<2x1x32xf32, #tpu.memory_space<vmem>>, %arg10: memref<2x32x64xf32, #tpu.memory_space<vmem>>, %arg11: memref<2x1x64xf32, #tpu.memory_space<vmem>>, %arg12: memref<2x64x32xf32, #tpu.memory_space<vmem>>, %arg13: memref<2x1x32xf32, #tpu.memory_space<vmem>>, %arg14: memref<2x1x32xf32, #tpu.memory_space<vmem>>, %arg15: memref<2x1x32xf32, #tpu.memory_space<vmem>>, %arg16: memref<32x32xf32, #tpu.memory_space<vmem>>, %arg17: memref<1x32xf32, #tpu.memory_space<vmem>>, %arg18: memref<32x3xf32, #tpu.memory_space<vmem>>, %arg19: memref<1x3xf32, #tpu.memory_space<vmem>>, %arg20: memref<2x3xf32, #tpu.memory_space<vmem>>) attributes {dimension_semantics = [], scalar_prefetch = 0 : i64, scratch_operands = 0 : i64, tpu.core_type = #tpu.core_type<tc>} {
    %c0 = arith.constant 0 : index
    %c0_0 = arith.constant 0 : index
    %0 = vector.load %arg0[%c0, %c0_0] : memref<16x32xf32, #tpu.memory_space<vmem>>, vector<16x32xf32>
    %c0_1 = arith.constant 0 : index
    %c0_2 = arith.constant 0 : index
    %1 = vector.load %arg2[%c0_1, %c0_2] : memref<1x32xf32, #tpu.memory_space<vmem>>, vector<1x32xf32>
    %c0_3 = arith.constant 0 : index
    %c0_4 = arith.constant 0 : index
    %2 = vector.load %arg3[%c0_3, %c0_4] : memref<1x32xf32, #tpu.memory_space<vmem>>, vector<1x32xf32>
    %cst = arith.constant dense<0.000000e+00> : vector<16xf32>
    %3 = vector.multi_reduction <add>, %0, %cst [1] : vector<16x32xf32> to vector<16xf32>
    %4 = vector.shape_cast %3 : vector<16xf32> to vector<16x1xf32>
    %cst_5 = arith.constant 3.200000e+01 : f32
    %5 = vector.broadcast %cst_5 : f32 to vector<16x1xf32>
    %6 = arith.divf %4, %5 : vector<16x1xf32>
    %7 = vector.broadcast %6 : vector<16x1xf32> to vector<16x32xf32>
    %8 = arith.subf %0, %7 : vector<16x32xf32>
    %9 = arith.mulf %8, %8 : vector<16x32xf32>
    %cst_6 = arith.constant dense<0.000000e+00> : vector<16xf32>
    %10 = vector.multi_reduction <add>, %9, %cst_6 [1] : vector<16x32xf32> to vector<16xf32>
    %11 = vector.shape_cast %10 : vector<16xf32> to vector<16x1xf32>
    %cst_7 = arith.constant 3.200000e+01 : f32
    %12 = vector.broadcast %cst_7 : f32 to vector<16x1xf32>
    %13 = arith.divf %11, %12 : vector<16x1xf32>
    %14 = vector.broadcast %6 : vector<16x1xf32> to vector<16x32xf32>
    %15 = arith.subf %0, %14 : vector<16x32xf32>
    %cst_8 = arith.constant 9.99999996E-13 : f32
    %16 = vector.broadcast %cst_8 : f32 to vector<16x1xf32>
    %17 = arith.addf %13, %16 : vector<16x1xf32>
    %18 = math.rsqrt %17 : vector<16x1xf32>
    %19 = vector.broadcast %18 : vector<16x1xf32> to vector<16x32xf32>
    %20 = arith.mulf %15, %19 : vector<16x32xf32>
    %21 = vector.broadcast %1 : vector<1x32xf32> to vector<16x32xf32>
    %22 = arith.mulf %20, %21 : vector<16x32xf32>
    %23 = vector.broadcast %2 : vector<1x32xf32> to vector<16x32xf32>
    %24 = arith.addf %22, %23 : vector<16x32xf32>
    %c0_9 = arith.constant 0 : index
    %c0_10 = arith.constant 0 : index
    %25 = vector.load %arg1[%c0_9, %c0_10] : memref<2x8xf32, #tpu.memory_space<vmem>>, vector<2x8xf32>
    %c0_11 = arith.constant 0 : index
    %c0_12 = arith.constant 0 : index
    %c0_13 = arith.constant 0 : index
    %26 = vector.load %arg4[%c0_11, %c0_12, %c0_13] : memref<2x32x96xf32, #tpu.memory_space<vmem>>, vector<1x32x96xf32>
    %27 = vector.shape_cast %26 : vector<1x32x96xf32> to vector<32x96xf32>
    %cst_14 = arith.constant dense<0.000000e+00> : vector<16x96xf32>
    %28 = tpu.matmul %24, %27, %cst_14 {dimension_numbers = #tpu.dot_dimension_numbers<[1], [0], [0], [1], [0, 0, 1, 1], [], []>} : vector<16x32xf32>, vector<32x96xf32>, vector<16x96xf32> -> vector<16x96xf32>
    %c0_15 = arith.constant 0 : index
    %c0_16 = arith.constant 0 : index
    %c0_17 = arith.constant 0 : index
    %29 = vector.load %arg5[%c0_15, %c0_16, %c0_17] : memref<2x1x96xf32, #tpu.memory_space<vmem>>, vector<1x1x96xf32>
    %30 = vector.shape_cast %29 : vector<1x1x96xf32> to vector<1x96xf32>
    %31 = vector.broadcast %30 : vector<1x96xf32> to vector<16x96xf32>
    %32 = arith.addf %28, %31 : vector<16x96xf32>
    %c0_18 = arith.constant 0 : index
    %c0_19 = arith.constant 0 : index
    %c0_20 = arith.constant 0 : index
    %33 = vector.load %arg6[%c0_18, %c0_19, %c0_20] : memref<2x32x32xf32, #tpu.memory_space<vmem>>, vector<1x32x32xf32>
    %34 = vector.shape_cast %33 : vector<1x32x32xf32> to vector<32x32xf32>
    %cst_21 = arith.constant 0.000000e+00 : f32
    %35 = vector.broadcast %cst_21 : f32 to vector<16x32xf32>
    %36 = vector.extract_strided_slice %32 {offsets = [0, 0], sizes = [16, 8], strides = [1, 1]} : vector<16x96xf32> to vector<16x8xf32>
    %37 = vector.shape_cast %36 : vector<16x8xf32> to vector<2x8x8xf32>
    %38 = vector.extract_strided_slice %32 {offsets = [0, 32], sizes = [16, 8], strides = [1, 1]} : vector<16x96xf32> to vector<16x8xf32>
    %39 = vector.shape_cast %38 : vector<16x8xf32> to vector<2x8x8xf32>
    %40 = vector.extract_strided_slice %32 {offsets = [0, 64], sizes = [16, 8], strides = [1, 1]} : vector<16x96xf32> to vector<16x8xf32>
    %41 = vector.shape_cast %40 : vector<16x8xf32> to vector<2x8x8xf32>
    "tpu.trace_start"() <{level = 10 : i32, message = "bqd,bkd->bqk"}> : () -> ()
    %cst_22 = arith.constant dense<0.000000e+00> : vector<2x8x8xf32>
    %42 = tpu.matmul %37, %39, %cst_22 {dimension_numbers = #tpu.dot_dimension_numbers<[2], [2], [1], [1], [0, 0, 0, 1, 1, 1], [0], [0]>} : vector<2x8x8xf32>, vector<2x8x8xf32>, vector<2x8x8xf32> -> vector<2x8x8xf32>
    "tpu.trace_stop"() : () -> ()
    %cst_23 = arith.constant 0.353553385 : f32
    %43 = vector.broadcast %cst_23 : f32 to vector<2x8x8xf32>
    %44 = arith.mulf %42, %43 : vector<2x8x8xf32>
    %45 = vector.shape_cast %25 : vector<2x8xf32> to vector<2x1x8xf32>
    %46 = vector.broadcast %45 : vector<2x1x8xf32> to vector<2x8x8xf32>
    %47 = arith.addf %44, %46 : vector<2x8x8xf32>
    %cst_24 = arith.constant dense<0xFF800000> : vector<2x8xf32>
    %48 = vector.multi_reduction <maximumf>, %47, %cst_24 [2] : vector<2x8x8xf32> to vector<2x8xf32>
    %49 = vector.shape_cast %48 : vector<2x8xf32> to vector<2x8x1xf32>
    %50 = vector.broadcast %49 : vector<2x8x1xf32> to vector<2x8x8xf32>
    %51 = arith.subf %47, %50 : vector<2x8x8xf32>
    %52 = math.exp %51 : vector<2x8x8xf32>
    %cst_25 = arith.constant dense<0.000000e+00> : vector<2x8xf32>
    %53 = vector.multi_reduction <add>, %52, %cst_25 [2] : vector<2x8x8xf32> to vector<2x8xf32>
    %54 = vector.shape_cast %53 : vector<2x8xf32> to vector<2x8x1xf32>
    %55 = tpu.reciprocal %54 {approx = true} : vector<2x8x1xf32> -> vector<2x8x1xf32>
    %56 = vector.broadcast %55 : vector<2x8x1xf32> to vector<2x8x8xf32>
    %57 = arith.mulf %52, %56 : vector<2x8x8xf32>
    "tpu.trace_start"() <{level = 10 : i32, message = "bqk,bkd->bqd"}> : () -> ()
    %cst_26 = arith.constant dense<0.000000e+00> : vector<2x8x8xf32>
    %58 = tpu.matmul %57, %41, %cst_26 {dimension_numbers = #tpu.dot_dimension_numbers<[2], [1], [1], [2], [0, 0, 0, 1, 1, 2], [0], [0]>} : vector<2x8x8xf32>, vector<2x8x8xf32>, vector<2x8x8xf32> -> vector<2x8x8xf32>
    "tpu.trace_stop"() : () -> ()
    %59 = vector.shape_cast %58 : vector<2x8x8xf32> to vector<16x8xf32>
    %60 = vector.extract_strided_slice %34 {offsets = [0, 0], sizes = [8, 32], strides = [1, 1]} : vector<32x32xf32> to vector<8x32xf32>
    %cst_27 = arith.constant dense<0.000000e+00> : vector<16x32xf32>
    %61 = tpu.matmul %59, %60, %cst_27 {dimension_numbers = #tpu.dot_dimension_numbers<[1], [0], [0], [1], [0, 0, 1, 1], [], []>} : vector<16x8xf32>, vector<8x32xf32>, vector<16x32xf32> -> vector<16x32xf32>
    %62 = arith.addf %35, %61 : vector<16x32xf32>
    %63 = vector.extract_strided_slice %32 {offsets = [0, 8], sizes = [16, 8], strides = [1, 1]} : vector<16x96xf32> to vector<16x8xf32>
    %64 = vector.shape_cast %63 : vector<16x8xf32> to vector<2x8x8xf32>
    %65 = vector.extract_strided_slice %32 {offsets = [0, 40], sizes = [16, 8], strides = [1, 1]} : vector<16x96xf32> to vector<16x8xf32>
    %66 = vector.shape_cast %65 : vector<16x8xf32> to vector<2x8x8xf32>
    %67 = vector.extract_strided_slice %32 {offsets = [0, 72], sizes = [16, 8], strides = [1, 1]} : vector<16x96xf32> to vector<16x8xf32>
    %68 = vector.shape_cast %67 : vector<16x8xf32> to vector<2x8x8xf32>
    "tpu.trace_start"() <{level = 10 : i32, message = "bqd,bkd->bqk"}> : () -> ()
    %cst_28 = arith.constant dense<0.000000e+00> : vector<2x8x8xf32>
    %69 = tpu.matmul %64, %66, %cst_28 {dimension_numbers = #tpu.dot_dimension_numbers<[2], [2], [1], [1], [0, 0, 0, 1, 1, 1], [0], [0]>} : vector<2x8x8xf32>, vector<2x8x8xf32>, vector<2x8x8xf32> -> vector<2x8x8xf32>
    "tpu.trace_stop"() : () -> ()
    %cst_29 = arith.constant 0.353553385 : f32
    %70 = vector.broadcast %cst_29 : f32 to vector<2x8x8xf32>
    %71 = arith.mulf %69, %70 : vector<2x8x8xf32>
    %72 = vector.shape_cast %25 : vector<2x8xf32> to vector<2x1x8xf32>
    %73 = vector.broadcast %72 : vector<2x1x8xf32> to vector<2x8x8xf32>
    %74 = arith.addf %71, %73 : vector<2x8x8xf32>
    %cst_30 = arith.constant dense<0xFF800000> : vector<2x8xf32>
    %75 = vector.multi_reduction <maximumf>, %74, %cst_30 [2] : vector<2x8x8xf32> to vector<2x8xf32>
    %76 = vector.shape_cast %75 : vector<2x8xf32> to vector<2x8x1xf32>
    %77 = vector.broadcast %76 : vector<2x8x1xf32> to vector<2x8x8xf32>
    %78 = arith.subf %74, %77 : vector<2x8x8xf32>
    %79 = math.exp %78 : vector<2x8x8xf32>
    %cst_31 = arith.constant dense<0.000000e+00> : vector<2x8xf32>
    %80 = vector.multi_reduction <add>, %79, %cst_31 [2] : vector<2x8x8xf32> to vector<2x8xf32>
    %81 = vector.shape_cast %80 : vector<2x8xf32> to vector<2x8x1xf32>
    %82 = tpu.reciprocal %81 {approx = true} : vector<2x8x1xf32> -> vector<2x8x1xf32>
    %83 = vector.broadcast %82 : vector<2x8x1xf32> to vector<2x8x8xf32>
    %84 = arith.mulf %79, %83 : vector<2x8x8xf32>
    "tpu.trace_start"() <{level = 10 : i32, message = "bqk,bkd->bqd"}> : () -> ()
    %cst_32 = arith.constant dense<0.000000e+00> : vector<2x8x8xf32>
    %85 = tpu.matmul %84, %68, %cst_32 {dimension_numbers = #tpu.dot_dimension_numbers<[2], [1], [1], [2], [0, 0, 0, 1, 1, 2], [0], [0]>} : vector<2x8x8xf32>, vector<2x8x8xf32>, vector<2x8x8xf32> -> vector<2x8x8xf32>
    "tpu.trace_stop"() : () -> ()
    %86 = vector.shape_cast %85 : vector<2x8x8xf32> to vector<16x8xf32>
    %87 = vector.extract_strided_slice %34 {offsets = [8, 0], sizes = [8, 32], strides = [1, 1]} : vector<32x32xf32> to vector<8x32xf32>
    %cst_33 = arith.constant dense<0.000000e+00> : vector<16x32xf32>
    %88 = tpu.matmul %86, %87, %cst_33 {dimension_numbers = #tpu.dot_dimension_numbers<[1], [0], [0], [1], [0, 0, 1, 1], [], []>} : vector<16x8xf32>, vector<8x32xf32>, vector<16x32xf32> -> vector<16x32xf32>
    %89 = arith.addf %62, %88 : vector<16x32xf32>
    %90 = vector.extract_strided_slice %32 {offsets = [0, 16], sizes = [16, 8], strides = [1, 1]} : vector<16x96xf32> to vector<16x8xf32>
    %91 = vector.shape_cast %90 : vector<16x8xf32> to vector<2x8x8xf32>
    %92 = vector.extract_strided_slice %32 {offsets = [0, 48], sizes = [16, 8], strides = [1, 1]} : vector<16x96xf32> to vector<16x8xf32>
    %93 = vector.shape_cast %92 : vector<16x8xf32> to vector<2x8x8xf32>
    %94 = vector.extract_strided_slice %32 {offsets = [0, 80], sizes = [16, 8], strides = [1, 1]} : vector<16x96xf32> to vector<16x8xf32>
    %95 = vector.shape_cast %94 : vector<16x8xf32> to vector<2x8x8xf32>
    "tpu.trace_start"() <{level = 10 : i32, message = "bqd,bkd->bqk"}> : () -> ()
    %cst_34 = arith.constant dense<0.000000e+00> : vector<2x8x8xf32>
    %96 = tpu.matmul %91, %93, %cst_34 {dimension_numbers = #tpu.dot_dimension_numbers<[2], [2], [1], [1], [0, 0, 0, 1, 1, 1], [0], [0]>} : vector<2x8x8xf32>, vector<2x8x8xf32>, vector<2x8x8xf32> -> vector<2x8x8xf32>
    "tpu.trace_stop"() : () -> ()
    %cst_35 = arith.constant 0.353553385 : f32
    %97 = vector.broadcast %cst_35 : f32 to vector<2x8x8xf32>
    %98 = arith.mulf %96, %97 : vector<2x8x8xf32>
    %99 = vector.shape_cast %25 : vector<2x8xf32> to vector<2x1x8xf32>
    %100 = vector.broadcast %99 : vector<2x1x8xf32> to vector<2x8x8xf32>
    %101 = arith.addf %98, %100 : vector<2x8x8xf32>
    %cst_36 = arith.constant dense<0xFF800000> : vector<2x8xf32>
    %102 = vector.multi_reduction <maximumf>, %101, %cst_36 [2] : vector<2x8x8xf32> to vector<2x8xf32>
    %103 = vector.shape_cast %102 : vector<2x8xf32> to vector<2x8x1xf32>
    %104 = vector.broadcast %103 : vector<2x8x1xf32> to vector<2x8x8xf32>
    %105 = arith.subf %101, %104 : vector<2x8x8xf32>
    %106 = math.exp %105 : vector<2x8x8xf32>
    %cst_37 = arith.constant dense<0.000000e+00> : vector<2x8xf32>
    %107 = vector.multi_reduction <add>, %106, %cst_37 [2] : vector<2x8x8xf32> to vector<2x8xf32>
    %108 = vector.shape_cast %107 : vector<2x8xf32> to vector<2x8x1xf32>
    %109 = tpu.reciprocal %108 {approx = true} : vector<2x8x1xf32> -> vector<2x8x1xf32>
    %110 = vector.broadcast %109 : vector<2x8x1xf32> to vector<2x8x8xf32>
    %111 = arith.mulf %106, %110 : vector<2x8x8xf32>
    "tpu.trace_start"() <{level = 10 : i32, message = "bqk,bkd->bqd"}> : () -> ()
    %cst_38 = arith.constant dense<0.000000e+00> : vector<2x8x8xf32>
    %112 = tpu.matmul %111, %95, %cst_38 {dimension_numbers = #tpu.dot_dimension_numbers<[2], [1], [1], [2], [0, 0, 0, 1, 1, 2], [0], [0]>} : vector<2x8x8xf32>, vector<2x8x8xf32>, vector<2x8x8xf32> -> vector<2x8x8xf32>
    "tpu.trace_stop"() : () -> ()
    %113 = vector.shape_cast %112 : vector<2x8x8xf32> to vector<16x8xf32>
    %114 = vector.extract_strided_slice %34 {offsets = [16, 0], sizes = [8, 32], strides = [1, 1]} : vector<32x32xf32> to vector<8x32xf32>
    %cst_39 = arith.constant dense<0.000000e+00> : vector<16x32xf32>
    %115 = tpu.matmul %113, %114, %cst_39 {dimension_numbers = #tpu.dot_dimension_numbers<[1], [0], [0], [1], [0, 0, 1, 1], [], []>} : vector<16x8xf32>, vector<8x32xf32>, vector<16x32xf32> -> vector<16x32xf32>
    %116 = arith.addf %89, %115 : vector<16x32xf32>
    %117 = vector.extract_strided_slice %32 {offsets = [0, 24], sizes = [16, 8], strides = [1, 1]} : vector<16x96xf32> to vector<16x8xf32>
    %118 = vector.shape_cast %117 : vector<16x8xf32> to vector<2x8x8xf32>
    %119 = vector.extract_strided_slice %32 {offsets = [0, 56], sizes = [16, 8], strides = [1, 1]} : vector<16x96xf32> to vector<16x8xf32>
    %120 = vector.shape_cast %119 : vector<16x8xf32> to vector<2x8x8xf32>
    %121 = vector.extract_strided_slice %32 {offsets = [0, 88], sizes = [16, 8], strides = [1, 1]} : vector<16x96xf32> to vector<16x8xf32>
    %122 = vector.shape_cast %121 : vector<16x8xf32> to vector<2x8x8xf32>
    "tpu.trace_start"() <{level = 10 : i32, message = "bqd,bkd->bqk"}> : () -> ()
    %cst_40 = arith.constant dense<0.000000e+00> : vector<2x8x8xf32>
    %123 = tpu.matmul %118, %120, %cst_40 {dimension_numbers = #tpu.dot_dimension_numbers<[2], [2], [1], [1], [0, 0, 0, 1, 1, 1], [0], [0]>} : vector<2x8x8xf32>, vector<2x8x8xf32>, vector<2x8x8xf32> -> vector<2x8x8xf32>
    "tpu.trace_stop"() : () -> ()
    %cst_41 = arith.constant 0.353553385 : f32
    %124 = vector.broadcast %cst_41 : f32 to vector<2x8x8xf32>
    %125 = arith.mulf %123, %124 : vector<2x8x8xf32>
    %126 = vector.shape_cast %25 : vector<2x8xf32> to vector<2x1x8xf32>
    %127 = vector.broadcast %126 : vector<2x1x8xf32> to vector<2x8x8xf32>
    %128 = arith.addf %125, %127 : vector<2x8x8xf32>
    %cst_42 = arith.constant dense<0xFF800000> : vector<2x8xf32>
    %129 = vector.multi_reduction <maximumf>, %128, %cst_42 [2] : vector<2x8x8xf32> to vector<2x8xf32>
    %130 = vector.shape_cast %129 : vector<2x8xf32> to vector<2x8x1xf32>
    %131 = vector.broadcast %130 : vector<2x8x1xf32> to vector<2x8x8xf32>
    %132 = arith.subf %128, %131 : vector<2x8x8xf32>
    %133 = math.exp %132 : vector<2x8x8xf32>
    %cst_43 = arith.constant dense<0.000000e+00> : vector<2x8xf32>
    %134 = vector.multi_reduction <add>, %133, %cst_43 [2] : vector<2x8x8xf32> to vector<2x8xf32>
    %135 = vector.shape_cast %134 : vector<2x8xf32> to vector<2x8x1xf32>
    %136 = tpu.reciprocal %135 {approx = true} : vector<2x8x1xf32> -> vector<2x8x1xf32>
    %137 = vector.broadcast %136 : vector<2x8x1xf32> to vector<2x8x8xf32>
    %138 = arith.mulf %133, %137 : vector<2x8x8xf32>
    "tpu.trace_start"() <{level = 10 : i32, message = "bqk,bkd->bqd"}> : () -> ()
    %cst_44 = arith.constant dense<0.000000e+00> : vector<2x8x8xf32>
    %139 = tpu.matmul %138, %122, %cst_44 {dimension_numbers = #tpu.dot_dimension_numbers<[2], [1], [1], [2], [0, 0, 0, 1, 1, 2], [0], [0]>} : vector<2x8x8xf32>, vector<2x8x8xf32>, vector<2x8x8xf32> -> vector<2x8x8xf32>
    "tpu.trace_stop"() : () -> ()
    %140 = vector.shape_cast %139 : vector<2x8x8xf32> to vector<16x8xf32>
    %141 = vector.extract_strided_slice %34 {offsets = [24, 0], sizes = [8, 32], strides = [1, 1]} : vector<32x32xf32> to vector<8x32xf32>
    %cst_45 = arith.constant dense<0.000000e+00> : vector<16x32xf32>
    %142 = tpu.matmul %140, %141, %cst_45 {dimension_numbers = #tpu.dot_dimension_numbers<[1], [0], [0], [1], [0, 0, 1, 1], [], []>} : vector<16x8xf32>, vector<8x32xf32>, vector<16x32xf32> -> vector<16x32xf32>
    %143 = arith.addf %116, %142 : vector<16x32xf32>
    %c0_46 = arith.constant 0 : index
    %c0_47 = arith.constant 0 : index
    %c0_48 = arith.constant 0 : index
    %144 = vector.load %arg7[%c0_46, %c0_47, %c0_48] : memref<2x1x32xf32, #tpu.memory_space<vmem>>, vector<1x1x32xf32>
    %145 = vector.shape_cast %144 : vector<1x1x32xf32> to vector<1x32xf32>
    %146 = vector.broadcast %145 : vector<1x32xf32> to vector<16x32xf32>
    %147 = arith.addf %143, %146 : vector<16x32xf32>
    %148 = arith.addf %147, %24 : vector<16x32xf32>
    %c0_49 = arith.constant 0 : index
    %c0_50 = arith.constant 0 : index
    %c0_51 = arith.constant 0 : index
    %149 = vector.load %arg8[%c0_49, %c0_50, %c0_51] : memref<2x1x32xf32, #tpu.memory_space<vmem>>, vector<1x1x32xf32>
    %150 = vector.shape_cast %149 : vector<1x1x32xf32> to vector<1x32xf32>
    %c0_52 = arith.constant 0 : index
    %c0_53 = arith.constant 0 : index
    %c0_54 = arith.constant 0 : index
    %151 = vector.load %arg9[%c0_52, %c0_53, %c0_54] : memref<2x1x32xf32, #tpu.memory_space<vmem>>, vector<1x1x32xf32>
    %152 = vector.shape_cast %151 : vector<1x1x32xf32> to vector<1x32xf32>
    %cst_55 = arith.constant dense<0.000000e+00> : vector<16xf32>
    %153 = vector.multi_reduction <add>, %148, %cst_55 [1] : vector<16x32xf32> to vector<16xf32>
    %154 = vector.shape_cast %153 : vector<16xf32> to vector<16x1xf32>
    %cst_56 = arith.constant 3.200000e+01 : f32
    %155 = vector.broadcast %cst_56 : f32 to vector<16x1xf32>
    %156 = arith.divf %154, %155 : vector<16x1xf32>
    %157 = vector.broadcast %156 : vector<16x1xf32> to vector<16x32xf32>
    %158 = arith.subf %148, %157 : vector<16x32xf32>
    %159 = arith.mulf %158, %158 : vector<16x32xf32>
    %cst_57 = arith.constant dense<0.000000e+00> : vector<16xf32>
    %160 = vector.multi_reduction <add>, %159, %cst_57 [1] : vector<16x32xf32> to vector<16xf32>
    %161 = vector.shape_cast %160 : vector<16xf32> to vector<16x1xf32>
    %cst_58 = arith.constant 3.200000e+01 : f32
    %162 = vector.broadcast %cst_58 : f32 to vector<16x1xf32>
    %163 = arith.divf %161, %162 : vector<16x1xf32>
    %164 = vector.broadcast %156 : vector<16x1xf32> to vector<16x32xf32>
    %165 = arith.subf %148, %164 : vector<16x32xf32>
    %cst_59 = arith.constant 9.99999996E-13 : f32
    %166 = vector.broadcast %cst_59 : f32 to vector<16x1xf32>
    %167 = arith.addf %163, %166 : vector<16x1xf32>
    %168 = math.rsqrt %167 : vector<16x1xf32>
    %169 = vector.broadcast %168 : vector<16x1xf32> to vector<16x32xf32>
    %170 = arith.mulf %165, %169 : vector<16x32xf32>
    %171 = vector.broadcast %150 : vector<1x32xf32> to vector<16x32xf32>
    %172 = arith.mulf %170, %171 : vector<16x32xf32>
    %173 = vector.broadcast %152 : vector<1x32xf32> to vector<16x32xf32>
    %174 = arith.addf %172, %173 : vector<16x32xf32>
    %c0_60 = arith.constant 0 : index
    %c0_61 = arith.constant 0 : index
    %c0_62 = arith.constant 0 : index
    %175 = vector.load %arg10[%c0_60, %c0_61, %c0_62] : memref<2x32x64xf32, #tpu.memory_space<vmem>>, vector<1x32x64xf32>
    %176 = vector.shape_cast %175 : vector<1x32x64xf32> to vector<32x64xf32>
    %cst_63 = arith.constant dense<0.000000e+00> : vector<16x64xf32>
    %177 = tpu.matmul %174, %176, %cst_63 {dimension_numbers = #tpu.dot_dimension_numbers<[1], [0], [0], [1], [0, 0, 1, 1], [], []>} : vector<16x32xf32>, vector<32x64xf32>, vector<16x64xf32> -> vector<16x64xf32>
    %c0_64 = arith.constant 0 : index
    %c0_65 = arith.constant 0 : index
    %c0_66 = arith.constant 0 : index
    %178 = vector.load %arg11[%c0_64, %c0_65, %c0_66] : memref<2x1x64xf32, #tpu.memory_space<vmem>>, vector<1x1x64xf32>
    %179 = vector.shape_cast %178 : vector<1x1x64xf32> to vector<1x64xf32>
    %180 = vector.broadcast %179 : vector<1x64xf32> to vector<16x64xf32>
    %181 = arith.addf %177, %180 : vector<16x64xf32>
    %cst_67 = arith.constant 5.000000e-01 : f32
    %182 = vector.broadcast %cst_67 : f32 to vector<16x64xf32>
    %183 = arith.mulf %182, %181 : vector<16x64xf32>
    %cst_68 = arith.constant 4.471500e-02 : f32
    %184 = vector.broadcast %cst_68 : f32 to vector<16x64xf32>
    %185 = arith.mulf %184, %181 : vector<16x64xf32>
    %186 = arith.mulf %185, %181 : vector<16x64xf32>
    %187 = arith.mulf %186, %181 : vector<16x64xf32>
    %188 = arith.addf %181, %187 : vector<16x64xf32>
    %cst_69 = arith.constant 0.797884583 : f32
    %189 = vector.broadcast %cst_69 : f32 to vector<16x64xf32>
    %190 = arith.mulf %189, %188 : vector<16x64xf32>
    %191 = math.tanh %190 : vector<16x64xf32>
    %cst_70 = arith.constant 1.000000e+00 : f32
    %192 = vector.broadcast %cst_70 : f32 to vector<16x64xf32>
    %193 = arith.addf %192, %191 : vector<16x64xf32>
    %194 = arith.mulf %183, %193 : vector<16x64xf32>
    %c0_71 = arith.constant 0 : index
    %c0_72 = arith.constant 0 : index
    %c0_73 = arith.constant 0 : index
    %195 = vector.load %arg12[%c0_71, %c0_72, %c0_73] : memref<2x64x32xf32, #tpu.memory_space<vmem>>, vector<1x64x32xf32>
    %196 = vector.shape_cast %195 : vector<1x64x32xf32> to vector<64x32xf32>
    %cst_74 = arith.constant dense<0.000000e+00> : vector<16x32xf32>
    %197 = tpu.matmul %194, %196, %cst_74 {dimension_numbers = #tpu.dot_dimension_numbers<[1], [0], [0], [1], [0, 0, 1, 1], [], []>} : vector<16x64xf32>, vector<64x32xf32>, vector<16x32xf32> -> vector<16x32xf32>
    %c0_75 = arith.constant 0 : index
    %c0_76 = arith.constant 0 : index
    %c0_77 = arith.constant 0 : index
    %198 = vector.load %arg13[%c0_75, %c0_76, %c0_77] : memref<2x1x32xf32, #tpu.memory_space<vmem>>, vector<1x1x32xf32>
    %199 = vector.shape_cast %198 : vector<1x1x32xf32> to vector<1x32xf32>
    %200 = vector.broadcast %199 : vector<1x32xf32> to vector<16x32xf32>
    %201 = arith.addf %197, %200 : vector<16x32xf32>
    %202 = arith.addf %201, %174 : vector<16x32xf32>
    %c0_78 = arith.constant 0 : index
    %c0_79 = arith.constant 0 : index
    %c0_80 = arith.constant 0 : index
    %203 = vector.load %arg14[%c0_78, %c0_79, %c0_80] : memref<2x1x32xf32, #tpu.memory_space<vmem>>, vector<1x1x32xf32>
    %204 = vector.shape_cast %203 : vector<1x1x32xf32> to vector<1x32xf32>
    %c0_81 = arith.constant 0 : index
    %c0_82 = arith.constant 0 : index
    %c0_83 = arith.constant 0 : index
    %205 = vector.load %arg15[%c0_81, %c0_82, %c0_83] : memref<2x1x32xf32, #tpu.memory_space<vmem>>, vector<1x1x32xf32>
    %206 = vector.shape_cast %205 : vector<1x1x32xf32> to vector<1x32xf32>
    %cst_84 = arith.constant dense<0.000000e+00> : vector<16xf32>
    %207 = vector.multi_reduction <add>, %202, %cst_84 [1] : vector<16x32xf32> to vector<16xf32>
    %208 = vector.shape_cast %207 : vector<16xf32> to vector<16x1xf32>
    %cst_85 = arith.constant 3.200000e+01 : f32
    %209 = vector.broadcast %cst_85 : f32 to vector<16x1xf32>
    %210 = arith.divf %208, %209 : vector<16x1xf32>
    %211 = vector.broadcast %210 : vector<16x1xf32> to vector<16x32xf32>
    %212 = arith.subf %202, %211 : vector<16x32xf32>
    %213 = arith.mulf %212, %212 : vector<16x32xf32>
    %cst_86 = arith.constant dense<0.000000e+00> : vector<16xf32>
    %214 = vector.multi_reduction <add>, %213, %cst_86 [1] : vector<16x32xf32> to vector<16xf32>
    %215 = vector.shape_cast %214 : vector<16xf32> to vector<16x1xf32>
    %cst_87 = arith.constant 3.200000e+01 : f32
    %216 = vector.broadcast %cst_87 : f32 to vector<16x1xf32>
    %217 = arith.divf %215, %216 : vector<16x1xf32>
    %218 = vector.broadcast %210 : vector<16x1xf32> to vector<16x32xf32>
    %219 = arith.subf %202, %218 : vector<16x32xf32>
    %cst_88 = arith.constant 9.99999996E-13 : f32
    %220 = vector.broadcast %cst_88 : f32 to vector<16x1xf32>
    %221 = arith.addf %217, %220 : vector<16x1xf32>
    %222 = math.rsqrt %221 : vector<16x1xf32>
    %223 = vector.broadcast %222 : vector<16x1xf32> to vector<16x32xf32>
    %224 = arith.mulf %219, %223 : vector<16x32xf32>
    %225 = vector.broadcast %204 : vector<1x32xf32> to vector<16x32xf32>
    %226 = arith.mulf %224, %225 : vector<16x32xf32>
    %227 = vector.broadcast %206 : vector<1x32xf32> to vector<16x32xf32>
    %228 = arith.addf %226, %227 : vector<16x32xf32>
    %c1 = arith.constant 1 : index
    %c0_89 = arith.constant 0 : index
    %c0_90 = arith.constant 0 : index
    %229 = vector.load %arg4[%c1, %c0_89, %c0_90] : memref<2x32x96xf32, #tpu.memory_space<vmem>>, vector<1x32x96xf32>
    %230 = vector.shape_cast %229 : vector<1x32x96xf32> to vector<32x96xf32>
    %cst_91 = arith.constant dense<0.000000e+00> : vector<16x96xf32>
    %231 = tpu.matmul %228, %230, %cst_91 {dimension_numbers = #tpu.dot_dimension_numbers<[1], [0], [0], [1], [0, 0, 1, 1], [], []>} : vector<16x32xf32>, vector<32x96xf32>, vector<16x96xf32> -> vector<16x96xf32>
    %c1_92 = arith.constant 1 : index
    %c0_93 = arith.constant 0 : index
    %c0_94 = arith.constant 0 : index
    %232 = vector.load %arg5[%c1_92, %c0_93, %c0_94] : memref<2x1x96xf32, #tpu.memory_space<vmem>>, vector<1x1x96xf32>
    %233 = vector.shape_cast %232 : vector<1x1x96xf32> to vector<1x96xf32>
    %234 = vector.broadcast %233 : vector<1x96xf32> to vector<16x96xf32>
    %235 = arith.addf %231, %234 : vector<16x96xf32>
    %c1_95 = arith.constant 1 : index
    %c0_96 = arith.constant 0 : index
    %c0_97 = arith.constant 0 : index
    %236 = vector.load %arg6[%c1_95, %c0_96, %c0_97] : memref<2x32x32xf32, #tpu.memory_space<vmem>>, vector<1x32x32xf32>
    %237 = vector.shape_cast %236 : vector<1x32x32xf32> to vector<32x32xf32>
    %cst_98 = arith.constant 0.000000e+00 : f32
    %238 = vector.broadcast %cst_98 : f32 to vector<16x32xf32>
    %239 = vector.extract_strided_slice %235 {offsets = [0, 0], sizes = [16, 8], strides = [1, 1]} : vector<16x96xf32> to vector<16x8xf32>
    %240 = vector.shape_cast %239 : vector<16x8xf32> to vector<2x8x8xf32>
    %241 = vector.extract_strided_slice %235 {offsets = [0, 32], sizes = [16, 8], strides = [1, 1]} : vector<16x96xf32> to vector<16x8xf32>
    %242 = vector.shape_cast %241 : vector<16x8xf32> to vector<2x8x8xf32>
    %243 = vector.extract_strided_slice %235 {offsets = [0, 64], sizes = [16, 8], strides = [1, 1]} : vector<16x96xf32> to vector<16x8xf32>
    %244 = vector.shape_cast %243 : vector<16x8xf32> to vector<2x8x8xf32>
    "tpu.trace_start"() <{level = 10 : i32, message = "bqd,bkd->bqk"}> : () -> ()
    %cst_99 = arith.constant dense<0.000000e+00> : vector<2x8x8xf32>
    %245 = tpu.matmul %240, %242, %cst_99 {dimension_numbers = #tpu.dot_dimension_numbers<[2], [2], [1], [1], [0, 0, 0, 1, 1, 1], [0], [0]>} : vector<2x8x8xf32>, vector<2x8x8xf32>, vector<2x8x8xf32> -> vector<2x8x8xf32>
    "tpu.trace_stop"() : () -> ()
    %cst_100 = arith.constant 0.353553385 : f32
    %246 = vector.broadcast %cst_100 : f32 to vector<2x8x8xf32>
    %247 = arith.mulf %245, %246 : vector<2x8x8xf32>
    %248 = vector.shape_cast %25 : vector<2x8xf32> to vector<2x1x8xf32>
    %249 = vector.broadcast %248 : vector<2x1x8xf32> to vector<2x8x8xf32>
    %250 = arith.addf %247, %249 : vector<2x8x8xf32>
    %cst_101 = arith.constant dense<0xFF800000> : vector<2x8xf32>
    %251 = vector.multi_reduction <maximumf>, %250, %cst_101 [2] : vector<2x8x8xf32> to vector<2x8xf32>
    %252 = vector.shape_cast %251 : vector<2x8xf32> to vector<2x8x1xf32>
    %253 = vector.broadcast %252 : vector<2x8x1xf32> to vector<2x8x8xf32>
    %254 = arith.subf %250, %253 : vector<2x8x8xf32>
    %255 = math.exp %254 : vector<2x8x8xf32>
    %cst_102 = arith.constant dense<0.000000e+00> : vector<2x8xf32>
    %256 = vector.multi_reduction <add>, %255, %cst_102 [2] : vector<2x8x8xf32> to vector<2x8xf32>
    %257 = vector.shape_cast %256 : vector<2x8xf32> to vector<2x8x1xf32>
    %258 = tpu.reciprocal %257 {approx = true} : vector<2x8x1xf32> -> vector<2x8x1xf32>
    %259 = vector.broadcast %258 : vector<2x8x1xf32> to vector<2x8x8xf32>
    %260 = arith.mulf %255, %259 : vector<2x8x8xf32>
    "tpu.trace_start"() <{level = 10 : i32, message = "bqk,bkd->bqd"}> : () -> ()
    %cst_103 = arith.constant dense<0.000000e+00> : vector<2x8x8xf32>
    %261 = tpu.matmul %260, %244, %cst_103 {dimension_numbers = #tpu.dot_dimension_numbers<[2], [1], [1], [2], [0, 0, 0, 1, 1, 2], [0], [0]>} : vector<2x8x8xf32>, vector<2x8x8xf32>, vector<2x8x8xf32> -> vector<2x8x8xf32>
    "tpu.trace_stop"() : () -> ()
    %262 = vector.shape_cast %261 : vector<2x8x8xf32> to vector<16x8xf32>
    %263 = vector.extract_strided_slice %237 {offsets = [0, 0], sizes = [8, 32], strides = [1, 1]} : vector<32x32xf32> to vector<8x32xf32>
    %cst_104 = arith.constant dense<0.000000e+00> : vector<16x32xf32>
    %264 = tpu.matmul %262, %263, %cst_104 {dimension_numbers = #tpu.dot_dimension_numbers<[1], [0], [0], [1], [0, 0, 1, 1], [], []>} : vector<16x8xf32>, vector<8x32xf32>, vector<16x32xf32> -> vector<16x32xf32>
    %265 = arith.addf %238, %264 : vector<16x32xf32>
    %266 = vector.extract_strided_slice %235 {offsets = [0, 8], sizes = [16, 8], strides = [1, 1]} : vector<16x96xf32> to vector<16x8xf32>
    %267 = vector.shape_cast %266 : vector<16x8xf32> to vector<2x8x8xf32>
    %268 = vector.extract_strided_slice %235 {offsets = [0, 40], sizes = [16, 8], strides = [1, 1]} : vector<16x96xf32> to vector<16x8xf32>
    %269 = vector.shape_cast %268 : vector<16x8xf32> to vector<2x8x8xf32>
    %270 = vector.extract_strided_slice %235 {offsets = [0, 72], sizes = [16, 8], strides = [1, 1]} : vector<16x96xf32> to vector<16x8xf32>
    %271 = vector.shape_cast %270 : vector<16x8xf32> to vector<2x8x8xf32>
    "tpu.trace_start"() <{level = 10 : i32, message = "bqd,bkd->bqk"}> : () -> ()
    %cst_105 = arith.constant dense<0.000000e+00> : vector<2x8x8xf32>
    %272 = tpu.matmul %267, %269, %cst_105 {dimension_numbers = #tpu.dot_dimension_numbers<[2], [2], [1], [1], [0, 0, 0, 1, 1, 1], [0], [0]>} : vector<2x8x8xf32>, vector<2x8x8xf32>, vector<2x8x8xf32> -> vector<2x8x8xf32>
    "tpu.trace_stop"() : () -> ()
    %cst_106 = arith.constant 0.353553385 : f32
    %273 = vector.broadcast %cst_106 : f32 to vector<2x8x8xf32>
    %274 = arith.mulf %272, %273 : vector<2x8x8xf32>
    %275 = vector.shape_cast %25 : vector<2x8xf32> to vector<2x1x8xf32>
    %276 = vector.broadcast %275 : vector<2x1x8xf32> to vector<2x8x8xf32>
    %277 = arith.addf %274, %276 : vector<2x8x8xf32>
    %cst_107 = arith.constant dense<0xFF800000> : vector<2x8xf32>
    %278 = vector.multi_reduction <maximumf>, %277, %cst_107 [2] : vector<2x8x8xf32> to vector<2x8xf32>
    %279 = vector.shape_cast %278 : vector<2x8xf32> to vector<2x8x1xf32>
    %280 = vector.broadcast %279 : vector<2x8x1xf32> to vector<2x8x8xf32>
    %281 = arith.subf %277, %280 : vector<2x8x8xf32>
    %282 = math.exp %281 : vector<2x8x8xf32>
    %cst_108 = arith.constant dense<0.000000e+00> : vector<2x8xf32>
    %283 = vector.multi_reduction <add>, %282, %cst_108 [2] : vector<2x8x8xf32> to vector<2x8xf32>
    %284 = vector.shape_cast %283 : vector<2x8xf32> to vector<2x8x1xf32>
    %285 = tpu.reciprocal %284 {approx = true} : vector<2x8x1xf32> -> vector<2x8x1xf32>
    %286 = vector.broadcast %285 : vector<2x8x1xf32> to vector<2x8x8xf32>
    %287 = arith.mulf %282, %286 : vector<2x8x8xf32>
    "tpu.trace_start"() <{level = 10 : i32, message = "bqk,bkd->bqd"}> : () -> ()
    %cst_109 = arith.constant dense<0.000000e+00> : vector<2x8x8xf32>
    %288 = tpu.matmul %287, %271, %cst_109 {dimension_numbers = #tpu.dot_dimension_numbers<[2], [1], [1], [2], [0, 0, 0, 1, 1, 2], [0], [0]>} : vector<2x8x8xf32>, vector<2x8x8xf32>, vector<2x8x8xf32> -> vector<2x8x8xf32>
    "tpu.trace_stop"() : () -> ()
    %289 = vector.shape_cast %288 : vector<2x8x8xf32> to vector<16x8xf32>
    %290 = vector.extract_strided_slice %237 {offsets = [8, 0], sizes = [8, 32], strides = [1, 1]} : vector<32x32xf32> to vector<8x32xf32>
    %cst_110 = arith.constant dense<0.000000e+00> : vector<16x32xf32>
    %291 = tpu.matmul %289, %290, %cst_110 {dimension_numbers = #tpu.dot_dimension_numbers<[1], [0], [0], [1], [0, 0, 1, 1], [], []>} : vector<16x8xf32>, vector<8x32xf32>, vector<16x32xf32> -> vector<16x32xf32>
    %292 = arith.addf %265, %291 : vector<16x32xf32>
    %293 = vector.extract_strided_slice %235 {offsets = [0, 16], sizes = [16, 8], strides = [1, 1]} : vector<16x96xf32> to vector<16x8xf32>
    %294 = vector.shape_cast %293 : vector<16x8xf32> to vector<2x8x8xf32>
    %295 = vector.extract_strided_slice %235 {offsets = [0, 48], sizes = [16, 8], strides = [1, 1]} : vector<16x96xf32> to vector<16x8xf32>
    %296 = vector.shape_cast %295 : vector<16x8xf32> to vector<2x8x8xf32>
    %297 = vector.extract_strided_slice %235 {offsets = [0, 80], sizes = [16, 8], strides = [1, 1]} : vector<16x96xf32> to vector<16x8xf32>
    %298 = vector.shape_cast %297 : vector<16x8xf32> to vector<2x8x8xf32>
    "tpu.trace_start"() <{level = 10 : i32, message = "bqd,bkd->bqk"}> : () -> ()
    %cst_111 = arith.constant dense<0.000000e+00> : vector<2x8x8xf32>
    %299 = tpu.matmul %294, %296, %cst_111 {dimension_numbers = #tpu.dot_dimension_numbers<[2], [2], [1], [1], [0, 0, 0, 1, 1, 1], [0], [0]>} : vector<2x8x8xf32>, vector<2x8x8xf32>, vector<2x8x8xf32> -> vector<2x8x8xf32>
    "tpu.trace_stop"() : () -> ()
    %cst_112 = arith.constant 0.353553385 : f32
    %300 = vector.broadcast %cst_112 : f32 to vector<2x8x8xf32>
    %301 = arith.mulf %299, %300 : vector<2x8x8xf32>
    %302 = vector.shape_cast %25 : vector<2x8xf32> to vector<2x1x8xf32>
    %303 = vector.broadcast %302 : vector<2x1x8xf32> to vector<2x8x8xf32>
    %304 = arith.addf %301, %303 : vector<2x8x8xf32>
    %cst_113 = arith.constant dense<0xFF800000> : vector<2x8xf32>
    %305 = vector.multi_reduction <maximumf>, %304, %cst_113 [2] : vector<2x8x8xf32> to vector<2x8xf32>
    %306 = vector.shape_cast %305 : vector<2x8xf32> to vector<2x8x1xf32>
    %307 = vector.broadcast %306 : vector<2x8x1xf32> to vector<2x8x8xf32>
    %308 = arith.subf %304, %307 : vector<2x8x8xf32>
    %309 = math.exp %308 : vector<2x8x8xf32>
    %cst_114 = arith.constant dense<0.000000e+00> : vector<2x8xf32>
    %310 = vector.multi_reduction <add>, %309, %cst_114 [2] : vector<2x8x8xf32> to vector<2x8xf32>
    %311 = vector.shape_cast %310 : vector<2x8xf32> to vector<2x8x1xf32>
    %312 = tpu.reciprocal %311 {approx = true} : vector<2x8x1xf32> -> vector<2x8x1xf32>
    %313 = vector.broadcast %312 : vector<2x8x1xf32> to vector<2x8x8xf32>
    %314 = arith.mulf %309, %313 : vector<2x8x8xf32>
    "tpu.trace_start"() <{level = 10 : i32, message = "bqk,bkd->bqd"}> : () -> ()
    %cst_115 = arith.constant dense<0.000000e+00> : vector<2x8x8xf32>
    %315 = tpu.matmul %314, %298, %cst_115 {dimension_numbers = #tpu.dot_dimension_numbers<[2], [1], [1], [2], [0, 0, 0, 1, 1, 2], [0], [0]>} : vector<2x8x8xf32>, vector<2x8x8xf32>, vector<2x8x8xf32> -> vector<2x8x8xf32>
    "tpu.trace_stop"() : () -> ()
    %316 = vector.shape_cast %315 : vector<2x8x8xf32> to vector<16x8xf32>
    %317 = vector.extract_strided_slice %237 {offsets = [16, 0], sizes = [8, 32], strides = [1, 1]} : vector<32x32xf32> to vector<8x32xf32>
    %cst_116 = arith.constant dense<0.000000e+00> : vector<16x32xf32>
    %318 = tpu.matmul %316, %317, %cst_116 {dimension_numbers = #tpu.dot_dimension_numbers<[1], [0], [0], [1], [0, 0, 1, 1], [], []>} : vector<16x8xf32>, vector<8x32xf32>, vector<16x32xf32> -> vector<16x32xf32>
    %319 = arith.addf %292, %318 : vector<16x32xf32>
    %320 = vector.extract_strided_slice %235 {offsets = [0, 24], sizes = [16, 8], strides = [1, 1]} : vector<16x96xf32> to vector<16x8xf32>
    %321 = vector.shape_cast %320 : vector<16x8xf32> to vector<2x8x8xf32>
    %322 = vector.extract_strided_slice %235 {offsets = [0, 56], sizes = [16, 8], strides = [1, 1]} : vector<16x96xf32> to vector<16x8xf32>
    %323 = vector.shape_cast %322 : vector<16x8xf32> to vector<2x8x8xf32>
    %324 = vector.extract_strided_slice %235 {offsets = [0, 88], sizes = [16, 8], strides = [1, 1]} : vector<16x96xf32> to vector<16x8xf32>
    %325 = vector.shape_cast %324 : vector<16x8xf32> to vector<2x8x8xf32>
    "tpu.trace_start"() <{level = 10 : i32, message = "bqd,bkd->bqk"}> : () -> ()
    %cst_117 = arith.constant dense<0.000000e+00> : vector<2x8x8xf32>
    %326 = tpu.matmul %321, %323, %cst_117 {dimension_numbers = #tpu.dot_dimension_numbers<[2], [2], [1], [1], [0, 0, 0, 1, 1, 1], [0], [0]>} : vector<2x8x8xf32>, vector<2x8x8xf32>, vector<2x8x8xf32> -> vector<2x8x8xf32>
    "tpu.trace_stop"() : () -> ()
    %cst_118 = arith.constant 0.353553385 : f32
    %327 = vector.broadcast %cst_118 : f32 to vector<2x8x8xf32>
    %328 = arith.mulf %326, %327 : vector<2x8x8xf32>
    %329 = vector.shape_cast %25 : vector<2x8xf32> to vector<2x1x8xf32>
    %330 = vector.broadcast %329 : vector<2x1x8xf32> to vector<2x8x8xf32>
    %331 = arith.addf %328, %330 : vector<2x8x8xf32>
    %cst_119 = arith.constant dense<0xFF800000> : vector<2x8xf32>
    %332 = vector.multi_reduction <maximumf>, %331, %cst_119 [2] : vector<2x8x8xf32> to vector<2x8xf32>
    %333 = vector.shape_cast %332 : vector<2x8xf32> to vector<2x8x1xf32>
    %334 = vector.broadcast %333 : vector<2x8x1xf32> to vector<2x8x8xf32>
    %335 = arith.subf %331, %334 : vector<2x8x8xf32>
    %336 = math.exp %335 : vector<2x8x8xf32>
    %cst_120 = arith.constant dense<0.000000e+00> : vector<2x8xf32>
    %337 = vector.multi_reduction <add>, %336, %cst_120 [2] : vector<2x8x8xf32> to vector<2x8xf32>
    %338 = vector.shape_cast %337 : vector<2x8xf32> to vector<2x8x1xf32>
    %339 = tpu.reciprocal %338 {approx = true} : vector<2x8x1xf32> -> vector<2x8x1xf32>
    %340 = vector.broadcast %339 : vector<2x8x1xf32> to vector<2x8x8xf32>
    %341 = arith.mulf %336, %340 : vector<2x8x8xf32>
    "tpu.trace_start"() <{level = 10 : i32, message = "bqk,bkd->bqd"}> : () -> ()
    %cst_121 = arith.constant dense<0.000000e+00> : vector<2x8x8xf32>
    %342 = tpu.matmul %341, %325, %cst_121 {dimension_numbers = #tpu.dot_dimension_numbers<[2], [1], [1], [2], [0, 0, 0, 1, 1, 2], [0], [0]>} : vector<2x8x8xf32>, vector<2x8x8xf32>, vector<2x8x8xf32> -> vector<2x8x8xf32>
    "tpu.trace_stop"() : () -> ()
    %343 = vector.shape_cast %342 : vector<2x8x8xf32> to vector<16x8xf32>
    %344 = vector.extract_strided_slice %237 {offsets = [24, 0], sizes = [8, 32], strides = [1, 1]} : vector<32x32xf32> to vector<8x32xf32>
    %cst_122 = arith.constant dense<0.000000e+00> : vector<16x32xf32>
    %345 = tpu.matmul %343, %344, %cst_122 {dimension_numbers = #tpu.dot_dimension_numbers<[1], [0], [0], [1], [0, 0, 1, 1], [], []>} : vector<16x8xf32>, vector<8x32xf32>, vector<16x32xf32> -> vector<16x32xf32>
    %346 = arith.addf %319, %345 : vector<16x32xf32>
    %c1_123 = arith.constant 1 : index
    %c0_124 = arith.constant 0 : index
    %c0_125 = arith.constant 0 : index
    %347 = vector.load %arg7[%c1_123, %c0_124, %c0_125] : memref<2x1x32xf32, #tpu.memory_space<vmem>>, vector<1x1x32xf32>
    %348 = vector.shape_cast %347 : vector<1x1x32xf32> to vector<1x32xf32>
    %349 = vector.broadcast %348 : vector<1x32xf32> to vector<16x32xf32>
    %350 = arith.addf %346, %349 : vector<16x32xf32>
    %351 = arith.addf %350, %228 : vector<16x32xf32>
    %c1_126 = arith.constant 1 : index
    %c0_127 = arith.constant 0 : index
    %c0_128 = arith.constant 0 : index
    %352 = vector.load %arg8[%c1_126, %c0_127, %c0_128] : memref<2x1x32xf32, #tpu.memory_space<vmem>>, vector<1x1x32xf32>
    %353 = vector.shape_cast %352 : vector<1x1x32xf32> to vector<1x32xf32>
    %c1_129 = arith.constant 1 : index
    %c0_130 = arith.constant 0 : index
    %c0_131 = arith.constant 0 : index
    %354 = vector.load %arg9[%c1_129, %c0_130, %c0_131] : memref<2x1x32xf32, #tpu.memory_space<vmem>>, vector<1x1x32xf32>
    %355 = vector.shape_cast %354 : vector<1x1x32xf32> to vector<1x32xf32>
    %cst_132 = arith.constant dense<0.000000e+00> : vector<16xf32>
    %356 = vector.multi_reduction <add>, %351, %cst_132 [1] : vector<16x32xf32> to vector<16xf32>
    %357 = vector.shape_cast %356 : vector<16xf32> to vector<16x1xf32>
    %cst_133 = arith.constant 3.200000e+01 : f32
    %358 = vector.broadcast %cst_133 : f32 to vector<16x1xf32>
    %359 = arith.divf %357, %358 : vector<16x1xf32>
    %360 = vector.broadcast %359 : vector<16x1xf32> to vector<16x32xf32>
    %361 = arith.subf %351, %360 : vector<16x32xf32>
    %362 = arith.mulf %361, %361 : vector<16x32xf32>
    %cst_134 = arith.constant dense<0.000000e+00> : vector<16xf32>
    %363 = vector.multi_reduction <add>, %362, %cst_134 [1] : vector<16x32xf32> to vector<16xf32>
    %364 = vector.shape_cast %363 : vector<16xf32> to vector<16x1xf32>
    %cst_135 = arith.constant 3.200000e+01 : f32
    %365 = vector.broadcast %cst_135 : f32 to vector<16x1xf32>
    %366 = arith.divf %364, %365 : vector<16x1xf32>
    %367 = vector.broadcast %359 : vector<16x1xf32> to vector<16x32xf32>
    %368 = arith.subf %351, %367 : vector<16x32xf32>
    %cst_136 = arith.constant 9.99999996E-13 : f32
    %369 = vector.broadcast %cst_136 : f32 to vector<16x1xf32>
    %370 = arith.addf %366, %369 : vector<16x1xf32>
    %371 = math.rsqrt %370 : vector<16x1xf32>
    %372 = vector.broadcast %371 : vector<16x1xf32> to vector<16x32xf32>
    %373 = arith.mulf %368, %372 : vector<16x32xf32>
    %374 = vector.broadcast %353 : vector<1x32xf32> to vector<16x32xf32>
    %375 = arith.mulf %373, %374 : vector<16x32xf32>
    %376 = vector.broadcast %355 : vector<1x32xf32> to vector<16x32xf32>
    %377 = arith.addf %375, %376 : vector<16x32xf32>
    %c1_137 = arith.constant 1 : index
    %c0_138 = arith.constant 0 : index
    %c0_139 = arith.constant 0 : index
    %378 = vector.load %arg10[%c1_137, %c0_138, %c0_139] : memref<2x32x64xf32, #tpu.memory_space<vmem>>, vector<1x32x64xf32>
    %379 = vector.shape_cast %378 : vector<1x32x64xf32> to vector<32x64xf32>
    %cst_140 = arith.constant dense<0.000000e+00> : vector<16x64xf32>
    %380 = tpu.matmul %377, %379, %cst_140 {dimension_numbers = #tpu.dot_dimension_numbers<[1], [0], [0], [1], [0, 0, 1, 1], [], []>} : vector<16x32xf32>, vector<32x64xf32>, vector<16x64xf32> -> vector<16x64xf32>
    %c1_141 = arith.constant 1 : index
    %c0_142 = arith.constant 0 : index
    %c0_143 = arith.constant 0 : index
    %381 = vector.load %arg11[%c1_141, %c0_142, %c0_143] : memref<2x1x64xf32, #tpu.memory_space<vmem>>, vector<1x1x64xf32>
    %382 = vector.shape_cast %381 : vector<1x1x64xf32> to vector<1x64xf32>
    %383 = vector.broadcast %382 : vector<1x64xf32> to vector<16x64xf32>
    %384 = arith.addf %380, %383 : vector<16x64xf32>
    %cst_144 = arith.constant 5.000000e-01 : f32
    %385 = vector.broadcast %cst_144 : f32 to vector<16x64xf32>
    %386 = arith.mulf %385, %384 : vector<16x64xf32>
    %cst_145 = arith.constant 4.471500e-02 : f32
    %387 = vector.broadcast %cst_145 : f32 to vector<16x64xf32>
    %388 = arith.mulf %387, %384 : vector<16x64xf32>
    %389 = arith.mulf %388, %384 : vector<16x64xf32>
    %390 = arith.mulf %389, %384 : vector<16x64xf32>
    %391 = arith.addf %384, %390 : vector<16x64xf32>
    %cst_146 = arith.constant 0.797884583 : f32
    %392 = vector.broadcast %cst_146 : f32 to vector<16x64xf32>
    %393 = arith.mulf %392, %391 : vector<16x64xf32>
    %394 = math.tanh %393 : vector<16x64xf32>
    %cst_147 = arith.constant 1.000000e+00 : f32
    %395 = vector.broadcast %cst_147 : f32 to vector<16x64xf32>
    %396 = arith.addf %395, %394 : vector<16x64xf32>
    %397 = arith.mulf %386, %396 : vector<16x64xf32>
    %c1_148 = arith.constant 1 : index
    %c0_149 = arith.constant 0 : index
    %c0_150 = arith.constant 0 : index
    %398 = vector.load %arg12[%c1_148, %c0_149, %c0_150] : memref<2x64x32xf32, #tpu.memory_space<vmem>>, vector<1x64x32xf32>
    %399 = vector.shape_cast %398 : vector<1x64x32xf32> to vector<64x32xf32>
    %cst_151 = arith.constant dense<0.000000e+00> : vector<16x32xf32>
    %400 = tpu.matmul %397, %399, %cst_151 {dimension_numbers = #tpu.dot_dimension_numbers<[1], [0], [0], [1], [0, 0, 1, 1], [], []>} : vector<16x64xf32>, vector<64x32xf32>, vector<16x32xf32> -> vector<16x32xf32>
    %c1_152 = arith.constant 1 : index
    %c0_153 = arith.constant 0 : index
    %c0_154 = arith.constant 0 : index
    %401 = vector.load %arg13[%c1_152, %c0_153, %c0_154] : memref<2x1x32xf32, #tpu.memory_space<vmem>>, vector<1x1x32xf32>
    %402 = vector.shape_cast %401 : vector<1x1x32xf32> to vector<1x32xf32>
    %403 = vector.broadcast %402 : vector<1x32xf32> to vector<16x32xf32>
    %404 = arith.addf %400, %403 : vector<16x32xf32>
    %405 = arith.addf %404, %377 : vector<16x32xf32>
    %c1_155 = arith.constant 1 : index
    %c0_156 = arith.constant 0 : index
    %c0_157 = arith.constant 0 : index
    %406 = vector.load %arg14[%c1_155, %c0_156, %c0_157] : memref<2x1x32xf32, #tpu.memory_space<vmem>>, vector<1x1x32xf32>
    %407 = vector.shape_cast %406 : vector<1x1x32xf32> to vector<1x32xf32>
    %c1_158 = arith.constant 1 : index
    %c0_159 = arith.constant 0 : index
    %c0_160 = arith.constant 0 : index
    %408 = vector.load %arg15[%c1_158, %c0_159, %c0_160] : memref<2x1x32xf32, #tpu.memory_space<vmem>>, vector<1x1x32xf32>
    %409 = vector.shape_cast %408 : vector<1x1x32xf32> to vector<1x32xf32>
    %cst_161 = arith.constant dense<0.000000e+00> : vector<16xf32>
    %410 = vector.multi_reduction <add>, %405, %cst_161 [1] : vector<16x32xf32> to vector<16xf32>
    %411 = vector.shape_cast %410 : vector<16xf32> to vector<16x1xf32>
    %cst_162 = arith.constant 3.200000e+01 : f32
    %412 = vector.broadcast %cst_162 : f32 to vector<16x1xf32>
    %413 = arith.divf %411, %412 : vector<16x1xf32>
    %414 = vector.broadcast %413 : vector<16x1xf32> to vector<16x32xf32>
    %415 = arith.subf %405, %414 : vector<16x32xf32>
    %416 = arith.mulf %415, %415 : vector<16x32xf32>
    %cst_163 = arith.constant dense<0.000000e+00> : vector<16xf32>
    %417 = vector.multi_reduction <add>, %416, %cst_163 [1] : vector<16x32xf32> to vector<16xf32>
    %418 = vector.shape_cast %417 : vector<16xf32> to vector<16x1xf32>
    %cst_164 = arith.constant 3.200000e+01 : f32
    %419 = vector.broadcast %cst_164 : f32 to vector<16x1xf32>
    %420 = arith.divf %418, %419 : vector<16x1xf32>
    %421 = vector.broadcast %413 : vector<16x1xf32> to vector<16x32xf32>
    %422 = arith.subf %405, %421 : vector<16x32xf32>
    %cst_165 = arith.constant 9.99999996E-13 : f32
    %423 = vector.broadcast %cst_165 : f32 to vector<16x1xf32>
    %424 = arith.addf %420, %423 : vector<16x1xf32>
    %425 = math.rsqrt %424 : vector<16x1xf32>
    %426 = vector.broadcast %425 : vector<16x1xf32> to vector<16x32xf32>
    %427 = arith.mulf %422, %426 : vector<16x32xf32>
    %428 = vector.broadcast %407 : vector<1x32xf32> to vector<16x32xf32>
    %429 = arith.mulf %427, %428 : vector<16x32xf32>
    %430 = vector.broadcast %409 : vector<1x32xf32> to vector<16x32xf32>
    %431 = arith.addf %429, %430 : vector<16x32xf32>
    %432 = vector.shape_cast %431 : vector<16x32xf32> to vector<2x8x32xf32>
    %433 = vector.extract_strided_slice %432 {offsets = [0, 0, 0], sizes = [2, 1, 32], strides = [1, 1, 1]} : vector<2x8x32xf32> to vector<2x1x32xf32>
    %434 = vector.shape_cast %433 : vector<2x1x32xf32> to vector<2x32xf32>
    %c0_166 = arith.constant 0 : index
    %c0_167 = arith.constant 0 : index
    %435 = vector.load %arg16[%c0_166, %c0_167] : memref<32x32xf32, #tpu.memory_space<vmem>>, vector<32x32xf32>
    %cst_168 = arith.constant dense<0.000000e+00> : vector<2x32xf32>
    %436 = tpu.matmul %434, %435, %cst_168 {dimension_numbers = #tpu.dot_dimension_numbers<[1], [0], [0], [1], [0, 0, 1, 1], [], []>} : vector<2x32xf32>, vector<32x32xf32>, vector<2x32xf32> -> vector<2x32xf32>
    %c0_169 = arith.constant 0 : index
    %c0_170 = arith.constant 0 : index
    %437 = vector.load %arg17[%c0_169, %c0_170] : memref<1x32xf32, #tpu.memory_space<vmem>>, vector<1x32xf32>
    %438 = vector.broadcast %437 : vector<1x32xf32> to vector<2x32xf32>
    %439 = arith.addf %436, %438 : vector<2x32xf32>
    %440 = math.tanh %439 : vector<2x32xf32>
    %c0_171 = arith.constant 0 : index
    %c0_172 = arith.constant 0 : index
    %441 = vector.load %arg18[%c0_171, %c0_172] : memref<32x3xf32, #tpu.memory_space<vmem>>, vector<32x3xf32>
    %cst_173 = arith.constant dense<0.000000e+00> : vector<2x3xf32>
    %442 = tpu.matmul %440, %441, %cst_173 {dimension_numbers = #tpu.dot_dimension_numbers<[1], [0], [0], [1], [0, 0, 1, 1], [], []>} : vector<2x32xf32>, vector<32x3xf32>, vector<2x3xf32> -> vector<2x3xf32>
    %c0_174 = arith.constant 0 : index
    %c0_175 = arith.constant 0 : index
    %443 = vector.load %arg19[%c0_174, %c0_175] : memref<1x3xf32, #tpu.memory_space<vmem>>, vector<1x3xf32>
    %444 = vector.broadcast %443 : vector<1x3xf32> to vector<2x3xf32>
    %445 = arith.addf %442, %444 : vector<2x3xf32>
    %c0_176 = arith.constant 0 : index
    %c0_177 = arith.constant 0 : index
    %446 = vector.load %arg20[%c0_176, %c0_177] : memref<2x3xf32, #tpu.memory_space<vmem>>, vector<2x3xf32>
    tpu.vector_store %arg20[%c0_176, %c0_177], %445 {strides = array<i32>} : memref<2x3xf32, #tpu.memory_space<vmem>>, vector<2x3xf32>,
    return
  }
}

</mosaic_0001>

<llo_original>
// kernel: interest_classifier_forward.1
$region0: #{interest_classifier_forward.1}
  #allocation0 [shape = 'u32[]', space=smem, size = 0x4, offset = 0x4, fixed_abs, tag = 'smem constant byte address 0x4 - core index']
  #allocation1 [shape = 'u32[144,128]{1,0:T(1,128)}', space=vmem, size = 0x12000, scoped, tag = 'internal scratch']
  %s0 = inlined_call_operand.vmem [shape: f32[16,32], index: 0, kind: input, shape index: {}]
  %s1 = inlined_call_operand.vmem [shape: f32[2,8], index: 1, kind: input, shape index: {}]
  %s2 = inlined_call_operand.vmem [shape: f32[1,32], index: 2, kind: input, shape index: {}]
  %s3 = inlined_call_operand.vmem [shape: f32[1,32], index: 3, kind: input, shape index: {}]
  %s4 = inlined_call_operand.vmem [shape: f32[2,32,96], index: 4, kind: input, shape index: {}]
  %s5 = inlined_call_operand.vmem [shape: f32[2,1,96], index: 5, kind: input, shape index: {}]
  %s6 = inlined_call_operand.vmem [shape: f32[2,32,32], index: 6, kind: input, shape index: {}]
  %s7 = inlined_call_operand.vmem [shape: f32[2,1,32], index: 7, kind: input, shape index: {}]
  %s8 = inlined_call_operand.vmem [shape: f32[2,1,32], index: 8, kind: input, shape index: {}]
  %s9 = inlined_call_operand.vmem [shape: f32[2,1,32], index: 9, kind: input, shape index: {}]
  %s10 = inlined_call_operand.vmem [shape: f32[2,32,64], index: 10, kind: input, shape index: {}]
  %s11 = inlined_call_operand.vmem [shape: f32[2,1,64], index: 11, kind: input, shape index: {}]
  %s12 = inlined_call_operand.vmem [shape: f32[2,64,32], index: 12, kind: input, shape index: {}]
  %s13 = inlined_call_operand.vmem [shape: f32[2,1,32], index: 13, kind: input, shape index: {}]
  %s14 = inlined_call_operand.vmem [shape: f32[2,1,32], index: 14, kind: input, shape index: {}]
  %s15 = inlined_call_operand.vmem [shape: f32[2,1,32], index: 15, kind: input, shape index: {}]
  %s16 = inlined_call_operand.vmem [shape: f32[32,32], index: 16, kind: input, shape index: {}]
  %s17 = inlined_call_operand.vmem [shape: f32[1,32], index: 17, kind: input, shape index: {}]
  %s18 = inlined_call_operand.vmem [shape: f32[32,3], index: 18, kind: input, shape index: {}]
  %s19 = inlined_call_operand.vmem [shape: f32[1,3], index: 19, kind: input, shape index: {}]
  %s20 = inlined_call_operand.hbm [shape: f32[2,3], index: 20, kind: output, shape index: {}]
  %s21 = sld [smem:[#allocation0]]
  $region90: #{interest_classifier_forward.1} parent=0
    _
  %s23 = ssub.s32 1, %s21
  %s24 = scalar_select 0, %s23, %s21
  $region1: #{interest_classifier_forward.1} parent=0
    #allocation2 [shape = 'u8[1024]{0}', space=vmem, size = 0x400, scoped, tag = 'output window, operand 0, single buffered']
    #allocation3 [shape = 's32[1]{0}', space=sflag, size = 0x4, scoped, tag = 'scoped memory for interest_classifier_forward.1']
    %25 = vsyncpa [#allocation3], 0
    // Predicated region
    $region2: #{interest_classifier_forward.1} parent=1 // pred_check
      _
    $region3: #{interest_classifier_forward.1} parent=1 // pred_check_branch
      %27 = sbr.rel (0) target = $region5
    $region4: #{interest_classifier_forward.1} parent=1 // pred_region
      _
    $region5: #{interest_classifier_forward.1} parent=1 // pred_fallthru
      _
    // Predicated region
    $region6: #{interest_classifier_forward.1} parent=1 // pred_check
      _
    $region7: #{interest_classifier_forward.1} parent=1 // pred_check_branch
      %29 = sbr.rel (0) target = $region9
    $region8: #{interest_classifier_forward.1} parent=1 // pred_region
      _
    $region9: #{interest_classifier_forward.1} parent=1 // pred_fallthru
      _
    // Predicated region
    $region10: #{interest_classifier_forward.1} parent=1 // pred_check
      _
    $region11: #{interest_classifier_forward.1} parent=1 // pred_check_branch
      %31 = sbr.rel (0) target = $region13
    $region12: #{interest_classifier_forward.1} parent=1 // pred_region
      _
    $region13: #{interest_classifier_forward.1} parent=1 // pred_fallthru
      _
    // Predicated region
    $region14: #{interest_classifier_forward.1} parent=1 // pred_check
      _
    $region15: #{interest_classifier_forward.1} parent=1 // pred_check_branch
      %33 = sbr.rel (0) target = $region17
    $region16: #{interest_classifier_forward.1} parent=1 // pred_region
      _
    $region17: #{interest_classifier_forward.1} parent=1 // pred_fallthru
      _
    // Predicated region
    $region18: #{interest_classifier_forward.1} parent=1 // pred_check
      _
    $region19: #{interest_classifier_forward.1} parent=1 // pred_check_branch
      %35 = sbr.rel (0) target = $region21
    $region20: #{interest_classifier_forward.1} parent=1 // pred_region
      _
    $region21: #{interest_classifier_forward.1} parent=1 // pred_fallthru
      _
    // Predicated region
    $region22: #{interest_classifier_forward.1} parent=1 // pred_check
      _
    $region23: #{interest_classifier_forward.1} parent=1 // pred_check_branch
      %37 = sbr.rel (0) target = $region25
    $region24: #{interest_classifier_forward.1} parent=1 // pred_region
      _
    $region25: #{interest_classifier_forward.1} parent=1 // pred_fallthru
      _
    // Predicated region
    $region26: #{interest_classifier_forward.1} parent=1 // pred_check
      _
    $region27: #{interest_classifier_forward.1} parent=1 // pred_check_branch
      %39 = sbr.rel (0) target = $region29
    $region28: #{interest_classifier_forward.1} parent=1 // pred_region
      _
    $region29: #{interest_classifier_forward.1} parent=1 // pred_fallthru
      _
    // Predicated region
    $region30: #{interest_classifier_forward.1} parent=1 // pred_check
      _
    $region31: #{interest_classifier_forward.1} parent=1 // pred_check_branch
      %41 = sbr.rel (0) target = $region33
    $region32: #{interest_classifier_forward.1} parent=1 // pred_region
      _
    $region33: #{interest_classifier_forward.1} parent=1 // pred_fallthru
      _
    // Predicated region
    $region34: #{interest_classifier_forward.1} parent=1 // pred_check
      _
    $region35: #{interest_classifier_forward.1} parent=1 // pred_check_branch
      %43 = sbr.rel (0) target = $region37
    $region36: #{interest_classifier_forward.1} parent=1 // pred_region
      _
    $region37: #{interest_classifier_forward.1} parent=1 // pred_fallthru
      _
    // Predicated region
    $region38: #{interest_classifier_forward.1} parent=1 // pred_check
      _
    $region39: #{interest_classifier_forward.1} parent=1 // pred_check_branch
      %45 = sbr.rel (0) target = $region41
    $region40: #{interest_classifier_forward.1} parent=1 // pred_region
      _
    $region41: #{interest_classifier_forward.1} parent=1 // pred_fallthru
      _
    // Predicated region
    $region42: #{interest_classifier_forward.1} parent=1 // pred_check
      _
    $region43: #{interest_classifier_forward.1} parent=1 // pred_check_branch
      %47 = sbr.rel (0) target = $region45
    $region44: #{interest_classifier_forward.1} parent=1 // pred_region
      _
    $region45: #{interest_classifier_forward.1} parent=1 // pred_fallthru
      _
    // Predicated region
    $region46: #{interest_classifier_forward.1} parent=1 // pred_check
      _
    $region47: #{interest_classifier_forward.1} parent=1 // pred_check_branch
      %49 = sbr.rel (0) target = $region49
    $region48: #{interest_classifier_forward.1} parent=1 // pred_region
      _
    $region49: #{interest_classifier_forward.1} parent=1 // pred_fallthru
      _
    // Predicated region
    $region50: #{interest_classifier_forward.1} parent=1 // pred_check
      _
    $region51: #{interest_classifier_forward.1} parent=1 // pred_check_branch
      %51 = sbr.rel (0) target = $region53
    $region52: #{interest_classifier_forward.1} parent=1 // pred_region
      _
    $region53: #{interest_classifier_forward.1} parent=1 // pred_fallthru
      _
    // Predicated region
    $region54: #{interest_classifier_forward.1} parent=1 // pred_check
      _
    $region55: #{interest_classifier_forward.1} parent=1 // pred_check_branch
      %53 = sbr.rel (0) target = $region57
    $region56: #{interest_classifier_forward.1} parent=1 // pred_region
      _
    $region57: #{interest_classifier_forward.1} parent=1 // pred_fallthru
      _
    // Predicated region
    $region58: #{interest_classifier_forward.1} parent=1 // pred_check
      _
    $region59: #{interest_classifier_forward.1} parent=1 // pred_check_branch
      %55 = sbr.rel (0) target = $region61
    $region60: #{interest_classifier_forward.1} parent=1 // pred_region
      _
    $region61: #{interest_classifier_forward.1} parent=1 // pred_fallthru
      _
    // Predicated region
    $region62: #{interest_classifier_forward.1} parent=1 // pred_check
      _
    $region63: #{interest_classifier_forward.1} parent=1 // pred_check_branch
      %57 = sbr.rel (0) target = $region65
    $region64: #{interest_classifier_forward.1} parent=1 // pred_region
      _
    $region65: #{interest_classifier_forward.1} parent=1 // pred_fallthru
      _
    // Predicated region
    $region66: #{interest_classifier_forward.1} parent=1 // pred_check
      _
    $region67: #{interest_classifier_forward.1} parent=1 // pred_check_branch
      %59 = sbr.rel (0) target = $region69
    $region68: #{interest_classifier_forward.1} parent=1 // pred_region
      _
    $region69: #{interest_classifier_forward.1} parent=1 // pred_fallthru
      _
    // Predicated region
    $region70: #{interest_classifier_forward.1} parent=1 // pred_check
      _
    $region71: #{interest_classifier_forward.1} parent=1 // pred_check_branch
      %61 = sbr.rel (0) target = $region73
    $region72: #{interest_classifier_forward.1} parent=1 // pred_region
      _
    $region73: #{interest_classifier_forward.1} parent=1 // pred_fallthru
      _
    // Predicated region
    $region74: #{interest_classifier_forward.1} parent=1 // pred_check
      _
    $region75: #{interest_classifier_forward.1} parent=1 // pred_check_branch
      %63 = sbr.rel (0) target = $region77
    $region76: #{interest_classifier_forward.1} parent=1 // pred_region
      _
    $region77: #{interest_classifier_forward.1} parent=1 // pred_fallthru
      _
    // Predicated region
    $region78: #{interest_classifier_forward.1} parent=1 // pred_check
      _
    $region79: #{interest_classifier_forward.1} parent=1 // pred_check_branch
      %65 = sbr.rel (0) target = $region81
    $region80: #{interest_classifier_forward.1} parent=1 // pred_region
      _
    $region81: #{interest_classifier_forward.1} parent=1 // pred_fallthru
      _
    %v66 = vld [vmem:[%s0] sm:$0xff]
    %v67 = vld [vmem:[%s0 + $0x8] sm:$0xff]
    %v68 = vld [vmem:[%s2] sm:$0x1]
    %v69 = vld [vmem:[%s3] sm:$0x1]
    %vm70 = vcmask 261120
    %v71 = vsel %vm70, %v66, 0.0
    %72 = vadd.xlane.f32.xlu0 %v71
    %v73 = vpop.xlane.xlu0 %72
    %v74 = vsel %vm70, %v67, 0.0
    %75 = vadd.xlane.f32.xlu0 %v74
    %v76 = vpop.xlane.xlu0 %75
    %v77 = vrcp.pop 32.0
    %v78 = vmul.f32 %v73, %v77
    %v79 = vmul.f32 %v76, %v77
    %v80 = vsub.f32 %v66, %v78
    %v81 = vsub.f32 %v67, %v79
    %v82 = vmul.f32 %v80, %v80
    %v83 = vmul.f32 %v81, %v81
    %v84 = vsel %vm70, %v82, 0.0
    %85 = vadd.xlane.f32.xlu0 %v84
    %v86 = vpop.xlane.xlu0 %85
    %v87 = vsel %vm70, %v83, 0.0
    %88 = vadd.xlane.f32.xlu0 %v87
    %v89 = vpop.xlane.xlu0 %88
    %v90 = vmul.f32 %v86, %v77
    %v91 = vmul.f32 %v89, %v77
    %v92 = vadd.f32 %v90, 1e-12
    %v93 = vadd.f32 %v91, 1e-12
    %v94 = vrsqrt.pop %v92
    %v95 = vrsqrt.pop %v93
    %v96 = vmul.f32 %v80, %v94
    %v97 = vmul.f32 %v81, %v95
    %v99 = vlaneseq
    %v100 = vshrl.u32 %v99, 7
    %v101 = vsub.s32 0, %v100
    %v102 = vrot.slane %v68, %v101
    %v104 = vmul.f32 %v96, %v102
    %v105 = vmul.f32 %v97, %v102
    %v107 = vlaneseq
    %v108 = vshrl.u32 %v107, 7
    %v109 = vsub.s32 0, %v108
    %v110 = vrot.slane %v69, %v109
    %v112 = vadd.f32 %v104, %v110
    %v113 = vadd.f32 %v105, %v110
    %v114 = vld [vmem:[%s1] sm:$0x3]
    %v115 = vld [vmem:[%s4] sm:$0xff]
    %v116 = vld [vmem:[%s4 + $0x8] sm:$0xff]
    %v117 = vld [vmem:[%s4 + $0x10] sm:$0xff]
    %v118 = vld [vmem:[%s4 + $0x18] sm:$0xff]
    %v119 = vld [vmem:[%s5] sm:$0x1]
    %v121 = vlaneseq
    %v122 = vshrl.u32 %v121, 7
    %v123 = vsub.s32 0, %v122
    %v124 = vrot.slane %v119, %v123
    %v127 = vsel %vm70, %v112, 0
    %v130 = vsel %vm70, %v113, 0
    %132 = vmatprep.subr.mxu0 0.0
    %133 = vmatpush1.msra.mxu0 0.0
    %134 = vmatprep.subr.mxu0 0.0
    %135 = vmatpush1.msra.mxu0 0.0
    %136 = vmatprep.subr.mxu0 0.0
    %137 = vmatpush1.msra.mxu0 0.0
    %138 = vmatprep.subr.mxu0 0.0
    %139 = vmatpush1.msra.mxu0 0.0
    %140 = vmatprep.subr.mxu0 0.0
    %141 = vmatpush1.msra.mxu0 0.0
    %142 = vmatprep.subr.mxu0 0.0
    %143 = vmatpush1.msra.mxu0 0.0
    %144 = vmatprep.subr.mxu0 0.0
    %145 = vmatpush1.msra.mxu0 0.0
    %146 = vmatprep.subr.mxu0 0.0
    %147 = vmatpush1.msra.mxu0 0.0
    %148 = vmatprep.subr.mxu0 0.0
    %149 = vmatpush1.msra.mxu0 0.0
    %150 = vmatprep.subr.mxu0 0.0
    %151 = vmatpush1.msra.mxu0 0.0
    %152 = vmatprep.subr.mxu0 0.0
    %153 = vmatpush1.msra.mxu0 0.0
    %154 = vmatprep.subr.mxu0 0.0
    %155 = vmatpush1.msra.mxu0 0.0
    %156 = vmatprep.subr.mxu0 0.0
    %157 = vmatpush1.msra.mxu0 %v118
    %158 = vmatprep.subr.mxu0 0.0
    %159 = vmatpush1.msra.mxu0 %v117
    %160 = vmatprep.subr.mxu0 0.0
    %161 = vmatpush1.msra.mxu0 %v116
    %162 = vmatprep.subr.mxu0 0.0
    %163 = vmatpush1.msra.mxu0 %v115
    %164 = vmatprep.subr.mxu0 0.0
    %165 = vmatpush2.msra.mxu0 0.0
    %166 = vmatprep.subr.mxu0 0.0
    %167 = vmatpush2.msra.mxu0 0.0
    %168 = vmatprep.subr.mxu0 0.0
    %169 = vmatpush2.msra.mxu0 0.0
    %170 = vmatprep.subr.mxu0 0.0
    %171 = vmatpush2.msra.mxu0 0.0
    %172 = vmatprep.subr.mxu0 0.0
    %173 = vmatpush2.msra.mxu0 0.0
    %174 = vmatprep.subr.mxu0 0.0
    %175 = vmatpush2.msra.mxu0 0.0
    %176 = vmatprep.subr.mxu0 0.0
    %177 = vmatpush2.msra.mxu0 0.0
    %178 = vmatprep.subr.mxu0 0.0
    %179 = vmatpush2.msra.mxu0 0.0
    %180 = vmatprep.subr.mxu0 0.0
    %181 = vmatpush2.msra.mxu0 0.0
    %182 = vmatprep.subr.mxu0 0.0
    %183 = vmatpush2.msra.mxu0 0.0
    %184 = vmatprep.subr.mxu0 0.0
    %185 = vmatpush2.msra.mxu0 0.0
    %186 = vmatprep.subr.mxu0 0.0
    %187 = vmatpush2.msra.mxu0 0.0
    %188 = vmatprep.subr.mxu0 0.0
    %189 = vmatpush2.msra.mxu0 0.0
    %190 = vmatprep.subr.mxu0 0.0
    %191 = vmatpush2.msra.mxu0 0.0
    %192 = vmatprep.subr.mxu0 0.0
    %193 = vmatpush2.msra.mxu0 0.0
    %194 = vmatprep.subr.mxu0 0.0
    %195 = vmatpush2.msra.mxu0 0.0
    %196 = vmatprep.mubr.f32.mxu0 0.0
    %197 = vmatmul.mubr.f32.gmra.mxu0 %v127
    %v198 = vpop.f32.mrf.mxu0
    %v199 = vadd.f32 %v124, %v198
    %v200 = vpop.f32.mrf.mxu0
    %201 = vmatprep.mubr.f32.mxu0 0.0
    %202 = vmatmul.mubr.f32.gmra.mxu0 %v130
    %v203 = vpop.f32.mrf.mxu0
    %v204 = vadd.f32 %v124, %v203
    %v205 = vpop.f32.mrf.mxu0
    %206 = vdwg.mxu0
    %v207 = vld [vmem:[%s6] sm:$0xff]
    %v208 = vld [vmem:[%s6 + $0x8] sm:$0xff]
    %v209 = vld [vmem:[%s6 + $0x10] sm:$0xff]
    %v210 = vld [vmem:[%s6 + $0x18] sm:$0xff]
    %212 = vrot.lane.b32.xlu0 %v199, 96
    %v213 = vpop.permute.xlu0 %212
    %vm214 = vcmask 64512
    %v215 = vsel %vm214, %v199, 0
    %v217 = vsel %vm214, %v213, 0
    %219 = vmatprep.subr.mxu0 0.0
    %220 = vmatpush1.xpose.msra.mxu0 0.0
    %221 = vmatprep.subr.mxu0 0.0
    %222 = vmatpush1.xpose.msra.mxu0 0.0
    %223 = vmatprep.subr.mxu0 0.0
    %224 = vmatpush1.xpose.msra.mxu0 0.0
    %225 = vmatprep.subr.mxu0 0.0
    %226 = vmatpush1.xpose.msra.mxu0 0.0
    %227 = vmatprep.subr.mxu0 0.0
    %228 = vmatpush1.xpose.msra.mxu0 0.0
    %229 = vmatprep.subr.mxu0 0.0
    %230 = vmatpush1.xpose.msra.mxu0 0.0
    %231 = vmatprep.subr.mxu0 0.0
    %232 = vmatpush1.xpose.msra.mxu0 0.0
    %233 = vmatprep.subr.mxu0 0.0
    %234 = vmatpush1.xpose.msra.mxu0 0.0
    %235 = vmatprep.subr.mxu0 0.0
    %236 = vmatpush1.xpose.msra.mxu0 0.0
    %237 = vmatprep.subr.mxu0 0.0
    %238 = vmatpush1.xpose.msra.mxu0 0.0
    %239 = vmatprep.subr.mxu0 0.0
    %240 = vmatpush1.xpose.msra.mxu0 0.0
    %241 = vmatprep.subr.mxu0 0.0
    %242 = vmatpush1.xpose.msra.mxu0 0.0
    %243 = vmatprep.subr.mxu0 0.0
    %244 = vmatpush1.xpose.msra.mxu0 0.0
    %245 = vmatprep.subr.mxu0 0.0
    %246 = vmatpush1.xpose.msra.mxu0 0.0
    %247 = vmatprep.subr.mxu0 0.0
    %248 = vmatpush1.xpose.msra.mxu0 0.0
    %249 = vmatprep.subr.mxu0 0.0
    %250 = vmatpush1.xpose.msra.mxu0 %v217
    %251 = vmatprep.subr.mxu0 0.0
    %252 = vmatpush2.xpose.msra.mxu0 0.0
    %253 = vmatprep.subr.mxu0 0.0
    %254 = vmatpush2.xpose.msra.mxu0 0.0
    %255 = vmatprep.subr.mxu0 0.0
    %256 = vmatpush2.xpose.msra.mxu0 0.0
    %257 = vmatprep.subr.mxu0 0.0
    %258 = vmatpush2.xpose.msra.mxu0 0.0
    %259 = vmatprep.subr.mxu0 0.0
    %260 = vmatpush2.xpose.msra.mxu0 0.0
    %261 = vmatprep.subr.mxu0 0.0
    %262 = vmatpush2.xpose.msra.mxu0 0.0
    %263 = vmatprep.subr.mxu0 0.0
    %264 = vmatpush2.xpose.msra.mxu0 0.0
    %265 = vmatprep.subr.mxu0 0.0
    %266 = vmatpush2.xpose.msra.mxu0 0.0
    %267 = vmatprep.subr.mxu0 0.0
    %268 = vmatpush2.xpose.msra.mxu0 0.0
    %269 = vmatprep.subr.mxu0 0.0
    %270 = vmatpush2.xpose.msra.mxu0 0.0
    %271 = vmatprep.subr.mxu0 0.0
    %272 = vmatpush2.xpose.msra.mxu0 0.0
    %273 = vmatprep.subr.mxu0 0.0
    %274 = vmatpush2.xpose.msra.mxu0 0.0
    %275 = vmatprep.subr.mxu0 0.0
    %276 = vmatpush2.xpose.msra.mxu0 0.0
    %277 = vmatprep.subr.mxu0 0.0
    %278 = vmatpush2.xpose.msra.mxu0 0.0
    %279 = vmatprep.subr.mxu0 0.0
    %280 = vmatpush2.xpose.msra.mxu0 0.0
    %281 = vmatprep.subr.mxu0 0.0
    %282 = vmatpush2.xpose.msra.mxu0 0.0
    %283 = vmatprep.mubr.f32.mxu0 0.0
    %284 = vmatmul.mubr.f32.gmra.mxu0 %v215
    %v285 = vpop.f32.mrf.mxu0
    %v286 = vadd.f32 0.0, %v285
    %v287 = vpop.f32.mrf.mxu0
    %288 = vdwg.mxu0
    %290 = vrot.lane.b32.xlu0 %v204, 96
    %v291 = vpop.permute.xlu0 %290
    %v292 = vsel %vm214, %v204, 0
    %v294 = vsel %vm214, %v291, 0
    %296 = vmatprep.subr.mxu0 0.0
    %297 = vmatpush1.xpose.msra.mxu0 0.0
    %298 = vmatprep.subr.mxu0 0.0
    %299 = vmatpush1.xpose.msra.mxu0 0.0
    %300 = vmatprep.subr.mxu0 0.0
    %301 = vmatpush1.xpose.msra.mxu0 0.0
    %302 = vmatprep.subr.mxu0 0.0
    %303 = vmatpush1.xpose.msra.mxu0 0.0
    %304 = vmatprep.subr.mxu0 0.0
    %305 = vmatpush1.xpose.msra.mxu0 0.0
    %306 = vmatprep.subr.mxu0 0.0
    %307 = vmatpush1.xpose.msra.mxu0 0.0
    %308 = vmatprep.subr.mxu0 0.0
    %309 = vmatpush1.xpose.msra.mxu0 0.0
    %310 = vmatprep.subr.mxu0 0.0
    %311 = vmatpush1.xpose.msra.mxu0 0.0
    %312 = vmatprep.subr.mxu0 0.0
    %313 = vmatpush1.xpose.msra.mxu0 0.0
    %314 = vmatprep.subr.mxu0 0.0
    %315 = vmatpush1.xpose.msra.mxu0 0.0
    %316 = vmatprep.subr.mxu0 0.0
    %317 = vmatpush1.xpose.msra.mxu0 0.0
    %318 = vmatprep.subr.mxu0 0.0
    %319 = vmatpush1.xpose.msra.mxu0 0.0
    %320 = vmatprep.subr.mxu0 0.0
    %321 = vmatpush1.xpose.msra.mxu0 0.0
    %322 = vmatprep.subr.mxu0 0.0
    %323 = vmatpush1.xpose.msra.mxu0 0.0
    %324 = vmatprep.subr.mxu0 0.0
    %325 = vmatpush1.xpose.msra.mxu0 0.0
    %326 = vmatprep.subr.mxu0 0.0
    %327 = vmatpush1.xpose.msra.mxu0 %v294
    %328 = vmatprep.subr.mxu0 0.0
    %329 = vmatpush2.xpose.msra.mxu0 0.0
    %330 = vmatprep.subr.mxu0 0.0
    %331 = vmatpush2.xpose.msra.mxu0 0.0
    %332 = vmatprep.subr.mxu0 0.0
    %333 = vmatpush2.xpose.msra.mxu0 0.0
    %334 = vmatprep.subr.mxu0 0.0
    %335 = vmatpush2.xpose.msra.mxu0 0.0
    %336 = vmatprep.subr.mxu0 0.0
    %337 = vmatpush2.xpose.msra.mxu0 0.0
    %338 = vmatprep.subr.mxu0 0.0
    %339 = vmatpush2.xpose.msra.mxu0 0.0
    %340 = vmatprep.subr.mxu0 0.0
    %341 = vmatpush2.xpose.msra.mxu0 0.0
    %342 = vmatprep.subr.mxu0 0.0
    %343 = vmatpush2.xpose.msra.mxu0 0.0
    %344 = vmatprep.subr.mxu0 0.0
    %345 = vmatpush2.xpose.msra.mxu0 0.0
    %346 = vmatprep.subr.mxu0 0.0
    %347 = vmatpush2.xpose.msra.mxu0 0.0
    %348 = vmatprep.subr.mxu0 0.0
    %349 = vmatpush2.xpose.msra.mxu0 0.0
    %350 = vmatprep.subr.mxu0 0.0
    %351 = vmatpush2.xpose.msra.mxu0 0.0
    %352 = vmatprep.subr.mxu0 0.0
    %353 = vmatpush2.xpose.msra.mxu0 0.0
    %354 = vmatprep.subr.mxu0 0.0
    %355 = vmatpush2.xpose.msra.mxu0 0.0
    %356 = vmatprep.subr.mxu0 0.0
    %357 = vmatpush2.xpose.msra.mxu0 0.0
    %358 = vmatprep.subr.mxu0 0.0
    %359 = vmatpush2.xpose.msra.mxu0 0.0
    %360 = vmatprep.mubr.f32.mxu0 0.0
    %361 = vmatmul.mubr.f32.gmra.mxu0 %v292
    %v362 = vpop.f32.mrf.mxu0
    %v363 = vadd.f32 0.0, %v362
    %v364 = vpop.f32.mrf.mxu0
    %365 = vdwg.mxu0
    %v366 = vmul.f32 %v286, 0.35355338
    %v367 = vmul.f32 %v363, 0.35355338
    %v370 = vunpack.c.l.s4 1966171168
    %v371 = vunpack.c.0.s8 %v370
    %v372 = vlaneseq
    %v373 = vshrl.u32 %v372, 7
    %v374 = vsub.s32 %v371, %v373
    %v375 = vrot.slane %v114, %v374
    %v376 = vcombine.high %v375, %v375
    %v378 = vunpack.c.l.s4 1966171168
    %v379 = vunpack.c.0.s8 %v378
    %v380 = vlaneseq
    %v381 = vshrl.u32 %v380, 7
    %v382 = vsub.s32 %v379, %v381
    %v383 = vrot.slane %v375, %v382
    %v385 = vunpack.c.l.s4 1966171168
    %v386 = vunpack.c.0.s8 %v385
    %v387 = vlaneseq
    %v388 = vshrl.u32 %v387, 7
    %v389 = vsub.s32 %v386, %v388
    %v390 = vrot.slane %v376, %v389
    %v391 = vlaneseq
    %v392 = vshrl.u32 %v391, 7
    %v393 = vsub.s32 0, %v392
    %v394 = vrot.slane %v383, %v393
    %v395 = vlaneseq
    %v396 = vshrl.u32 %v395, 7
    %v397 = vsub.s32 0, %v396
    %v398 = vrot.slane %v390, %v397
    %v401 = vadd.f32 %v366, %v394
    %v402 = vadd.f32 %v367, %v398
    %v403 = vsel %vm214, %v401, -inf
    %404 = vmax.xlane.f32.xlu0 %v403
    %v405 = vpop.xlane.xlu0 %404
    %v406 = vsel %vm214, %v402, -inf
    %407 = vmax.xlane.f32.xlu0 %v406
    %v408 = vpop.xlane.xlu0 %407
    %v409 = vsub.f32 %v401, %v405
    %v410 = vsub.f32 %v402, %v408
    %v411 = vmul.f32 %v409, 1.442695
    %v412 = vpow.pop %v411
    %v413 = vmul.f32 %v410, 1.442695
    %v414 = vpow.pop %v413
    %v415 = vsel %vm214, %v412, 0.0
    %416 = vadd.xlane.f32.xlu0 %v415
    %v417 = vpop.xlane.xlu0 %416
    %v418 = vsel %vm214, %v414, 0.0
    %419 = vadd.xlane.f32.xlu0 %v418
    %v420 = vpop.xlane.xlu0 %419
    %v421 = vrcp.pop %v417
    %v422 = vrcp.pop %v420
    %v423 = vmul.f32 %v412, %v421
    %v424 = vmul.f32 %v414, %v422
    %425 = vrot.lane.b32.xlu0 %v199, 64
    %v426 = vpop.permute.xlu0 %425
    %v429 = vsel %vm214, %v423, 0
    %431 = vmatprep.subr.mxu0 0.0
    %432 = vmatpush1.msra.mxu0 0.0
    %433 = vmatprep.subr.mxu0 0.0
    %434 = vmatpush1.msra.mxu0 0.0
    %435 = vmatprep.subr.mxu0 0.0
    %436 = vmatpush1.msra.mxu0 0.0
    %437 = vmatprep.subr.mxu0 0.0
    %438 = vmatpush1.msra.mxu0 0.0
    %439 = vmatprep.subr.mxu0 0.0
    %440 = vmatpush1.msra.mxu0 0.0
    %441 = vmatprep.subr.mxu0 0.0
    %442 = vmatpush1.msra.mxu0 0.0
    %443 = vmatprep.subr.mxu0 0.0
    %444 = vmatpush1.msra.mxu0 0.0
    %445 = vmatprep.subr.mxu0 0.0
    %446 = vmatpush1.msra.mxu0 0.0
    %447 = vmatprep.subr.mxu0 0.0
    %448 = vmatpush1.msra.mxu0 0.0
    %449 = vmatprep.subr.mxu0 0.0
    %450 = vmatpush1.msra.mxu0 0.0
    %451 = vmatprep.subr.mxu0 0.0
    %452 = vmatpush1.msra.mxu0 0.0
    %453 = vmatprep.subr.mxu0 0.0
    %454 = vmatpush1.msra.mxu0 0.0
    %455 = vmatprep.subr.mxu0 0.0
    %456 = vmatpush1.msra.mxu0 0.0
    %457 = vmatprep.subr.mxu0 0.0
    %458 = vmatpush1.msra.mxu0 0.0
    %459 = vmatprep.subr.mxu0 0.0
    %460 = vmatpush1.msra.mxu0 0.0
    %461 = vmatprep.subr.mxu0 0.0
    %462 = vmatpush1.msra.mxu0 %v426
    %463 = vmatprep.subr.mxu0 0.0
    %464 = vmatpush2.msra.mxu0 0.0
    %465 = vmatprep.subr.mxu0 0.0
    %466 = vmatpush2.msra.mxu0 0.0
    %467 = vmatprep.subr.mxu0 0.0
    %468 = vmatpush2.msra.mxu0 0.0
    %469 = vmatprep.subr.mxu0 0.0
    %470 = vmatpush2.msra.mxu0 0.0
    %471 = vmatprep.subr.mxu0 0.0
    %472 = vmatpush2.msra.mxu0 0.0
    %473 = vmatprep.subr.mxu0 0.0
    %474 = vmatpush2.msra.mxu0 0.0
    %475 = vmatprep.subr.mxu0 0.0
    %476 = vmatpush2.msra.mxu0 0.0
    %477 = vmatprep.subr.mxu0 0.0
    %478 = vmatpush2.msra.mxu0 0.0
    %479 = vmatprep.subr.mxu0 0.0
    %480 = vmatpush2.msra.mxu0 0.0
    %481 = vmatprep.subr.mxu0 0.0
    %482 = vmatpush2.msra.mxu0 0.0
    %483 = vmatprep.subr.mxu0 0.0
    %484 = vmatpush2.msra.mxu0 0.0
    %485 = vmatprep.subr.mxu0 0.0
    %486 = vmatpush2.msra.mxu0 0.0
    %487 = vmatprep.subr.mxu0 0.0
    %488 = vmatpush2.msra.mxu0 0.0
    %489 = vmatprep.subr.mxu0 0.0
    %490 = vmatpush2.msra.mxu0 0.0
    %491 = vmatprep.subr.mxu0 0.0
    %492 = vmatpush2.msra.mxu0 0.0
    %493 = vmatprep.subr.mxu0 0.0
    %494 = vmatpush2.msra.mxu0 0.0
    %495 = vmatprep.mubr.f32.mxu0 0.0
    %496 = vmatmul.mubr.f32.gmra.mxu0 %v429
    %v497 = vpop.f32.mrf.mxu0
    %v498 = vadd.f32 0.0, %v497
    %v499 = vpop.f32.mrf.mxu0
    %500 = vdwg.mxu0
    %501 = vrot.lane.b32.xlu0 %v204, 64
    %v502 = vpop.permute.xlu0 %501
    %v505 = vsel %vm214, %v424, 0
    %507 = vmatprep.subr.mxu0 0.0
    %508 = vmatpush1.msra.mxu0 0.0
    %509 = vmatprep.subr.mxu0 0.0
    %510 = vmatpush1.msra.mxu0 0.0
    %511 = vmatprep.subr.mxu0 0.0
    %512 = vmatpush1.msra.mxu0 0.0
    %513 = vmatprep.subr.mxu0 0.0
    %514 = vmatpush1.msra.mxu0 0.0
    %515 = vmatprep.subr.mxu0 0.0
    %516 = vmatpush1.msra.mxu0 0.0
    %517 = vmatprep.subr.mxu0 0.0
    %518 = vmatpush1.msra.mxu0 0.0
    %519 = vmatprep.subr.mxu0 0.0
    %520 = vmatpush1.msra.mxu0 0.0
    %521 = vmatprep.subr.mxu0 0.0
    %522 = vmatpush1.msra.mxu0 0.0
    %523 = vmatprep.subr.mxu0 0.0
    %524 = vmatpush1.msra.mxu0 0.0
    %525 = vmatprep.subr.mxu0 0.0
    %526 = vmatpush1.msra.mxu0 0.0
    %527 = vmatprep.subr.mxu0 0.0
    %528 = vmatpush1.msra.mxu0 0.0
    %529 = vmatprep.subr.mxu0 0.0
    %530 = vmatpush1.msra.mxu0 0.0
    %531 = vmatprep.subr.mxu0 0.0
    %532 = vmatpush1.msra.mxu0 0.0
    %533 = vmatprep.subr.mxu0 0.0
    %534 = vmatpush1.msra.mxu0 0.0
    %535 = vmatprep.subr.mxu0 0.0
    %536 = vmatpush1.msra.mxu0 0.0
    %537 = vmatprep.subr.mxu0 0.0
    %538 = vmatpush1.msra.mxu0 %v502
    %539 = vmatprep.subr.mxu0 0.0
    %540 = vmatpush2.msra.mxu0 0.0
    %541 = vmatprep.subr.mxu0 0.0
    %542 = vmatpush2.msra.mxu0 0.0
    %543 = vmatprep.subr.mxu0 0.0
    %544 = vmatpush2.msra.mxu0 0.0
    %545 = vmatprep.subr.mxu0 0.0
    %546 = vmatpush2.msra.mxu0 0.0
    %547 = vmatprep.subr.mxu0 0.0
    %548 = vmatpush2.msra.mxu0 0.0
    %549 = vmatprep.subr.mxu0 0.0
    %550 = vmatpush2.msra.mxu0 0.0
    %551 = vmatprep.subr.mxu0 0.0
    %552 = vmatpush2.msra.mxu0 0.0
    %553 = vmatprep.subr.mxu0 0.0
    %554 = vmatpush2.msra.mxu0 0.0
    %555 = vmatprep.subr.mxu0 0.0
    %556 = vmatpush2.msra.mxu0 0.0
    %557 = vmatprep.subr.mxu0 0.0
    %558 = vmatpush2.msra.mxu0 0.0
    %559 = vmatprep.subr.mxu0 0.0
    %560 = vmatpush2.msra.mxu0 0.0
    %561 = vmatprep.subr.mxu0 0.0
    %562 = vmatpush2.msra.mxu0 0.0
    %563 = vmatprep.subr.mxu0 0.0
    %564 = vmatpush2.msra.mxu0 0.0
    %565 = vmatprep.subr.mxu0 0.0
    %566 = vmatpush2.msra.mxu0 0.0
    %567 = vmatprep.subr.mxu0 0.0
    %568 = vmatpush2.msra.mxu0 0.0
    %569 = vmatprep.subr.mxu0 0.0
    %570 = vmatpush2.msra.mxu0 0.0
    %571 = vmatprep.mubr.f32.mxu0 0.0
    %572 = vmatmul.mubr.f32.gmra.mxu0 %v505
    %v573 = vpop.f32.mrf.mxu0
    %v574 = vadd.f32 0.0, %v573
    %v575 = vpop.f32.mrf.mxu0
    %576 = vdwg.mxu0
    %577 = vrot.lane.b32.xlu0 %v199, 120
    %v578 = vpop.permute.xlu0 %577
    %579 = vrot.lane.b32.xlu0 %v199, 88
    %v580 = vpop.permute.xlu0 %579
    %v581 = vsel %vm214, %v578, 0
    %v583 = vsel %vm214, %v580, 0
    %585 = vmatprep.subr.mxu0 0.0
    %586 = vmatpush1.xpose.msra.mxu0 0.0
    %587 = vmatprep.subr.mxu0 0.0
    %588 = vmatpush1.xpose.msra.mxu0 0.0
    %589 = vmatprep.subr.mxu0 0.0
    %590 = vmatpush1.xpose.msra.mxu0 0.0
    %591 = vmatprep.subr.mxu0 0.0
    %592 = vmatpush1.xpose.msra.mxu0 0.0
    %593 = vmatprep.subr.mxu0 0.0
    %594 = vmatpush1.xpose.msra.mxu0 0.0
    %595 = vmatprep.subr.mxu0 0.0
    %596 = vmatpush1.xpose.msra.mxu0 0.0
    %597 = vmatprep.subr.mxu0 0.0
    %598 = vmatpush1.xpose.msra.mxu0 0.0
    %599 = vmatprep.subr.mxu0 0.0
    %600 = vmatpush1.xpose.msra.mxu0 0.0
    %601 = vmatprep.subr.mxu0 0.0
    %602 = vmatpush1.xpose.msra.mxu0 0.0
    %603 = vmatprep.subr.mxu0 0.0
    %604 = vmatpush1.xpose.msra.mxu0 0.0
    %605 = vmatprep.subr.mxu0 0.0
    %606 = vmatpush1.xpose.msra.mxu0 0.0
    %607 = vmatprep.subr.mxu0 0.0
    %608 = vmatpush1.xpose.msra.mxu0 0.0
    %609 = vmatprep.subr.mxu0 0.0
    %610 = vmatpush1.xpose.msra.mxu0 0.0
    %611 = vmatprep.subr.mxu0 0.0
    %612 = vmatpush1.xpose.msra.mxu0 0.0
    %613 = vmatprep.subr.mxu0 0.0
    %614 = vmatpush1.xpose.msra.mxu0 0.0
    %615 = vmatprep.subr.mxu0 0.0
    %616 = vmatpush1.xpose.msra.mxu0 %v583
    %617 = vmatprep.subr.mxu0 0.0
    %618 = vmatpush2.xpose.msra.mxu0 0.0
    %619 = vmatprep.subr.mxu0 0.0
    %620 = vmatpush2.xpose.msra.mxu0 0.0
    %621 = vmatprep.subr.mxu0 0.0
    %622 = vmatpush2.xpose.msra.mxu0 0.0
    %623 = vmatprep.subr.mxu0 0.0
    %624 = vmatpush2.xpose.msra.mxu0 0.0
    %625 = vmatprep.subr.mxu0 0.0
    %626 = vmatpush2.xpose.msra.mxu0 0.0
    %627 = vmatprep.subr.mxu0 0.0
    %628 = vmatpush2.xpose.msra.mxu0 0.0
    %629 = vmatprep.subr.mxu0 0.0
    %630 = vmatpush2.xpose.msra.mxu0 0.0
    %631 = vmatprep.subr.mxu0 0.0
    %632 = vmatpush2.xpose.msra.mxu0 0.0
    %633 = vmatprep.subr.mxu0 0.0
    %634 = vmatpush2.xpose.msra.mxu0 0.0
    %635 = vmatprep.subr.mxu0 0.0
    %636 = vmatpush2.xpose.msra.mxu0 0.0
    %637 = vmatprep.subr.mxu0 0.0
    %638 = vmatpush2.xpose.msra.mxu0 0.0
    %639 = vmatprep.subr.mxu0 0.0
    %640 = vmatpush2.xpose.msra.mxu0 0.0
    %641 = vmatprep.subr.mxu0 0.0
    %642 = vmatpush2.xpose.msra.mxu0 0.0
    %643 = vmatprep.subr.mxu0 0.0
    %644 = vmatpush2.xpose.msra.mxu0 0.0
    %645 = vmatprep.subr.mxu0 0.0
    %646 = vmatpush2.xpose.msra.mxu0 0.0
    %647 = vmatprep.subr.mxu0 0.0
    %648 = vmatpush2.xpose.msra.mxu0 0.0
    %649 = vmatprep.mubr.f32.mxu0 0.0
    %650 = vmatmul.mubr.f32.gmra.mxu0 %v581
    %v651 = vpop.f32.mrf.mxu0
    %v652 = vadd.f32 0.0, %v651
    %v653 = vpop.f32.mrf.mxu0
    %654 = vdwg.mxu0
    %655 = vrot.lane.b32.xlu0 %v204, 120
    %v656 = vpop.permute.xlu0 %655
    %657 = vrot.lane.b32.xlu0 %v204, 88
    %v658 = vpop.permute.xlu0 %657
    %v659 = vsel %vm214, %v656, 0
    %v661 = vsel %vm214, %v658, 0
    %663 = vmatprep.subr.mxu0 0.0
    %664 = vmatpush1.xpose.msra.mxu0 0.0
    %665 = vmatprep.subr.mxu0 0.0
    %666 = vmatpush1.xpose.msra.mxu0 0.0
    %667 = vmatprep.subr.mxu0 0.0
    %668 = vmatpush1.xpose.msra.mxu0 0.0
    %669 = vmatprep.subr.mxu0 0.0
    %670 = vmatpush1.xpose.msra.mxu0 0.0
    %671 = vmatprep.subr.mxu0 0.0
    %672 = vmatpush1.xpose.msra.mxu0 0.0
    %673 = vmatprep.subr.mxu0 0.0
    %674 = vmatpush1.xpose.msra.mxu0 0.0
    %675 = vmatprep.subr.mxu0 0.0
    %676 = vmatpush1.xpose.msra.mxu0 0.0
    %677 = vmatprep.subr.mxu0 0.0
    %678 = vmatpush1.xpose.msra.mxu0 0.0
    %679 = vmatprep.subr.mxu0 0.0
    %680 = vmatpush1.xpose.msra.mxu0 0.0
    %681 = vmatprep.subr.mxu0 0.0
    %682 = vmatpush1.xpose.msra.mxu0 0.0
    %683 = vmatprep.subr.mxu0 0.0
    %684 = vmatpush1.xpose.msra.mxu0 0.0
    %685 = vmatprep.subr.mxu0 0.0
    %686 = vmatpush1.xpose.msra.mxu0 0.0
    %687 = vmatprep.subr.mxu0 0.0
    %688 = vmatpush1.xpose.msra.mxu0 0.0
    %689 = vmatprep.subr.mxu0 0.0
    %690 = vmatpush1.xpose.msra.mxu0 0.0
    %691 = vmatprep.subr.mxu0 0.0
    %692 = vmatpush1.xpose.msra.mxu0 0.0
    %693 = vmatprep.subr.mxu0 0.0
    %694 = vmatpush1.xpose.msra.mxu0 %v661
    %695 = vmatprep.subr.mxu0 0.0
    %696 = vmatpush2.xpose.msra.mxu0 0.0
    %697 = vmatprep.subr.mxu0 0.0
    %698 = vmatpush2.xpose.msra.mxu0 0.0
    %699 = vmatprep.subr.mxu0 0.0
    %700 = vmatpush2.xpose.msra.mxu0 0.0
    %701 = vmatprep.subr.mxu0 0.0
    %702 = vmatpush2.xpose.msra.mxu0 0.0
    %703 = vmatprep.subr.mxu0 0.0
    %704 = vmatpush2.xpose.msra.mxu0 0.0
    %705 = vmatprep.subr.mxu0 0.0
    %706 = vmatpush2.xpose.msra.mxu0 0.0
    %707 = vmatprep.subr.mxu0 0.0
    %708 = vmatpush2.xpose.msra.mxu0 0.0
    %709 = vmatprep.subr.mxu0 0.0
    %710 = vmatpush2.xpose.msra.mxu0 0.0
    %711 = vmatprep.subr.mxu0 0.0
    %712 = vmatpush2.xpose.msra.mxu0 0.0
    %713 = vmatprep.subr.mxu0 0.0
    %714 = vmatpush2.xpose.msra.mxu0 0.0
    %715 = vmatprep.subr.mxu0 0.0
    %716 = vmatpush2.xpose.msra.mxu0 0.0
    %717 = vmatprep.subr.mxu0 0.0
    %718 = vmatpush2.xpose.msra.mxu0 0.0
    %719 = vmatprep.subr.mxu0 0.0
    %720 = vmatpush2.xpose.msra.mxu0 0.0
    %721 = vmatprep.subr.mxu0 0.0
    %722 = vmatpush2.xpose.msra.mxu0 0.0
    %723 = vmatprep.subr.mxu0 0.0
    %724 = vmatpush2.xpose.msra.mxu0 0.0
    %725 = vmatprep.subr.mxu0 0.0
    %726 = vmatpush2.xpose.msra.mxu0 0.0
    %727 = vmatprep.mubr.f32.mxu0 0.0
    %728 = vmatmul.mubr.f32.gmra.mxu0 %v659
    %v729 = vpop.f32.mrf.mxu0
    %v730 = vadd.f32 0.0, %v729
    %v731 = vpop.f32.mrf.mxu0
    %732 = vdwg.mxu0
    %v733 = vmul.f32 %v652, 0.35355338
    %v734 = vmul.f32 %v730, 0.35355338
    %v735 = vadd.f32 %v733, %v394
    %v736 = vadd.f32 %v734, %v398
    %v737 = vsel %vm214, %v735, -inf
    %738 = vmax.xlane.f32.xlu0 %v737
    %v739 = vpop.xlane.xlu0 %738
    %v740 = vsel %vm214, %v736, -inf
    %741 = vmax.xlane.f32.xlu0 %v740
    %v742 = vpop.xlane.xlu0 %741
    %v743 = vsub.f32 %v735, %v739
    %v744 = vsub.f32 %v736, %v742
    %v745 = vmul.f32 %v743, 1.442695
    %v746 = vpow.pop %v745
    %v747 = vmul.f32 %v744, 1.442695
    %v748 = vpow.pop %v747
    %v749 = vsel %vm214, %v746, 0.0
    %750 = vadd.xlane.f32.xlu0 %v749
    %v751 = vpop.xlane.xlu0 %750
    %v752 = vsel %vm214, %v748, 0.0
    %753 = vadd.xlane.f32.xlu0 %v752
    %v754 = vpop.xlane.xlu0 %753
    %v755 = vrcp.pop %v751
    %v756 = vrcp.pop %v754
    %v757 = vmul.f32 %v746, %v755
    %v758 = vmul.f32 %v748, %v756
    %759 = vrot.lane.b32.xlu0 %v199, 56
    %v760 = vpop.permute.xlu0 %759
    %v763 = vsel %vm214, %v757, 0
    %765 = vmatprep.subr.mxu0 0.0
    %766 = vmatpush1.msra.mxu0 0.0
    %767 = vmatprep.subr.mxu0 0.0
    %768 = vmatpush1.msra.mxu0 0.0
    %769 = vmatprep.subr.mxu0 0.0
    %770 = vmatpush1.msra.mxu0 0.0
    %771 = vmatprep.subr.mxu0 0.0
    %772 = vmatpush1.msra.mxu0 0.0
    %773 = vmatprep.subr.mxu0 0.0
    %774 = vmatpush1.msra.mxu0 0.0
    %775 = vmatprep.subr.mxu0 0.0
    %776 = vmatpush1.msra.mxu0 0.0
    %777 = vmatprep.subr.mxu0 0.0
    %778 = vmatpush1.msra.mxu0 0.0
    %779 = vmatprep.subr.mxu0 0.0
    %780 = vmatpush1.msra.mxu0 0.0
    %781 = vmatprep.subr.mxu0 0.0
    %782 = vmatpush1.msra.mxu0 0.0
    %783 = vmatprep.subr.mxu0 0.0
    %784 = vmatpush1.msra.mxu0 0.0
    %785 = vmatprep.subr.mxu0 0.0
    %786 = vmatpush1.msra.mxu0 0.0
    %787 = vmatprep.subr.mxu0 0.0
    %788 = vmatpush1.msra.mxu0 0.0
    %789 = vmatprep.subr.mxu0 0.0
    %790 = vmatpush1.msra.mxu0 0.0
    %791 = vmatprep.subr.mxu0 0.0
    %792 = vmatpush1.msra.mxu0 0.0
    %793 = vmatprep.subr.mxu0 0.0
    %794 = vmatpush1.msra.mxu0 0.0
    %795 = vmatprep.subr.mxu0 0.0
    %796 = vmatpush1.msra.mxu0 %v760
    %797 = vmatprep.subr.mxu0 0.0
    %798 = vmatpush2.msra.mxu0 0.0
    %799 = vmatprep.subr.mxu0 0.0
    %800 = vmatpush2.msra.mxu0 0.0
    %801 = vmatprep.subr.mxu0 0.0
    %802 = vmatpush2.msra.mxu0 0.0
    %803 = vmatprep.subr.mxu0 0.0
    %804 = vmatpush2.msra.mxu0 0.0
    %805 = vmatprep.subr.mxu0 0.0
    %806 = vmatpush2.msra.mxu0 0.0
    %807 = vmatprep.subr.mxu0 0.0
    %808 = vmatpush2.msra.mxu0 0.0
    %809 = vmatprep.subr.mxu0 0.0
    %810 = vmatpush2.msra.mxu0 0.0
    %811 = vmatprep.subr.mxu0 0.0
    %812 = vmatpush2.msra.mxu0 0.0
    %813 = vmatprep.subr.mxu0 0.0
    %814 = vmatpush2.msra.mxu0 0.0
    %815 = vmatprep.subr.mxu0 0.0
    %816 = vmatpush2.msra.mxu0 0.0
    %817 = vmatprep.subr.mxu0 0.0
    %818 = vmatpush2.msra.mxu0 0.0
    %819 = vmatprep.subr.mxu0 0.0
    %820 = vmatpush2.msra.mxu0 0.0
    %821 = vmatprep.subr.mxu0 0.0
    %822 = vmatpush2.msra.mxu0 0.0
    %823 = vmatprep.subr.mxu0 0.0
    %824 = vmatpush2.msra.mxu0 0.0
    %825 = vmatprep.subr.mxu0 0.0
    %826 = vmatpush2.msra.mxu0 0.0
    %827 = vmatprep.subr.mxu0 0.0
    %828 = vmatpush2.msra.mxu0 0.0
    %829 = vmatprep.mubr.f32.mxu0 0.0
    %830 = vmatmul.mubr.f32.gmra.mxu0 %v763
    %v831 = vpop.f32.mrf.mxu0
    %v832 = vadd.f32 0.0, %v831
    %v833 = vpop.f32.mrf.mxu0
    %834 = vdwg.mxu0
    %835 = vrot.lane.b32.xlu0 %v204, 56
    %v836 = vpop.permute.xlu0 %835
    %v839 = vsel %vm214, %v758, 0
    %841 = vmatprep.subr.mxu0 0.0
    %842 = vmatpush1.msra.mxu0 0.0
    %843 = vmatprep.subr.mxu0 0.0
    %844 = vmatpush1.msra.mxu0 0.0
    %845 = vmatprep.subr.mxu0 0.0
    %846 = vmatpush1.msra.mxu0 0.0
    %847 = vmatprep.subr.mxu0 0.0
    %848 = vmatpush1.msra.mxu0 0.0
    %849 = vmatprep.subr.mxu0 0.0
    %850 = vmatpush1.msra.mxu0 0.0
    %851 = vmatprep.subr.mxu0 0.0
    %852 = vmatpush1.msra.mxu0 0.0
    %853 = vmatprep.subr.mxu0 0.0
    %854 = vmatpush1.msra.mxu0 0.0
    %855 = vmatprep.subr.mxu0 0.0
    %856 = vmatpush1.msra.mxu0 0.0
    %857 = vmatprep.subr.mxu0 0.0
    %858 = vmatpush1.msra.mxu0 0.0
    %859 = vmatprep.subr.mxu0 0.0
    %860 = vmatpush1.msra.mxu0 0.0
    %861 = vmatprep.subr.mxu0 0.0
    %862 = vmatpush1.msra.mxu0 0.0
    %863 = vmatprep.subr.mxu0 0.0
    %864 = vmatpush1.msra.mxu0 0.0
    %865 = vmatprep.subr.mxu0 0.0
    %866 = vmatpush1.msra.mxu0 0.0
    %867 = vmatprep.subr.mxu0 0.0
    %868 = vmatpush1.msra.mxu0 0.0
    %869 = vmatprep.subr.mxu0 0.0
    %870 = vmatpush1.msra.mxu0 0.0
    %871 = vmatprep.subr.mxu0 0.0
    %872 = vmatpush1.msra.mxu0 %v836
    %873 = vmatprep.subr.mxu0 0.0
    %874 = vmatpush2.msra.mxu0 0.0
    %875 = vmatprep.subr.mxu0 0.0
    %876 = vmatpush2.msra.mxu0 0.0
    %877 = vmatprep.subr.mxu0 0.0
    %878 = vmatpush2.msra.mxu0 0.0
    %879 = vmatprep.subr.mxu0 0.0
    %880 = vmatpush2.msra.mxu0 0.0
    %881 = vmatprep.subr.mxu0 0.0
    %882 = vmatpush2.msra.mxu0 0.0
    %883 = vmatprep.subr.mxu0 0.0
    %884 = vmatpush2.msra.mxu0 0.0
    %885 = vmatprep.subr.mxu0 0.0
    %886 = vmatpush2.msra.mxu0 0.0
    %887 = vmatprep.subr.mxu0 0.0
    %888 = vmatpush2.msra.mxu0 0.0
    %889 = vmatprep.subr.mxu0 0.0
    %890 = vmatpush2.msra.mxu0 0.0
    %891 = vmatprep.subr.mxu0 0.0
    %892 = vmatpush2.msra.mxu0 0.0
    %893 = vmatprep.subr.mxu0 0.0
    %894 = vmatpush2.msra.mxu0 0.0
    %895 = vmatprep.subr.mxu0 0.0
    %896 = vmatpush2.msra.mxu0 0.0
    %897 = vmatprep.subr.mxu0 0.0
    %898 = vmatpush2.msra.mxu0 0.0
    %899 = vmatprep.subr.mxu0 0.0
    %900 = vmatpush2.msra.mxu0 0.0
    %901 = vmatprep.subr.mxu0 0.0
    %902 = vmatpush2.msra.mxu0 0.0
    %903 = vmatprep.subr.mxu0 0.0
    %904 = vmatpush2.msra.mxu0 0.0
    %905 = vmatprep.mubr.f32.mxu0 0.0
    %906 = vmatmul.mubr.f32.gmra.mxu0 %v839
    %v907 = vpop.f32.mrf.mxu0
    %v908 = vadd.f32 0.0, %v907
    %v909 = vpop.f32.mrf.mxu0
    %910 = vdwg.mxu0
    %v912 = vsel %vm214, %v832, 0
    %v915 = vsel %vm214, %v908, 0
    %917 = vmatprep.subr.mxu0 0.0
    %918 = vmatpush1.msra.mxu0 0.0
    %919 = vmatprep.subr.mxu0 0.0
    %920 = vmatpush1.msra.mxu0 0.0
    %921 = vmatprep.subr.mxu0 0.0
    %922 = vmatpush1.msra.mxu0 0.0
    %923 = vmatprep.subr.mxu0 0.0
    %924 = vmatpush1.msra.mxu0 0.0
    %925 = vmatprep.subr.mxu0 0.0
    %926 = vmatpush1.msra.mxu0 0.0
    %927 = vmatprep.subr.mxu0 0.0
    %928 = vmatpush1.msra.mxu0 0.0
    %929 = vmatprep.subr.mxu0 0.0
    %930 = vmatpush1.msra.mxu0 0.0
    %931 = vmatprep.subr.mxu0 0.0
    %932 = vmatpush1.msra.mxu0 0.0
    %933 = vmatprep.subr.mxu0 0.0
    %934 = vmatpush1.msra.mxu0 0.0
    %935 = vmatprep.subr.mxu0 0.0
    %936 = vmatpush1.msra.mxu0 0.0
    %937 = vmatprep.subr.mxu0 0.0
    %938 = vmatpush1.msra.mxu0 0.0
    %939 = vmatprep.subr.mxu0 0.0
    %940 = vmatpush1.msra.mxu0 0.0
    %941 = vmatprep.subr.mxu0 0.0
    %942 = vmatpush1.msra.mxu0 0.0
    %943 = vmatprep.subr.mxu0 0.0
    %944 = vmatpush1.msra.mxu0 0.0
    %945 = vmatprep.subr.mxu0 0.0
    %946 = vmatpush1.msra.mxu0 0.0
    %947 = vmatprep.subr.mxu0 0.0
    %948 = vmatpush1.msra.mxu0 %v208
    %949 = vmatprep.subr.mxu0 0.0
    %950 = vmatpush2.msra.mxu0 0.0
    %951 = vmatprep.subr.mxu0 0.0
    %952 = vmatpush2.msra.mxu0 0.0
    %953 = vmatprep.subr.mxu0 0.0
    %954 = vmatpush2.msra.mxu0 0.0
    %955 = vmatprep.subr.mxu0 0.0
    %956 = vmatpush2.msra.mxu0 0.0
    %957 = vmatprep.subr.mxu0 0.0
    %958 = vmatpush2.msra.mxu0 0.0
    %959 = vmatprep.subr.mxu0 0.0
    %960 = vmatpush2.msra.mxu0 0.0
    %961 = vmatprep.subr.mxu0 0.0
    %962 = vmatpush2.msra.mxu0 0.0
    %963 = vmatprep.subr.mxu0 0.0
    %964 = vmatpush2.msra.mxu0 0.0
    %965 = vmatprep.subr.mxu0 0.0
    %966 = vmatpush2.msra.mxu0 0.0
    %967 = vmatprep.subr.mxu0 0.0
    %968 = vmatpush2.msra.mxu0 0.0
    %969 = vmatprep.subr.mxu0 0.0
    %970 = vmatpush2.msra.mxu0 0.0
    %971 = vmatprep.subr.mxu0 0.0
    %972 = vmatpush2.msra.mxu0 0.0
    %973 = vmatprep.subr.mxu0 0.0
    %974 = vmatpush2.msra.mxu0 0.0
    %975 = vmatprep.subr.mxu0 0.0
    %976 = vmatpush2.msra.mxu0 0.0
    %977 = vmatprep.subr.mxu0 0.0
    %978 = vmatpush2.msra.mxu0 0.0
    %979 = vmatprep.subr.mxu0 0.0
    %980 = vmatpush2.msra.mxu0 0.0
    %981 = vmatprep.mubr.f32.mxu0 0.0
    %982 = vmatmul.mubr.f32.gmra.mxu0 %v912
    %v983 = vpop.f32.mrf.mxu0
    %v984 = vadd.f32 0.0, %v983
    %v985 = vpop.f32.mrf.mxu0
    %986 = vmatprep.mubr.f32.mxu0 0.0
    %987 = vmatmul.mubr.f32.gmra.mxu0 %v915
    %v988 = vpop.f32.mrf.mxu0
    %v989 = vadd.f32 0.0, %v988
    %v990 = vpop.f32.mrf.mxu0
    %991 = vdwg.mxu0
    %v993 = vsel %vm214, %v498, 0
    %v996 = vsel %vm214, %v574, 0
    %998 = vmatprep.subr.mxu0 0.0
    %999 = vmatpush1.msra.mxu0 0.0
    %1000 = vmatprep.subr.mxu0 0.0
    %1001 = vmatpush1.msra.mxu0 0.0
    %1002 = vmatprep.subr.mxu0 0.0
    %1003 = vmatpush1.msra.mxu0 0.0
    %1004 = vmatprep.subr.mxu0 0.0
    %1005 = vmatpush1.msra.mxu0 0.0
    %1006 = vmatprep.subr.mxu0 0.0
    %1007 = vmatpush1.msra.mxu0 0.0
    %1008 = vmatprep.subr.mxu0 0.0
    %1009 = vmatpush1.msra.mxu0 0.0
    %1010 = vmatprep.subr.mxu0 0.0
    %1011 = vmatpush1.msra.mxu0 0.0
    %1012 = vmatprep.subr.mxu0 0.0
    %1013 = vmatpush1.msra.mxu0 0.0
    %1014 = vmatprep.subr.mxu0 0.0
    %1015 = vmatpush1.msra.mxu0 0.0
    %1016 = vmatprep.subr.mxu0 0.0
    %1017 = vmatpush1.msra.mxu0 0.0
    %1018 = vmatprep.subr.mxu0 0.0
    %1019 = vmatpush1.msra.mxu0 0.0
    %1020 = vmatprep.subr.mxu0 0.0
    %1021 = vmatpush1.msra.mxu0 0.0
    %1022 = vmatprep.subr.mxu0 0.0
    %1023 = vmatpush1.msra.mxu0 0.0
    %1024 = vmatprep.subr.mxu0 0.0
    %1025 = vmatpush1.msra.mxu0 0.0
    %1026 = vmatprep.subr.mxu0 0.0
    %1027 = vmatpush1.msra.mxu0 0.0
    %1028 = vmatprep.subr.mxu0 0.0
    %1029 = vmatpush1.msra.mxu0 %v207
    %1030 = vmatprep.subr.mxu0 0.0
    %1031 = vmatpush2.msra.mxu0 0.0
    %1032 = vmatprep.subr.mxu0 0.0
    %1033 = vmatpush2.msra.mxu0 0.0
    %1034 = vmatprep.subr.mxu0 0.0
    %1035 = vmatpush2.msra.mxu0 0.0
    %1036 = vmatprep.subr.mxu0 0.0
    %1037 = vmatpush2.msra.mxu0 0.0
    %1038 = vmatprep.subr.mxu0 0.0
    %1039 = vmatpush2.msra.mxu0 0.0
    %1040 = vmatprep.subr.mxu0 0.0
    %1041 = vmatpush2.msra.mxu0 0.0
    %1042 = vmatprep.subr.mxu0 0.0
    %1043 = vmatpush2.msra.mxu0 0.0
    %1044 = vmatprep.subr.mxu0 0.0
    %1045 = vmatpush2.msra.mxu0 0.0
    %1046 = vmatprep.subr.mxu0 0.0
    %1047 = vmatpush2.msra.mxu0 0.0
    %1048 = vmatprep.subr.mxu0 0.0
    %1049 = vmatpush2.msra.mxu0 0.0
    %1050 = vmatprep.subr.mxu0 0.0
    %1051 = vmatpush2.msra.mxu0 0.0
    %1052 = vmatprep.subr.mxu0 0.0
    %1053 = vmatpush2.msra.mxu0 0.0
    %1054 = vmatprep.subr.mxu0 0.0
    %1055 = vmatpush2.msra.mxu0 0.0
    %1056 = vmatprep.subr.mxu0 0.0
    %1057 = vmatpush2.msra.mxu0 0.0
    %1058 = vmatprep.subr.mxu0 0.0
    %1059 = vmatpush2.msra.mxu0 0.0
    %1060 = vmatprep.subr.mxu0 0.0
    %1061 = vmatpush2.msra.mxu0 0.0
    %1062 = vmatprep.mubr.f32.mxu0 0.0
    %1063 = vmatmul.mubr.f32.gmra.mxu0 %v993
    %v1064 = vpop.f32.mrf.mxu0
    %v1065 = vadd.f32 %v984, %v1064
    %v1066 = vpop.f32.mrf.mxu0
    %1067 = vmatprep.mubr.f32.mxu0 0.0
    %1068 = vmatmul.mubr.f32.gmra.mxu0 %v996
    %v1069 = vpop.f32.mrf.mxu0
    %v1070 = vadd.f32 %v989, %v1069
    %v1071 = vpop.f32.mrf.mxu0
    %1072 = vdwg.mxu0
    %1073 = vrot.lane.b32.xlu0 %v199, 112
    %v1074 = vpop.permute.xlu0 %1073
    %1075 = vrot.lane.b32.xlu0 %v199, 80
    %v1076 = vpop.permute.xlu0 %1075
    %v1077 = vsel %vm214, %v1074, 0
    %v1079 = vsel %vm214, %v1076, 0
    %1081 = vmatprep.subr.mxu0 0.0
    %1082 = vmatpush1.xpose.msra.mxu0 0.0
    %1083 = vmatprep.subr.mxu0 0.0
    %1084 = vmatpush1.xpose.msra.mxu0 0.0
    %1085 = vmatprep.subr.mxu0 0.0
    %1086 = vmatpush1.xpose.msra.mxu0 0.0
    %1087 = vmatprep.subr.mxu0 0.0
    %1088 = vmatpush1.xpose.msra.mxu0 0.0
    %1089 = vmatprep.subr.mxu0 0.0
    %1090 = vmatpush1.xpose.msra.mxu0 0.0
    %1091 = vmatprep.subr.mxu0 0.0
    %1092 = vmatpush1.xpose.msra.mxu0 0.0
    %1093 = vmatprep.subr.mxu0 0.0
    %1094 = vmatpush1.xpose.msra.mxu0 0.0
    %1095 = vmatprep.subr.mxu0 0.0
    %1096 = vmatpush1.xpose.msra.mxu0 0.0
    %1097 = vmatprep.subr.mxu0 0.0
    %1098 = vmatpush1.xpose.msra.mxu0 0.0
    %1099 = vmatprep.subr.mxu0 0.0
    %1100 = vmatpush1.xpose.msra.mxu0 0.0
    %1101 = vmatprep.subr.mxu0 0.0
    %1102 = vmatpush1.xpose.msra.mxu0 0.0
    %1103 = vmatprep.subr.mxu0 0.0
    %1104 = vmatpush1.xpose.msra.mxu0 0.0
    %1105 = vmatprep.subr.mxu0 0.0
    %1106 = vmatpush1.xpose.msra.mxu0 0.0
    %1107 = vmatprep.subr.mxu0 0.0
    %1108 = vmatpush1.xpose.msra.mxu0 0.0
    %1109 = vmatprep.subr.mxu0 0.0
    %1110 = vmatpush1.xpose.msra.mxu0 0.0
    %1111 = vmatprep.subr.mxu0 0.0
    %1112 = vmatpush1.xpose.msra.mxu0 %v1079
    %1113 = vmatprep.subr.mxu0 0.0
    %1114 = vmatpush2.xpose.msra.mxu0 0.0
    %1115 = vmatprep.subr.mxu0 0.0
    %1116 = vmatpush2.xpose.msra.mxu0 0.0
    %1117 = vmatprep.subr.mxu0 0.0
    %1118 = vmatpush2.xpose.msra.mxu0 0.0
    %1119 = vmatprep.subr.mxu0 0.0
    %1120 = vmatpush2.xpose.msra.mxu0 0.0
    %1121 = vmatprep.subr.mxu0 0.0
    %1122 = vmatpush2.xpose.msra.mxu0 0.0
    %1123 = vmatprep.subr.mxu0 0.0
    %1124 = vmatpush2.xpose.msra.mxu0 0.0
    %1125 = vmatprep.subr.mxu0 0.0
    %1126 = vmatpush2.xpose.msra.mxu0 0.0
    %1127 = vmatprep.subr.mxu0 0.0
    %1128 = vmatpush2.xpose.msra.mxu0 0.0
    %1129 = vmatprep.subr.mxu0 0.0
    %1130 = vmatpush2.xpose.msra.mxu0 0.0
    %1131 = vmatprep.subr.mxu0 0.0
    %1132 = vmatpush2.xpose.msra.mxu0 0.0
    %1133 = vmatprep.subr.mxu0 0.0
    %1134 = vmatpush2.xpose.msra.mxu0 0.0
    %1135 = vmatprep.subr.mxu0 0.0
    %1136 = vmatpush2.xpose.msra.mxu0 0.0
    %1137 = vmatprep.subr.mxu0 0.0
    %1138 = vmatpush2.xpose.msra.mxu0 0.0
    %1139 = vmatprep.subr.mxu0 0.0
    %1140 = vmatpush2.xpose.msra.mxu0 0.0
    %1141 = vmatprep.subr.mxu0 0.0
    %1142 = vmatpush2.xpose.msra.mxu0 0.0
    %1143 = vmatprep.subr.mxu0 0.0
    %1144 = vmatpush2.xpose.msra.mxu0 0.0
    %1145 = vmatprep.mubr.f32.mxu0 0.0
    %1146 = vmatmul.mubr.f32.gmra.mxu0 %v1077
    %v1147 = vpop.f32.mrf.mxu0
    %v1148 = vadd.f32 0.0, %v1147
    %v1149 = vpop.f32.mrf.mxu0
    %1150 = vdwg.mxu0
    %1151 = vrot.lane.b32.xlu0 %v204, 112
    %v1152 = vpop.permute.xlu0 %1151
    %1153 = vrot.lane.b32.xlu0 %v204, 80
    %v1154 = vpop.permute.xlu0 %1153
    %v1155 = vsel %vm214, %v1152, 0
    %v1157 = vsel %vm214, %v1154, 0
    %1159 = vmatprep.subr.mxu0 0.0
    %1160 = vmatpush1.xpose.msra.mxu0 0.0
    %1161 = vmatprep.subr.mxu0 0.0
    %1162 = vmatpush1.xpose.msra.mxu0 0.0
    %1163 = vmatprep.subr.mxu0 0.0
    %1164 = vmatpush1.xpose.msra.mxu0 0.0
    %1165 = vmatprep.subr.mxu0 0.0
    %1166 = vmatpush1.xpose.msra.mxu0 0.0
    %1167 = vmatprep.subr.mxu0 0.0
    %1168 = vmatpush1.xpose.msra.mxu0 0.0
    %1169 = vmatprep.subr.mxu0 0.0
    %1170 = vmatpush1.xpose.msra.mxu0 0.0
    %1171 = vmatprep.subr.mxu0 0.0
    %1172 = vmatpush1.xpose.msra.mxu0 0.0
    %1173 = vmatprep.subr.mxu0 0.0
    %1174 = vmatpush1.xpose.msra.mxu0 0.0
    %1175 = vmatprep.subr.mxu0 0.0
    %1176 = vmatpush1.xpose.msra.mxu0 0.0
    %1177 = vmatprep.subr.mxu0 0.0
    %1178 = vmatpush1.xpose.msra.mxu0 0.0
    %1179 = vmatprep.subr.mxu0 0.0
    %1180 = vmatpush1.xpose.msra.mxu0 0.0
    %1181 = vmatprep.subr.mxu0 0.0
    %1182 = vmatpush1.xpose.msra.mxu0 0.0
    %1183 = vmatprep.subr.mxu0 0.0
    %1184 = vmatpush1.xpose.msra.mxu0 0.0
    %1185 = vmatprep.subr.mxu0 0.0
    %1186 = vmatpush1.xpose.msra.mxu0 0.0
    %1187 = vmatprep.subr.mxu0 0.0
    %1188 = vmatpush1.xpose.msra.mxu0 0.0
    %1189 = vmatprep.subr.mxu0 0.0
    %1190 = vmatpush1.xpose.msra.mxu0 %v1157
    %1191 = vmatprep.subr.mxu0 0.0
    %1192 = vmatpush2.xpose.msra.mxu0 0.0
    %1193 = vmatprep.subr.mxu0 0.0
    %1194 = vmatpush2.xpose.msra.mxu0 0.0
    %1195 = vmatprep.subr.mxu0 0.0
    %1196 = vmatpush2.xpose.msra.mxu0 0.0
    %1197 = vmatprep.subr.mxu0 0.0
    %1198 = vmatpush2.xpose.msra.mxu0 0.0
    %1199 = vmatprep.subr.mxu0 0.0
    %1200 = vmatpush2.xpose.msra.mxu0 0.0
    %1201 = vmatprep.subr.mxu0 0.0
    %1202 = vmatpush2.xpose.msra.mxu0 0.0
    %1203 = vmatprep.subr.mxu0 0.0
    %1204 = vmatpush2.xpose.msra.mxu0 0.0
    %1205 = vmatprep.subr.mxu0 0.0
    %1206 = vmatpush2.xpose.msra.mxu0 0.0
    %1207 = vmatprep.subr.mxu0 0.0
    %1208 = vmatpush2.xpose.msra.mxu0 0.0
    %1209 = vmatprep.subr.mxu0 0.0
    %1210 = vmatpush2.xpose.msra.mxu0 0.0
    %1211 = vmatprep.subr.mxu0 0.0
    %1212 = vmatpush2.xpose.msra.mxu0 0.0
    %1213 = vmatprep.subr.mxu0 0.0
    %1214 = vmatpush2.xpose.msra.mxu0 0.0
    %1215 = vmatprep.subr.mxu0 0.0
    %1216 = vmatpush2.xpose.msra.mxu0 0.0
    %1217 = vmatprep.subr.mxu0 0.0
    %1218 = vmatpush2.xpose.msra.mxu0 0.0
    %1219 = vmatprep.subr.mxu0 0.0
    %1220 = vmatpush2.xpose.msra.mxu0 0.0
    %1221 = vmatprep.subr.mxu0 0.0
    %1222 = vmatpush2.xpose.msra.mxu0 0.0
    %1223 = vmatprep.mubr.f32.mxu0 0.0
    %1224 = vmatmul.mubr.f32.gmra.mxu0 %v1155
    %v1225 = vpop.f32.mrf.mxu0
    %v1226 = vadd.f32 0.0, %v1225
    %v1227 = vpop.f32.mrf.mxu0
    %1228 = vdwg.mxu0
    %v1229 = vmul.f32 %v1148, 0.35355338
    %v1230 = vmul.f32 %v1226, 0.35355338
    %v1231 = vadd.f32 %v1229, %v394
    %v1232 = vadd.f32 %v1230, %v398
    %v1233 = vsel %vm214, %v1231, -inf
    %1234 = vmax.xlane.f32.xlu0 %v1233
    %v1235 = vpop.xlane.xlu0 %1234
    %v1236 = vsel %vm214, %v1232, -inf
    %1237 = vmax.xlane.f32.xlu0 %v1236
    %v1238 = vpop.xlane.xlu0 %1237
    %v1239 = vsub.f32 %v1231, %v1235
    %v1240 = vsub.f32 %v1232, %v1238
    %v1241 = vmul.f32 %v1239, 1.442695
    %v1242 = vpow.pop %v1241
    %v1243 = vmul.f32 %v1240, 1.442695
    %v1244 = vpow.pop %v1243
    %v1245 = vsel %vm214, %v1242, 0.0
    %1246 = vadd.xlane.f32.xlu0 %v1245
    %v1247 = vpop.xlane.xlu0 %1246
    %v1248 = vsel %vm214, %v1244, 0.0
    %1249 = vadd.xlane.f32.xlu0 %v1248
    %v1250 = vpop.xlane.xlu0 %1249
    %v1251 = vrcp.pop %v1247
    %v1252 = vrcp.pop %v1250
    %v1253 = vmul.f32 %v1242, %v1251
    %v1254 = vmul.f32 %v1244, %v1252
    %1255 = vrot.lane.b32.xlu0 %v199, 48
    %v1256 = vpop.permute.xlu0 %1255
    %v1259 = vsel %vm214, %v1253, 0
    %1261 = vmatprep.subr.mxu0 0.0
    %1262 = vmatpush1.msra.mxu0 0.0
    %1263 = vmatprep.subr.mxu0 0.0
    %1264 = vmatpush1.msra.mxu0 0.0
    %1265 = vmatprep.subr.mxu0 0.0
    %1266 = vmatpush1.msra.mxu0 0.0
    %1267 = vmatprep.subr.mxu0 0.0
    %1268 = vmatpush1.msra.mxu0 0.0
    %1269 = vmatprep.subr.mxu0 0.0
    %1270 = vmatpush1.msra.mxu0 0.0
    %1271 = vmatprep.subr.mxu0 0.0
    %1272 = vmatpush1.msra.mxu0 0.0
    %1273 = vmatprep.subr.mxu0 0.0
    %1274 = vmatpush1.msra.mxu0 0.0
    %1275 = vmatprep.subr.mxu0 0.0
    %1276 = vmatpush1.msra.mxu0 0.0
    %1277 = vmatprep.subr.mxu0 0.0
    %1278 = vmatpush1.msra.mxu0 0.0
    %1279 = vmatprep.subr.mxu0 0.0
    %1280 = vmatpush1.msra.mxu0 0.0
    %1281 = vmatprep.subr.mxu0 0.0
    %1282 = vmatpush1.msra.mxu0 0.0
    %1283 = vmatprep.subr.mxu0 0.0
    %1284 = vmatpush1.msra.mxu0 0.0
    %1285 = vmatprep.subr.mxu0 0.0
    %1286 = vmatpush1.msra.mxu0 0.0
    %1287 = vmatprep.subr.mxu0 0.0
    %1288 = vmatpush1.msra.mxu0 0.0
    %1289 = vmatprep.subr.mxu0 0.0
    %1290 = vmatpush1.msra.mxu0 0.0
    %1291 = vmatprep.subr.mxu0 0.0
    %1292 = vmatpush1.msra.mxu0 %v1256
    %1293 = vmatprep.subr.mxu0 0.0
    %1294 = vmatpush2.msra.mxu0 0.0
    %1295 = vmatprep.subr.mxu0 0.0
    %1296 = vmatpush2.msra.mxu0 0.0
    %1297 = vmatprep.subr.mxu0 0.0
    %1298 = vmatpush2.msra.mxu0 0.0
    %1299 = vmatprep.subr.mxu0 0.0
    %1300 = vmatpush2.msra.mxu0 0.0
    %1301 = vmatprep.subr.mxu0 0.0
    %1302 = vmatpush2.msra.mxu0 0.0
    %1303 = vmatprep.subr.mxu0 0.0
    %1304 = vmatpush2.msra.mxu0 0.0
    %1305 = vmatprep.subr.mxu0 0.0
    %1306 = vmatpush2.msra.mxu0 0.0
    %1307 = vmatprep.subr.mxu0 0.0
    %1308 = vmatpush2.msra.mxu0 0.0
    %1309 = vmatprep.subr.mxu0 0.0
    %1310 = vmatpush2.msra.mxu0 0.0
    %1311 = vmatprep.subr.mxu0 0.0
    %1312 = vmatpush2.msra.mxu0 0.0
    %1313 = vmatprep.subr.mxu0 0.0
    %1314 = vmatpush2.msra.mxu0 0.0
    %1315 = vmatprep.subr.mxu0 0.0
    %1316 = vmatpush2.msra.mxu0 0.0
    %1317 = vmatprep.subr.mxu0 0.0
    %1318 = vmatpush2.msra.mxu0 0.0
    %1319 = vmatprep.subr.mxu0 0.0
    %1320 = vmatpush2.msra.mxu0 0.0
    %1321 = vmatprep.subr.mxu0 0.0
    %1322 = vmatpush2.msra.mxu0 0.0
    %1323 = vmatprep.subr.mxu0 0.0
    %1324 = vmatpush2.msra.mxu0 0.0
    %1325 = vmatprep.mubr.f32.mxu0 0.0
    %1326 = vmatmul.mubr.f32.gmra.mxu0 %v1259
    %v1327 = vpop.f32.mrf.mxu0
    %v1328 = vadd.f32 0.0, %v1327
    %v1329 = vpop.f32.mrf.mxu0
    %1330 = vdwg.mxu0
    %1331 = vrot.lane.b32.xlu0 %v204, 48
    %v1332 = vpop.permute.xlu0 %1331
    %v1335 = vsel %vm214, %v1254, 0
    %1337 = vmatprep.subr.mxu0 0.0
    %1338 = vmatpush1.msra.mxu0 0.0
    %1339 = vmatprep.subr.mxu0 0.0
    %1340 = vmatpush1.msra.mxu0 0.0
    %1341 = vmatprep.subr.mxu0 0.0
    %1342 = vmatpush1.msra.mxu0 0.0
    %1343 = vmatprep.subr.mxu0 0.0
    %1344 = vmatpush1.msra.mxu0 0.0
    %1345 = vmatprep.subr.mxu0 0.0
    %1346 = vmatpush1.msra.mxu0 0.0
    %1347 = vmatprep.subr.mxu0 0.0
    %1348 = vmatpush1.msra.mxu0 0.0
    %1349 = vmatprep.subr.mxu0 0.0
    %1350 = vmatpush1.msra.mxu0 0.0
    %1351 = vmatprep.subr.mxu0 0.0
    %1352 = vmatpush1.msra.mxu0 0.0
    %1353 = vmatprep.subr.mxu0 0.0
    %1354 = vmatpush1.msra.mxu0 0.0
    %1355 = vmatprep.subr.mxu0 0.0
    %1356 = vmatpush1.msra.mxu0 0.0
    %1357 = vmatprep.subr.mxu0 0.0
    %1358 = vmatpush1.msra.mxu0 0.0
    %1359 = vmatprep.subr.mxu0 0.0
    %1360 = vmatpush1.msra.mxu0 0.0
    %1361 = vmatprep.subr.mxu0 0.0
    %1362 = vmatpush1.msra.mxu0 0.0
    %1363 = vmatprep.subr.mxu0 0.0
    %1364 = vmatpush1.msra.mxu0 0.0
    %1365 = vmatprep.subr.mxu0 0.0
    %1366 = vmatpush1.msra.mxu0 0.0
    %1367 = vmatprep.subr.mxu0 0.0
    %1368 = vmatpush1.msra.mxu0 %v1332
    %1369 = vmatprep.subr.mxu0 0.0
    %1370 = vmatpush2.msra.mxu0 0.0
    %1371 = vmatprep.subr.mxu0 0.0
    %1372 = vmatpush2.msra.mxu0 0.0
    %1373 = vmatprep.subr.mxu0 0.0
    %1374 = vmatpush2.msra.mxu0 0.0
    %1375 = vmatprep.subr.mxu0 0.0
    %1376 = vmatpush2.msra.mxu0 0.0
    %1377 = vmatprep.subr.mxu0 0.0
    %1378 = vmatpush2.msra.mxu0 0.0
    %1379 = vmatprep.subr.mxu0 0.0
    %1380 = vmatpush2.msra.mxu0 0.0
    %1381 = vmatprep.subr.mxu0 0.0
    %1382 = vmatpush2.msra.mxu0 0.0
    %1383 = vmatprep.subr.mxu0 0.0
    %1384 = vmatpush2.msra.mxu0 0.0
    %1385 = vmatprep.subr.mxu0 0.0
    %1386 = vmatpush2.msra.mxu0 0.0
    %1387 = vmatprep.subr.mxu0 0.0
    %1388 = vmatpush2.msra.mxu0 0.0
    %1389 = vmatprep.subr.mxu0 0.0
    %1390 = vmatpush2.msra.mxu0 0.0
    %1391 = vmatprep.subr.mxu0 0.0
    %1392 = vmatpush2.msra.mxu0 0.0
    %1393 = vmatprep.subr.mxu0 0.0
    %1394 = vmatpush2.msra.mxu0 0.0
    %1395 = vmatprep.subr.mxu0 0.0
    %1396 = vmatpush2.msra.mxu0 0.0
    %1397 = vmatprep.subr.mxu0 0.0
    %1398 = vmatpush2.msra.mxu0 0.0
    %1399 = vmatprep.subr.mxu0 0.0
    %1400 = vmatpush2.msra.mxu0 0.0
    %1401 = vmatprep.mubr.f32.mxu0 0.0
    %1402 = vmatmul.mubr.f32.gmra.mxu0 %v1335
    %v1403 = vpop.f32.mrf.mxu0
    %v1404 = vadd.f32 0.0, %v1403
    %v1405 = vpop.f32.mrf.mxu0
    %1406 = vdwg.mxu0
    %v1408 = vsel %vm214, %v1328, 0
    %v1411 = vsel %vm214, %v1404, 0
    %1413 = vmatprep.subr.mxu0 0.0
    %1414 = vmatpush1.msra.mxu0 0.0
    %1415 = vmatprep.subr.mxu0 0.0
    %1416 = vmatpush1.msra.mxu0 0.0
    %1417 = vmatprep.subr.mxu0 0.0
    %1418 = vmatpush1.msra.mxu0 0.0
    %1419 = vmatprep.subr.mxu0 0.0
    %1420 = vmatpush1.msra.mxu0 0.0
    %1421 = vmatprep.subr.mxu0 0.0
    %1422 = vmatpush1.msra.mxu0 0.0
    %1423 = vmatprep.subr.mxu0 0.0
    %1424 = vmatpush1.msra.mxu0 0.0
    %1425 = vmatprep.subr.mxu0 0.0
    %1426 = vmatpush1.msra.mxu0 0.0
    %1427 = vmatprep.subr.mxu0 0.0
    %1428 = vmatpush1.msra.mxu0 0.0
    %1429 = vmatprep.subr.mxu0 0.0
    %1430 = vmatpush1.msra.mxu0 0.0
    %1431 = vmatprep.subr.mxu0 0.0
    %1432 = vmatpush1.msra.mxu0 0.0
    %1433 = vmatprep.subr.mxu0 0.0
    %1434 = vmatpush1.msra.mxu0 0.0
    %1435 = vmatprep.subr.mxu0 0.0
    %1436 = vmatpush1.msra.mxu0 0.0
    %1437 = vmatprep.subr.mxu0 0.0
    %1438 = vmatpush1.msra.mxu0 0.0
    %1439 = vmatprep.subr.mxu0 0.0
    %1440 = vmatpush1.msra.mxu0 0.0
    %1441 = vmatprep.subr.mxu0 0.0
    %1442 = vmatpush1.msra.mxu0 0.0
    %1443 = vmatprep.subr.mxu0 0.0
    %1444 = vmatpush1.msra.mxu0 %v209
    %1445 = vmatprep.subr.mxu0 0.0
    %1446 = vmatpush2.msra.mxu0 0.0
    %1447 = vmatprep.subr.mxu0 0.0
    %1448 = vmatpush2.msra.mxu0 0.0
    %1449 = vmatprep.subr.mxu0 0.0
    %1450 = vmatpush2.msra.mxu0 0.0
    %1451 = vmatprep.subr.mxu0 0.0
    %1452 = vmatpush2.msra.mxu0 0.0
    %1453 = vmatprep.subr.mxu0 0.0
    %1454 = vmatpush2.msra.mxu0 0.0
    %1455 = vmatprep.subr.mxu0 0.0
    %1456 = vmatpush2.msra.mxu0 0.0
    %1457 = vmatprep.subr.mxu0 0.0
    %1458 = vmatpush2.msra.mxu0 0.0
    %1459 = vmatprep.subr.mxu0 0.0
    %1460 = vmatpush2.msra.mxu0 0.0
    %1461 = vmatprep.subr.mxu0 0.0
    %1462 = vmatpush2.msra.mxu0 0.0
    %1463 = vmatprep.subr.mxu0 0.0
    %1464 = vmatpush2.msra.mxu0 0.0
    %1465 = vmatprep.subr.mxu0 0.0
    %1466 = vmatpush2.msra.mxu0 0.0
    %1467 = vmatprep.subr.mxu0 0.0
    %1468 = vmatpush2.msra.mxu0 0.0
    %1469 = vmatprep.subr.mxu0 0.0
    %1470 = vmatpush2.msra.mxu0 0.0
    %1471 = vmatprep.subr.mxu0 0.0
    %1472 = vmatpush2.msra.mxu0 0.0
    %1473 = vmatprep.subr.mxu0 0.0
    %1474 = vmatpush2.msra.mxu0 0.0
    %1475 = vmatprep.subr.mxu0 0.0
    %1476 = vmatpush2.msra.mxu0 0.0
    %1477 = vmatprep.mubr.f32.mxu0 0.0
    %1478 = vmatmul.mubr.f32.gmra.mxu0 %v1408
    %v1479 = vpop.f32.mrf.mxu0
    %v1480 = vadd.f32 0.0, %v1479
    %v1481 = vpop.f32.mrf.mxu0
    %1482 = vmatprep.mubr.f32.mxu0 0.0
    %1483 = vmatmul.mubr.f32.gmra.mxu0 %v1411
    %v1484 = vpop.f32.mrf.mxu0
    %v1485 = vadd.f32 0.0, %v1484
    %v1486 = vpop.f32.mrf.mxu0
    %1487 = vdwg.mxu0
    %v1488 = vadd.f32 %v1065, %v1480
    %v1489 = vadd.f32 %v1070, %v1485
    %1490 = vrot.lane.b32.xlu0 %v199, 104
    %v1491 = vpop.permute.xlu0 %1490
    %1492 = vrot.lane.b32.xlu0 %v199, 72
    %v1493 = vpop.permute.xlu0 %1492
    %v1494 = vsel %vm214, %v1491, 0
    %v1496 = vsel %vm214, %v1493, 0
    %1498 = vmatprep.subr.mxu0 0.0
    %1499 = vmatpush1.xpose.msra.mxu0 0.0
    %1500 = vmatprep.subr.mxu0 0.0
    %1501 = vmatpush1.xpose.msra.mxu0 0.0
    %1502 = vmatprep.subr.mxu0 0.0
    %1503 = vmatpush1.xpose.msra.mxu0 0.0
    %1504 = vmatprep.subr.mxu0 0.0
    %1505 = vmatpush1.xpose.msra.mxu0 0.0
    %1506 = vmatprep.subr.mxu0 0.0
    %1507 = vmatpush1.xpose.msra.mxu0 0.0
    %1508 = vmatprep.subr.mxu0 0.0
    %1509 = vmatpush1.xpose.msra.mxu0 0.0
    %1510 = vmatprep.subr.mxu0 0.0
    %1511 = vmatpush1.xpose.msra.mxu0 0.0
    %1512 = vmatprep.subr.mxu0 0.0
    %1513 = vmatpush1.xpose.msra.mxu0 0.0
    %1514 = vmatprep.subr.mxu0 0.0
    %1515 = vmatpush1.xpose.msra.mxu0 0.0
    %1516 = vmatprep.subr.mxu0 0.0
    %1517 = vmatpush1.xpose.msra.mxu0 0.0
    %1518 = vmatprep.subr.mxu0 0.0
    %1519 = vmatpush1.xpose.msra.mxu0 0.0
    %1520 = vmatprep.subr.mxu0 0.0
    %1521 = vmatpush1.xpose.msra.mxu0 0.0
    %1522 = vmatprep.subr.mxu0 0.0
    %1523 = vmatpush1.xpose.msra.mxu0 0.0
    %1524 = vmatprep.subr.mxu0 0.0
    %1525 = vmatpush1.xpose.msra.mxu0 0.0
    %1526 = vmatprep.subr.mxu0 0.0
    %1527 = vmatpush1.xpose.msra.mxu0 0.0
    %1528 = vmatprep.subr.mxu0 0.0
    %1529 = vmatpush1.xpose.msra.mxu0 %v1496
    %1530 = vmatprep.subr.mxu0 0.0
    %1531 = vmatpush2.xpose.msra.mxu0 0.0
    %1532 = vmatprep.subr.mxu0 0.0
    %1533 = vmatpush2.xpose.msra.mxu0 0.0
    %1534 = vmatprep.subr.mxu0 0.0
    %1535 = vmatpush2.xpose.msra.mxu0 0.0
    %1536 = vmatprep.subr.mxu0 0.0
    %1537 = vmatpush2.xpose.msra.mxu0 0.0
    %1538 = vmatprep.subr.mxu0 0.0
    %1539 = vmatpush2.xpose.msra.mxu0 0.0
    %1540 = vmatprep.subr.mxu0 0.0
    %1541 = vmatpush2.xpose.msra.mxu0 0.0
    %1542 = vmatprep.subr.mxu0 0.0
    %1543 = vmatpush2.xpose.msra.mxu0 0.0
    %1544 = vmatprep.subr.mxu0 0.0
    %1545 = vmatpush2.xpose.msra.mxu0 0.0
    %1546 = vmatprep.subr.mxu0 0.0
    %1547 = vmatpush2.xpose.msra.mxu0 0.0
    %1548 = vmatprep.subr.mxu0 0.0
    %1549 = vmatpush2.xpose.msra.mxu0 0.0
    %1550 = vmatprep.subr.mxu0 0.0
    %1551 = vmatpush2.xpose.msra.mxu0 0.0
    %1552 = vmatprep.subr.mxu0 0.0
    %1553 = vmatpush2.xpose.msra.mxu0 0.0
    %1554 = vmatprep.subr.mxu0 0.0
    %1555 = vmatpush2.xpose.msra.mxu0 0.0
    %1556 = vmatprep.subr.mxu0 0.0
    %1557 = vmatpush2.xpose.msra.mxu0 0.0
    %1558 = vmatprep.subr.mxu0 0.0
    %1559 = vmatpush2.xpose.msra.mxu0 0.0
    %1560 = vmatprep.subr.mxu0 0.0
    %1561 = vmatpush2.xpose.msra.mxu0 0.0
    %1562 = vmatprep.mubr.f32.mxu0 0.0
    %1563 = vmatmul.mubr.f32.gmra.mxu0 %v1494
    %v1564 = vpop.f32.mrf.mxu0
    %v1565 = vadd.f32 0.0, %v1564
    %v1566 = vpop.f32.mrf.mxu0
    %1567 = vdwg.mxu0
    %1568 = vrot.lane.b32.xlu0 %v204, 104
    %v1569 = vpop.permute.xlu0 %1568
    %1570 = vrot.lane.b32.xlu0 %v204, 72
    %v1571 = vpop.permute.xlu0 %1570
    %v1572 = vsel %vm214, %v1569, 0
    %v1574 = vsel %vm214, %v1571, 0
    %1576 = vmatprep.subr.mxu0 0.0
    %1577 = vmatpush1.xpose.msra.mxu0 0.0
    %1578 = vmatprep.subr.mxu0 0.0
    %1579 = vmatpush1.xpose.msra.mxu0 0.0
    %1580 = vmatprep.subr.mxu0 0.0
    %1581 = vmatpush1.xpose.msra.mxu0 0.0
    %1582 = vmatprep.subr.mxu0 0.0
    %1583 = vmatpush1.xpose.msra.mxu0 0.0
    %1584 = vmatprep.subr.mxu0 0.0
    %1585 = vmatpush1.xpose.msra.mxu0 0.0
    %1586 = vmatprep.subr.mxu0 0.0
    %1587 = vmatpush1.xpose.msra.mxu0 0.0
    %1588 = vmatprep.subr.mxu0 0.0
    %1589 = vmatpush1.xpose.msra.mxu0 0.0
    %1590 = vmatprep.subr.mxu0 0.0
    %1591 = vmatpush1.xpose.msra.mxu0 0.0
    %1592 = vmatprep.subr.mxu0 0.0
    %1593 = vmatpush1.xpose.msra.mxu0 0.0
    %1594 = vmatprep.subr.mxu0 0.0
    %1595 = vmatpush1.xpose.msra.mxu0 0.0
    %1596 = vmatprep.subr.mxu0 0.0
    %1597 = vmatpush1.xpose.msra.mxu0 0.0
    %1598 = vmatprep.subr.mxu0 0.0
    %1599 = vmatpush1.xpose.msra.mxu0 0.0
    %1600 = vmatprep.subr.mxu0 0.0
    %1601 = vmatpush1.xpose.msra.mxu0 0.0
    %1602 = vmatprep.subr.mxu0 0.0
    %1603 = vmatpush1.xpose.msra.mxu0 0.0
    %1604 = vmatprep.subr.mxu0 0.0
    %1605 = vmatpush1.xpose.msra.mxu0 0.0
    %1606 = vmatprep.subr.mxu0 0.0
    %1607 = vmatpush1.xpose.msra.mxu0 %v1574
    %1608 = vmatprep.subr.mxu0 0.0
    %1609 = vmatpush2.xpose.msra.mxu0 0.0
    %1610 = vmatprep.subr.mxu0 0.0
    %1611 = vmatpush2.xpose.msra.mxu0 0.0
    %1612 = vmatprep.subr.mxu0 0.0
    %1613 = vmatpush2.xpose.msra.mxu0 0.0
    %1614 = vmatprep.subr.mxu0 0.0
    %1615 = vmatpush2.xpose.msra.mxu0 0.0
    %1616 = vmatprep.subr.mxu0 0.0
    %1617 = vmatpush2.xpose.msra.mxu0 0.0
    %1618 = vmatprep.subr.mxu0 0.0
    %1619 = vmatpush2.xpose.msra.mxu0 0.0
    %1620 = vmatprep.subr.mxu0 0.0
    %1621 = vmatpush2.xpose.msra.mxu0 0.0
    %1622 = vmatprep.subr.mxu0 0.0
    %1623 = vmatpush2.xpose.msra.mxu0 0.0
    %1624 = vmatprep.subr.mxu0 0.0
    %1625 = vmatpush2.xpose.msra.mxu0 0.0
    %1626 = vmatprep.subr.mxu0 0.0
    %1627 = vmatpush2.xpose.msra.mxu0 0.0
    %1628 = vmatprep.subr.mxu0 0.0
    %1629 = vmatpush2.xpose.msra.mxu0 0.0
    %1630 = vmatprep.subr.mxu0 0.0
    %1631 = vmatpush2.xpose.msra.mxu0 0.0
    %1632 = vmatprep.subr.mxu0 0.0
    %1633 = vmatpush2.xpose.msra.mxu0 0.0
    %1634 = vmatprep.subr.mxu0 0.0
    %1635 = vmatpush2.xpose.msra.mxu0 0.0
    %1636 = vmatprep.subr.mxu0 0.0
    %1637 = vmatpush2.xpose.msra.mxu0 0.0
    %1638 = vmatprep.subr.mxu0 0.0
    %1639 = vmatpush2.xpose.msra.mxu0 0.0
    %1640 = vmatprep.mubr.f32.mxu0 0.0
    %1641 = vmatmul.mubr.f32.gmra.mxu0 %v1572
    %v1642 = vpop.f32.mrf.mxu0
    %v1643 = vadd.f32 0.0, %v1642
    %v1644 = vpop.f32.mrf.mxu0
    %1645 = vdwg.mxu0
    %v1646 = vmul.f32 %v1565, 0.35355338
    %v1647 = vmul.f32 %v1643, 0.35355338
    %v1648 = vadd.f32 %v1646, %v394
    %v1649 = vadd.f32 %v1647, %v398
    %v1650 = vsel %vm214, %v1648, -inf
    %1651 = vmax.xlane.f32.xlu0 %v1650
    %v1652 = vpop.xlane.xlu0 %1651
    %v1653 = vsel %vm214, %v1649, -inf
    %1654 = vmax.xlane.f32.xlu0 %v1653
    %v1655 = vpop.xlane.xlu0 %1654
    %v1656 = vsub.f32 %v1648, %v1652
    %v1657 = vsub.f32 %v1649, %v1655
    %v1658 = vmul.f32 %v1656, 1.442695
    %v1659 = vpow.pop %v1658
    %v1660 = vmul.f32 %v1657, 1.442695
    %v1661 = vpow.pop %v1660
    %v1662 = vsel %vm214, %v1659, 0.0
    %1663 = vadd.xlane.f32.xlu0 %v1662
    %v1664 = vpop.xlane.xlu0 %1663
    %v1665 = vsel %vm214, %v1661, 0.0
    %1666 = vadd.xlane.f32.xlu0 %v1665
    %v1667 = vpop.xlane.xlu0 %1666
    %v1668 = vrcp.pop %v1664
    %v1669 = vrcp.pop %v1667
    %v1670 = vmul.f32 %v1659, %v1668
    %v1671 = vmul.f32 %v1661, %v1669
    %1672 = vrot.lane.b32.xlu0 %v199, 40
    %v1673 = vpop.permute.xlu0 %1672
    %v1676 = vsel %vm214, %v1670, 0
    %1678 = vmatprep.subr.mxu0 0.0
    %1679 = vmatpush1.msra.mxu0 0.0
    %1680 = vmatprep.subr.mxu0 0.0
    %1681 = vmatpush1.msra.mxu0 0.0
    %1682 = vmatprep.subr.mxu0 0.0
    %1683 = vmatpush1.msra.mxu0 0.0
    %1684 = vmatprep.subr.mxu0 0.0
    %1685 = vmatpush1.msra.mxu0 0.0
    %1686 = vmatprep.subr.mxu0 0.0
    %1687 = vmatpush1.msra.mxu0 0.0
    %1688 = vmatprep.subr.mxu0 0.0
    %1689 = vmatpush1.msra.mxu0 0.0
    %1690 = vmatprep.subr.mxu0 0.0
    %1691 = vmatpush1.msra.mxu0 0.0
    %1692 = vmatprep.subr.mxu0 0.0
    %1693 = vmatpush1.msra.mxu0 0.0
    %1694 = vmatprep.subr.mxu0 0.0
    %1695 = vmatpush1.msra.mxu0 0.0
    %1696 = vmatprep.subr.mxu0 0.0
    %1697 = vmatpush1.msra.mxu0 0.0
    %1698 = vmatprep.subr.mxu0 0.0
    %1699 = vmatpush1.msra.mxu0 0.0
    %1700 = vmatprep.subr.mxu0 0.0
    %1701 = vmatpush1.msra.mxu0 0.0
    %1702 = vmatprep.subr.mxu0 0.0
    %1703 = vmatpush1.msra.mxu0 0.0
    %1704 = vmatprep.subr.mxu0 0.0
    %1705 = vmatpush1.msra.mxu0 0.0
    %1706 = vmatprep.subr.mxu0 0.0
    %1707 = vmatpush1.msra.mxu0 0.0
    %1708 = vmatprep.subr.mxu0 0.0
    %1709 = vmatpush1.msra.mxu0 %v1673
    %1710 = vmatprep.subr.mxu0 0.0
    %1711 = vmatpush2.msra.mxu0 0.0
    %1712 = vmatprep.subr.mxu0 0.0
    %1713 = vmatpush2.msra.mxu0 0.0
    %1714 = vmatprep.subr.mxu0 0.0
    %1715 = vmatpush2.msra.mxu0 0.0
    %1716 = vmatprep.subr.mxu0 0.0
    %1717 = vmatpush2.msra.mxu0 0.0
    %1718 = vmatprep.subr.mxu0 0.0
    %1719 = vmatpush2.msra.mxu0 0.0
    %1720 = vmatprep.subr.mxu0 0.0
    %1721 = vmatpush2.msra.mxu0 0.0
    %1722 = vmatprep.subr.mxu0 0.0
    %1723 = vmatpush2.msra.mxu0 0.0
    %1724 = vmatprep.subr.mxu0 0.0
    %1725 = vmatpush2.msra.mxu0 0.0
    %1726 = vmatprep.subr.mxu0 0.0
    %1727 = vmatpush2.msra.mxu0 0.0
    %1728 = vmatprep.subr.mxu0 0.0
    %1729 = vmatpush2.msra.mxu0 0.0
    %1730 = vmatprep.subr.mxu0 0.0
    %1731 = vmatpush2.msra.mxu0 0.0
    %1732 = vmatprep.subr.mxu0 0.0
    %1733 = vmatpush2.msra.mxu0 0.0
    %1734 = vmatprep.subr.mxu0 0.0
    %1735 = vmatpush2.msra.mxu0 0.0
    %1736 = vmatprep.subr.mxu0 0.0
    %1737 = vmatpush2.msra.mxu0 0.0
    %1738 = vmatprep.subr.mxu0 0.0
    %1739 = vmatpush2.msra.mxu0 0.0
    %1740 = vmatprep.subr.mxu0 0.0
    %1741 = vmatpush2.msra.mxu0 0.0
    %1742 = vmatprep.mubr.f32.mxu0 0.0
    %1743 = vmatmul.mubr.f32.gmra.mxu0 %v1676
    %v1744 = vpop.f32.mrf.mxu0
    %v1745 = vadd.f32 0.0, %v1744
    %v1746 = vpop.f32.mrf.mxu0
    %1747 = vdwg.mxu0
    %1748 = vrot.lane.b32.xlu0 %v204, 40
    %v1749 = vpop.permute.xlu0 %1748
    %v1752 = vsel %vm214, %v1671, 0
    %1754 = vmatprep.subr.mxu0 0.0
    %1755 = vmatpush1.msra.mxu0 0.0
    %1756 = vmatprep.subr.mxu0 0.0
    %1757 = vmatpush1.msra.mxu0 0.0
    %1758 = vmatprep.subr.mxu0 0.0
    %1759 = vmatpush1.msra.mxu0 0.0
    %1760 = vmatprep.subr.mxu0 0.0
    %1761 = vmatpush1.msra.mxu0 0.0
    %1762 = vmatprep.subr.mxu0 0.0
    %1763 = vmatpush1.msra.mxu0 0.0
    %1764 = vmatprep.subr.mxu0 0.0
    %1765 = vmatpush1.msra.mxu0 0.0
    %1766 = vmatprep.subr.mxu0 0.0
    %1767 = vmatpush1.msra.mxu0 0.0
    %1768 = vmatprep.subr.mxu0 0.0
    %1769 = vmatpush1.msra.mxu0 0.0
    %1770 = vmatprep.subr.mxu0 0.0
    %1771 = vmatpush1.msra.mxu0 0.0
    %1772 = vmatprep.subr.mxu0 0.0
    %1773 = vmatpush1.msra.mxu0 0.0
    %1774 = vmatprep.subr.mxu0 0.0
    %1775 = vmatpush1.msra.mxu0 0.0
    %1776 = vmatprep.subr.mxu0 0.0
    %1777 = vmatpush1.msra.mxu0 0.0
    %1778 = vmatprep.subr.mxu0 0.0
    %1779 = vmatpush1.msra.mxu0 0.0
    %1780 = vmatprep.subr.mxu0 0.0
    %1781 = vmatpush1.msra.mxu0 0.0
    %1782 = vmatprep.subr.mxu0 0.0
    %1783 = vmatpush1.msra.mxu0 0.0
    %1784 = vmatprep.subr.mxu0 0.0
    %1785 = vmatpush1.msra.mxu0 %v1749
    %1786 = vmatprep.subr.mxu0 0.0
    %1787 = vmatpush2.msra.mxu0 0.0
    %1788 = vmatprep.subr.mxu0 0.0
    %1789 = vmatpush2.msra.mxu0 0.0
    %1790 = vmatprep.subr.mxu0 0.0
    %1791 = vmatpush2.msra.mxu0 0.0
    %1792 = vmatprep.subr.mxu0 0.0
    %1793 = vmatpush2.msra.mxu0 0.0
    %1794 = vmatprep.subr.mxu0 0.0
    %1795 = vmatpush2.msra.mxu0 0.0
    %1796 = vmatprep.subr.mxu0 0.0
    %1797 = vmatpush2.msra.mxu0 0.0
    %1798 = vmatprep.subr.mxu0 0.0
    %1799 = vmatpush2.msra.mxu0 0.0
    %1800 = vmatprep.subr.mxu0 0.0
    %1801 = vmatpush2.msra.mxu0 0.0
    %1802 = vmatprep.subr.mxu0 0.0
    %1803 = vmatpush2.msra.mxu0 0.0
    %1804 = vmatprep.subr.mxu0 0.0
    %1805 = vmatpush2.msra.mxu0 0.0
    %1806 = vmatprep.subr.mxu0 0.0
    %1807 = vmatpush2.msra.mxu0 0.0
    %1808 = vmatprep.subr.mxu0 0.0
    %1809 = vmatpush2.msra.mxu0 0.0
    %1810 = vmatprep.subr.mxu0 0.0
    %1811 = vmatpush2.msra.mxu0 0.0
    %1812 = vmatprep.subr.mxu0 0.0
    %1813 = vmatpush2.msra.mxu0 0.0
    %1814 = vmatprep.subr.mxu0 0.0
    %1815 = vmatpush2.msra.mxu0 0.0
    %1816 = vmatprep.subr.mxu0 0.0
    %1817 = vmatpush2.msra.mxu0 0.0
    %1818 = vmatprep.mubr.f32.mxu0 0.0
    %1819 = vmatmul.mubr.f32.gmra.mxu0 %v1752
    %v1820 = vpop.f32.mrf.mxu0
    %v1821 = vadd.f32 0.0, %v1820
    %v1822 = vpop.f32.mrf.mxu0
    %1823 = vdwg.mxu0
    %v1825 = vsel %vm214, %v1745, 0
    %v1828 = vsel %vm214, %v1821, 0
    %1830 = vmatprep.subr.mxu0 0.0
    %1831 = vmatpush1.msra.mxu0 0.0
    %1832 = vmatprep.subr.mxu0 0.0
    %1833 = vmatpush1.msra.mxu0 0.0
    %1834 = vmatprep.subr.mxu0 0.0
    %1835 = vmatpush1.msra.mxu0 0.0
    %1836 = vmatprep.subr.mxu0 0.0
    %1837 = vmatpush1.msra.mxu0 0.0
    %1838 = vmatprep.subr.mxu0 0.0
    %1839 = vmatpush1.msra.mxu0 0.0
    %1840 = vmatprep.subr.mxu0 0.0
    %1841 = vmatpush1.msra.mxu0 0.0
    %1842 = vmatprep.subr.mxu0 0.0
    %1843 = vmatpush1.msra.mxu0 0.0
    %1844 = vmatprep.subr.mxu0 0.0
    %1845 = vmatpush1.msra.mxu0 0.0
    %1846 = vmatprep.subr.mxu0 0.0
    %1847 = vmatpush1.msra.mxu0 0.0
    %1848 = vmatprep.subr.mxu0 0.0
    %1849 = vmatpush1.msra.mxu0 0.0
    %1850 = vmatprep.subr.mxu0 0.0
    %1851 = vmatpush1.msra.mxu0 0.0
    %1852 = vmatprep.subr.mxu0 0.0
    %1853 = vmatpush1.msra.mxu0 0.0
    %1854 = vmatprep.subr.mxu0 0.0
    %1855 = vmatpush1.msra.mxu0 0.0
    %1856 = vmatprep.subr.mxu0 0.0
    %1857 = vmatpush1.msra.mxu0 0.0
    %1858 = vmatprep.subr.mxu0 0.0
    %1859 = vmatpush1.msra.mxu0 0.0
    %1860 = vmatprep.subr.mxu0 0.0
    %1861 = vmatpush1.msra.mxu0 %v210
    %1862 = vmatprep.subr.mxu0 0.0
    %1863 = vmatpush2.msra.mxu0 0.0
    %1864 = vmatprep.subr.mxu0 0.0
    %1865 = vmatpush2.msra.mxu0 0.0
    %1866 = vmatprep.subr.mxu0 0.0
    %1867 = vmatpush2.msra.mxu0 0.0
    %1868 = vmatprep.subr.mxu0 0.0
    %1869 = vmatpush2.msra.mxu0 0.0
    %1870 = vmatprep.subr.mxu0 0.0
    %1871 = vmatpush2.msra.mxu0 0.0
    %1872 = vmatprep.subr.mxu0 0.0
    %1873 = vmatpush2.msra.mxu0 0.0
    %1874 = vmatprep.subr.mxu0 0.0
    %1875 = vmatpush2.msra.mxu0 0.0
    %1876 = vmatprep.subr.mxu0 0.0
    %1877 = vmatpush2.msra.mxu0 0.0
    %1878 = vmatprep.subr.mxu0 0.0
    %1879 = vmatpush2.msra.mxu0 0.0
    %1880 = vmatprep.subr.mxu0 0.0
    %1881 = vmatpush2.msra.mxu0 0.0
    %1882 = vmatprep.subr.mxu0 0.0
    %1883 = vmatpush2.msra.mxu0 0.0
    %1884 = vmatprep.subr.mxu0 0.0
    %1885 = vmatpush2.msra.mxu0 0.0
    %1886 = vmatprep.subr.mxu0 0.0
    %1887 = vmatpush2.msra.mxu0 0.0
    %1888 = vmatprep.subr.mxu0 0.0
    %1889 = vmatpush2.msra.mxu0 0.0
    %1890 = vmatprep.subr.mxu0 0.0
    %1891 = vmatpush2.msra.mxu0 0.0
    %1892 = vmatprep.subr.mxu0 0.0
    %1893 = vmatpush2.msra.mxu0 0.0
    %1894 = vmatprep.mubr.f32.mxu0 0.0
    %1895 = vmatmul.mubr.f32.gmra.mxu0 %v1825
    %v1896 = vpop.f32.mrf.mxu0
    %v1897 = vadd.f32 0.0, %v1896
    %v1898 = vpop.f32.mrf.mxu0
    %1899 = vmatprep.mubr.f32.mxu0 0.0
    %1900 = vmatmul.mubr.f32.gmra.mxu0 %v1828
    %v1901 = vpop.f32.mrf.mxu0
    %v1902 = vadd.f32 0.0, %v1901
    %v1903 = vpop.f32.mrf.mxu0
    %1904 = vdwg.mxu0
    %v1905 = vadd.f32 %v1488, %v1897
    %v1906 = vadd.f32 %v1489, %v1902
    %v1907 = vld [vmem:[%s7] sm:$0x1]
    %v1909 = vlaneseq
    %v1910 = vshrl.u32 %v1909, 7
    %v1911 = vsub.s32 0, %v1910
    %v1912 = vrot.slane %v1907, %v1911
    %v1914 = vadd.f32 %v1905, %v1912
    %v1915 = vadd.f32 %v1906, %v1912
    %v1916 = vadd.f32 %v1914, %v112
    %v1917 = vadd.f32 %v1915, %v113
    %v1918 = vld [vmem:[%s8] sm:$0x1]
    %v1919 = vld [vmem:[%s9] sm:$0x1]
    %v1920 = vsel %vm70, %v1916, 0.0
    %1921 = vadd.xlane.f32.xlu0 %v1920
    %v1922 = vpop.xlane.xlu0 %1921
    %v1923 = vsel %vm70, %v1917, 0.0
    %1924 = vadd.xlane.f32.xlu0 %v1923
    %v1925 = vpop.xlane.xlu0 %1924
    %v1926 = vmul.f32 %v1922, %v77
    %v1927 = vmul.f32 %v1925, %v77
    %v1928 = vsub.f32 %v1916, %v1926
    %v1929 = vsub.f32 %v1917, %v1927
    %v1930 = vmul.f32 %v1928, %v1928
    %v1931 = vmul.f32 %v1929, %v1929
    %v1932 = vsel %vm70, %v1930, 0.0
    %1933 = vadd.xlane.f32.xlu0 %v1932
    %v1934 = vpop.xlane.xlu0 %1933
    %v1935 = vsel %vm70, %v1931, 0.0
    %1936 = vadd.xlane.f32.xlu0 %v1935
    %v1937 = vpop.xlane.xlu0 %1936
    %v1938 = vmul.f32 %v1934, %v77
    %v1939 = vmul.f32 %v1937, %v77
    %v1940 = vadd.f32 %v1938, 1e-12
    %v1941 = vadd.f32 %v1939, 1e-12
    %v1942 = vrsqrt.pop %v1940
    %v1943 = vrsqrt.pop %v1941
    %v1944 = vmul.f32 %v1928, %v1942
    %v1945 = vmul.f32 %v1929, %v1943
    %v1947 = vlaneseq
    %v1948 = vshrl.u32 %v1947, 7
    %v1949 = vsub.s32 0, %v1948
    %v1950 = vrot.slane %v1918, %v1949
    %v1952 = vmul.f32 %v1944, %v1950
    %v1953 = vmul.f32 %v1945, %v1950
    %v1955 = vlaneseq
    %v1956 = vshrl.u32 %v1955, 7
    %v1957 = vsub.s32 0, %v1956
    %v1958 = vrot.slane %v1919, %v1957
    %v1960 = vadd.f32 %v1952, %v1958
    %v1961 = vadd.f32 %v1953, %v1958
    %v1962 = vld [vmem:[%s10] sm:$0xff]
    %v1963 = vld [vmem:[%s10 + $0x8] sm:$0xff]
    %v1964 = vld [vmem:[%s10 + $0x10] sm:$0xff]
    %v1965 = vld [vmem:[%s10 + $0x18] sm:$0xff]
    %v1966 = vld [vmem:[%s11] sm:$0x1]
    %v1968 = vlaneseq
    %v1969 = vshrl.u32 %v1968, 7
    %v1970 = vsub.s32 0, %v1969
    %v1971 = vrot.slane %v1966, %v1970
    %v1974 = vsel %vm70, %v1960, 0
    %v1977 = vsel %vm70, %v1961, 0
    %1979 = vmatprep.subr.mxu0 0.0
    %1980 = vmatpush1.msra.mxu0 0.0
    %1981 = vmatprep.subr.mxu0 0.0
    %1982 = vmatpush1.msra.mxu0 0.0
    %1983 = vmatprep.subr.mxu0 0.0
    %1984 = vmatpush1.msra.mxu0 0.0
    %1985 = vmatprep.subr.mxu0 0.0
    %1986 = vmatpush1.msra.mxu0 0.0
    %1987 = vmatprep.subr.mxu0 0.0
    %1988 = vmatpush1.msra.mxu0 0.0
    %1989 = vmatprep.subr.mxu0 0.0
    %1990 = vmatpush1.msra.mxu0 0.0
    %1991 = vmatprep.subr.mxu0 0.0
    %1992 = vmatpush1.msra.mxu0 0.0
    %1993 = vmatprep.subr.mxu0 0.0
    %1994 = vmatpush1.msra.mxu0 0.0
    %1995 = vmatprep.subr.mxu0 0.0
    %1996 = vmatpush1.msra.mxu0 0.0
    %1997 = vmatprep.subr.mxu0 0.0
    %1998 = vmatpush1.msra.mxu0 0.0
    %1999 = vmatprep.subr.mxu0 0.0
    %2000 = vmatpush1.msra.mxu0 0.0
    %2001 = vmatprep.subr.mxu0 0.0
    %2002 = vmatpush1.msra.mxu0 0.0
    %2003 = vmatprep.subr.mxu0 0.0
    %2004 = vmatpush1.msra.mxu0 %v1965
    %2005 = vmatprep.subr.mxu0 0.0
    %2006 = vmatpush1.msra.mxu0 %v1964
    %2007 = vmatprep.subr.mxu0 0.0
    %2008 = vmatpush1.msra.mxu0 %v1963
    %2009 = vmatprep.subr.mxu0 0.0
    %2010 = vmatpush1.msra.mxu0 %v1962
    %2011 = vmatprep.subr.mxu0 0.0
    %2012 = vmatpush2.msra.mxu0 0.0
    %2013 = vmatprep.subr.mxu0 0.0
    %2014 = vmatpush2.msra.mxu0 0.0
    %2015 = vmatprep.subr.mxu0 0.0
    %2016 = vmatpush2.msra.mxu0 0.0
    %2017 = vmatprep.subr.mxu0 0.0
    %2018 = vmatpush2.msra.mxu0 0.0
    %2019 = vmatprep.subr.mxu0 0.0
    %2020 = vmatpush2.msra.mxu0 0.0
    %2021 = vmatprep.subr.mxu0 0.0
    %2022 = vmatpush2.msra.mxu0 0.0
    %2023 = vmatprep.subr.mxu0 0.0
    %2024 = vmatpush2.msra.mxu0 0.0
    %2025 = vmatprep.subr.mxu0 0.0
    %2026 = vmatpush2.msra.mxu0 0.0
    %2027 = vmatprep.subr.mxu0 0.0
    %2028 = vmatpush2.msra.mxu0 0.0
    %2029 = vmatprep.subr.mxu0 0.0
    %2030 = vmatpush2.msra.mxu0 0.0
    %2031 = vmatprep.subr.mxu0 0.0
    %2032 = vmatpush2.msra.mxu0 0.0
    %2033 = vmatprep.subr.mxu0 0.0
    %2034 = vmatpush2.msra.mxu0 0.0
    %2035 = vmatprep.subr.mxu0 0.0
    %2036 = vmatpush2.msra.mxu0 0.0
    %2037 = vmatprep.subr.mxu0 0.0
    %2038 = vmatpush2.msra.mxu0 0.0
    %2039 = vmatprep.subr.mxu0 0.0
    %2040 = vmatpush2.msra.mxu0 0.0
    %2041 = vmatprep.subr.mxu0 0.0
    %2042 = vmatpush2.msra.mxu0 0.0
    %2043 = vmatprep.mubr.f32.mxu0 0.0
    %2044 = vmatmul.mubr.f32.gmra.mxu0 %v1974
    %v2045 = vpop.f32.mrf.mxu0
    %v2046 = vadd.f32 %v1971, %v2045
    %v2047 = vpop.f32.mrf.mxu0
    %2048 = vmatprep.mubr.f32.mxu0 0.0
    %2049 = vmatmul.mubr.f32.gmra.mxu0 %v1977
    %v2050 = vpop.f32.mrf.mxu0
    %v2051 = vadd.f32 %v1971, %v2050
    %v2052 = vpop.f32.mrf.mxu0
    %2053 = vdwg.mxu0
    %v2054 = vmul.f32 %v2046, 0.5
    %v2055 = vmul.f32 %v2051, 0.5
    %v2056 = vmul.f32 %v2046, 0.044715
    %v2057 = vmul.f32 %v2051, 0.044715
    %v2058 = vmul.f32 %v2056, %v2046
    %v2059 = vmul.f32 %v2057, %v2051
    %v2060 = vmul.f32 %v2058, %v2046
    %v2061 = vmul.f32 %v2059, %v2051
    %v2062 = vadd.f32 %v2046, %v2060
    %v2063 = vadd.f32 %v2051, %v2061
    %v2064 = vmul.f32 %v2062, 0.7978846
    %v2065 = vmul.f32 %v2063, 0.7978846
    %v2066 = vtanh.pop %v2064
    %v2067 = vtanh.pop %v2065
    %v2068 = vadd.f32 %v2066, 1.0
    %v2069 = vadd.f32 %v2067, 1.0
    %v2070 = vmul.f32 %v2054, %v2068
    %v2071 = vmul.f32 %v2055, %v2069
    %v2072 = vld [vmem:[%s12] sm:$0xff]
    %v2073 = vld [vmem:[%s12 + $0x8] sm:$0xff]
    %v2074 = vld [vmem:[%s12 + $0x10] sm:$0xff]
    %v2075 = vld [vmem:[%s12 + $0x18] sm:$0xff]
    %v2076 = vld [vmem:[%s12 + $0x20] sm:$0xff]
    %v2077 = vld [vmem:[%s12 + $0x28] sm:$0xff]
    %v2078 = vld [vmem:[%s12 + $0x30] sm:$0xff]
    %v2079 = vld [vmem:[%s12 + $0x38] sm:$0xff]
    %v2080 = vld [vmem:[%s13] sm:$0x1]
    %v2082 = vlaneseq
    %v2083 = vshrl.u32 %v2082, 7
    %v2084 = vsub.s32 0, %v2083
    %v2085 = vrot.slane %v2080, %v2084
    %vm2087 = vcmask 523264
    %v2089 = vsel %vm2087, %v2070, 0
    %v2092 = vsel %vm2087, %v2071, 0
    %2094 = vmatprep.subr.mxu0 0.0
    %2095 = vmatpush1.msra.mxu0 0.0
    %2096 = vmatprep.subr.mxu0 0.0
    %2097 = vmatpush1.msra.mxu0 0.0
    %2098 = vmatprep.subr.mxu0 0.0
    %2099 = vmatpush1.msra.mxu0 0.0
    %2100 = vmatprep.subr.mxu0 0.0
    %2101 = vmatpush1.msra.mxu0 0.0
    %2102 = vmatprep.subr.mxu0 0.0
    %2103 = vmatpush1.msra.mxu0 0.0
    %2104 = vmatprep.subr.mxu0 0.0
    %2105 = vmatpush1.msra.mxu0 0.0
    %2106 = vmatprep.subr.mxu0 0.0
    %2107 = vmatpush1.msra.mxu0 0.0
    %2108 = vmatprep.subr.mxu0 0.0
    %2109 = vmatpush1.msra.mxu0 0.0
    %2110 = vmatprep.subr.mxu0 0.0
    %2111 = vmatpush1.msra.mxu0 %v2079
    %2112 = vmatprep.subr.mxu0 0.0
    %2113 = vmatpush1.msra.mxu0 %v2078
    %2114 = vmatprep.subr.mxu0 0.0
    %2115 = vmatpush1.msra.mxu0 %v2077
    %2116 = vmatprep.subr.mxu0 0.0
    %2117 = vmatpush1.msra.mxu0 %v2076
    %2118 = vmatprep.subr.mxu0 0.0
    %2119 = vmatpush1.msra.mxu0 %v2075
    %2120 = vmatprep.subr.mxu0 0.0
    %2121 = vmatpush1.msra.mxu0 %v2074
    %2122 = vmatprep.subr.mxu0 0.0
    %2123 = vmatpush1.msra.mxu0 %v2073
    %2124 = vmatprep.subr.mxu0 0.0
    %2125 = vmatpush1.msra.mxu0 %v2072
    %2126 = vmatprep.subr.mxu0 0.0
    %2127 = vmatpush2.msra.mxu0 0.0
    %2128 = vmatprep.subr.mxu0 0.0
    %2129 = vmatpush2.msra.mxu0 0.0
    %2130 = vmatprep.subr.mxu0 0.0
    %2131 = vmatpush2.msra.mxu0 0.0
    %2132 = vmatprep.subr.mxu0 0.0
    %2133 = vmatpush2.msra.mxu0 0.0
    %2134 = vmatprep.subr.mxu0 0.0
    %2135 = vmatpush2.msra.mxu0 0.0
    %2136 = vmatprep.subr.mxu0 0.0
    %2137 = vmatpush2.msra.mxu0 0.0
    %2138 = vmatprep.subr.mxu0 0.0
    %2139 = vmatpush2.msra.mxu0 0.0
    %2140 = vmatprep.subr.mxu0 0.0
    %2141 = vmatpush2.msra.mxu0 0.0
    %2142 = vmatprep.subr.mxu0 0.0
    %2143 = vmatpush2.msra.mxu0 0.0
    %2144 = vmatprep.subr.mxu0 0.0
    %2145 = vmatpush2.msra.mxu0 0.0
    %2146 = vmatprep.subr.mxu0 0.0
    %2147 = vmatpush2.msra.mxu0 0.0
    %2148 = vmatprep.subr.mxu0 0.0
    %2149 = vmatpush2.msra.mxu0 0.0
    %2150 = vmatprep.subr.mxu0 0.0
    %2151 = vmatpush2.msra.mxu0 0.0
    %2152 = vmatprep.subr.mxu0 0.0
    %2153 = vmatpush2.msra.mxu0 0.0
    %2154 = vmatprep.subr.mxu0 0.0
    %2155 = vmatpush2.msra.mxu0 0.0
    %2156 = vmatprep.subr.mxu0 0.0
    %2157 = vmatpush2.msra.mxu0 0.0
    %2158 = vmatprep.mubr.f32.mxu0 0.0
    %2159 = vmatmul.mubr.f32.gmra.mxu0 %v2089
    %v2160 = vpop.f32.mrf.mxu0
    %v2161 = vadd.f32 %v2085, %v2160
    %v2162 = vpop.f32.mrf.mxu0
    %2163 = vmatprep.mubr.f32.mxu0 0.0
    %2164 = vmatmul.mubr.f32.gmra.mxu0 %v2092
    %v2165 = vpop.f32.mrf.mxu0
    %v2166 = vadd.f32 %v2085, %v2165
    %v2167 = vpop.f32.mrf.mxu0
    %2168 = vdwg.mxu0
    %v2169 = vadd.f32 %v2161, %v1960
    %v2170 = vadd.f32 %v2166, %v1961
    %v2171 = vld [vmem:[%s14] sm:$0x1]
    %v2172 = vld [vmem:[%s15] sm:$0x1]
    %v2173 = vsel %vm70, %v2169, 0.0
    %2174 = vadd.xlane.f32.xlu0 %v2173
    %v2175 = vpop.xlane.xlu0 %2174
    %v2176 = vsel %vm70, %v2170, 0.0
    %2177 = vadd.xlane.f32.xlu0 %v2176
    %v2178 = vpop.xlane.xlu0 %2177
    %v2179 = vmul.f32 %v2175, %v77
    %v2180 = vmul.f32 %v2178, %v77
    %v2181 = vsub.f32 %v2169, %v2179
    %v2182 = vsub.f32 %v2170, %v2180
    %v2183 = vmul.f32 %v2181, %v2181
    %v2184 = vmul.f32 %v2182, %v2182
    %v2185 = vsel %vm70, %v2183, 0.0
    %2186 = vadd.xlane.f32.xlu0 %v2185
    %v2187 = vpop.xlane.xlu0 %2186
    %v2188 = vsel %vm70, %v2184, 0.0
    %2189 = vadd.xlane.f32.xlu0 %v2188
    %v2190 = vpop.xlane.xlu0 %2189
    %v2191 = vmul.f32 %v2187, %v77
    %v2192 = vmul.f32 %v2190, %v77
    %v2193 = vadd.f32 %v2191, 1e-12
    %v2194 = vadd.f32 %v2192, 1e-12
    %v2195 = vrsqrt.pop %v2193
    %v2196 = vrsqrt.pop %v2194
    %v2197 = vmul.f32 %v2181, %v2195
    %v2198 = vmul.f32 %v2182, %v2196
    %v2200 = vlaneseq
    %v2201 = vshrl.u32 %v2200, 7
    %v2202 = vsub.s32 0, %v2201
    %v2203 = vrot.slane %v2171, %v2202
    %v2205 = vmul.f32 %v2197, %v2203
    %v2206 = vmul.f32 %v2198, %v2203
    %v2208 = vlaneseq
    %v2209 = vshrl.u32 %v2208, 7
    %v2210 = vsub.s32 0, %v2209
    %v2211 = vrot.slane %v2172, %v2210
    %v2213 = vadd.f32 %v2205, %v2211
    %v2214 = vadd.f32 %v2206, %v2211
    %s2215 = scalar_lea.vmem %s4, 32
    %v2216 = vld [vmem:[%s2215] sm:$0xff]
    %v2217 = vld [vmem:[%s2215 + $0x8] sm:$0xff]
    %v2218 = vld [vmem:[%s2215 + $0x10] sm:$0xff]
    %v2219 = vld [vmem:[%s2215 + $0x18] sm:$0xff]
    %s2220 = scalar_lea.vmem %s5, 1
    %v2221 = vld [vmem:[%s2220] sm:$0x1]
    %v2223 = vlaneseq
    %v2224 = vshrl.u32 %v2223, 7
    %v2225 = vsub.s32 0, %v2224
    %v2226 = vrot.slane %v2221, %v2225
    %v2229 = vsel %vm70, %v2213, 0
    %v2232 = vsel %vm70, %v2214, 0
    %2234 = vmatprep.subr.mxu0 0.0
    %2235 = vmatpush1.msra.mxu0 0.0
    %2236 = vmatprep.subr.mxu0 0.0
    %2237 = vmatpush1.msra.mxu0 0.0
    %2238 = vmatprep.subr.mxu0 0.0
    %2239 = vmatpush1.msra.mxu0 0.0
    %2240 = vmatprep.subr.mxu0 0.0
    %2241 = vmatpush1.msra.mxu0 0.0
    %2242 = vmatprep.subr.mxu0 0.0
    %2243 = vmatpush1.msra.mxu0 0.0
    %2244 = vmatprep.subr.mxu0 0.0
    %2245 = vmatpush1.msra.mxu0 0.0
    %2246 = vmatprep.subr.mxu0 0.0
    %2247 = vmatpush1.msra.mxu0 0.0
    %2248 = vmatprep.subr.mxu0 0.0
    %2249 = vmatpush1.msra.mxu0 0.0
    %2250 = vmatprep.subr.mxu0 0.0
    %2251 = vmatpush1.msra.mxu0 0.0
    %2252 = vmatprep.subr.mxu0 0.0
    %2253 = vmatpush1.msra.mxu0 0.0
    %2254 = vmatprep.subr.mxu0 0.0
    %2255 = vmatpush1.msra.mxu0 0.0
    %2256 = vmatprep.subr.mxu0 0.0
    %2257 = vmatpush1.msra.mxu0 0.0
    %2258 = vmatprep.subr.mxu0 0.0
    %2259 = vmatpush1.msra.mxu0 %v2219
    %2260 = vmatprep.subr.mxu0 0.0
    %2261 = vmatpush1.msra.mxu0 %v2218
    %2262 = vmatprep.subr.mxu0 0.0
    %2263 = vmatpush1.msra.mxu0 %v2217
    %2264 = vmatprep.subr.mxu0 0.0
    %2265 = vmatpush1.msra.mxu0 %v2216
    %2266 = vmatprep.subr.mxu0 0.0
    %2267 = vmatpush2.msra.mxu0 0.0
    %2268 = vmatprep.subr.mxu0 0.0
    %2269 = vmatpush2.msra.mxu0 0.0
    %2270 = vmatprep.subr.mxu0 0.0
    %2271 = vmatpush2.msra.mxu0 0.0
    %2272 = vmatprep.subr.mxu0 0.0
    %2273 = vmatpush2.msra.mxu0 0.0
    %2274 = vmatprep.subr.mxu0 0.0
    %2275 = vmatpush2.msra.mxu0 0.0
    %2276 = vmatprep.subr.mxu0 0.0
    %2277 = vmatpush2.msra.mxu0 0.0
    %2278 = vmatprep.subr.mxu0 0.0
    %2279 = vmatpush2.msra.mxu0 0.0
    %2280 = vmatprep.subr.mxu0 0.0
    %2281 = vmatpush2.msra.mxu0 0.0
    %2282 = vmatprep.subr.mxu0 0.0
    %2283 = vmatpush2.msra.mxu0 0.0
    %2284 = vmatprep.subr.mxu0 0.0
    %2285 = vmatpush2.msra.mxu0 0.0
    %2286 = vmatprep.subr.mxu0 0.0
    %2287 = vmatpush2.msra.mxu0 0.0
    %2288 = vmatprep.subr.mxu0 0.0
    %2289 = vmatpush2.msra.mxu0 0.0
    %2290 = vmatprep.subr.mxu0 0.0
    %2291 = vmatpush2.msra.mxu0 0.0
    %2292 = vmatprep.subr.mxu0 0.0
    %2293 = vmatpush2.msra.mxu0 0.0
    %2294 = vmatprep.subr.mxu0 0.0
    %2295 = vmatpush2.msra.mxu0 0.0
    %2296 = vmatprep.subr.mxu0 0.0
    %2297 = vmatpush2.msra.mxu0 0.0
    %2298 = vmatprep.mubr.f32.mxu0 0.0
    %2299 = vmatmul.mubr.f32.gmra.mxu0 %v2229
    %v2300 = vpop.f32.mrf.mxu0
    %v2301 = vadd.f32 %v2226, %v2300
    %v2302 = vpop.f32.mrf.mxu0
    %2303 = vmatprep.mubr.f32.mxu0 0.0
    %2304 = vmatmul.mubr.f32.gmra.mxu0 %v2232
    %v2305 = vpop.f32.mrf.mxu0
    %v2306 = vadd.f32 %v2226, %v2305
    %v2307 = vpop.f32.mrf.mxu0
    %2308 = vdwg.mxu0
    %s2309 = scalar_lea.vmem %s6, 32
    %v2310 = vld [vmem:[%s2309] sm:$0xff]
    %v2311 = vld [vmem:[%s2309 + $0x8] sm:$0xff]
    %v2312 = vld [vmem:[%s2309 + $0x10] sm:$0xff]
    %v2313 = vld [vmem:[%s2309 + $0x18] sm:$0xff]
    %2315 = vrot.lane.b32.xlu0 %v2301, 96
    %v2316 = vpop.permute.xlu0 %2315
    %v2317 = vsel %vm214, %v2301, 0
    %v2319 = vsel %vm214, %v2316, 0
    %2321 = vmatprep.subr.mxu0 0.0
    %2322 = vmatpush1.xpose.msra.mxu0 0.0
    %2323 = vmatprep.subr.mxu0 0.0
    %2324 = vmatpush1.xpose.msra.mxu0 0.0
    %2325 = vmatprep.subr.mxu0 0.0
    %2326 = vmatpush1.xpose.msra.mxu0 0.0
    %2327 = vmatprep.subr.mxu0 0.0
    %2328 = vmatpush1.xpose.msra.mxu0 0.0
    %2329 = vmatprep.subr.mxu0 0.0
    %2330 = vmatpush1.xpose.msra.mxu0 0.0
    %2331 = vmatprep.subr.mxu0 0.0
    %2332 = vmatpush1.xpose.msra.mxu0 0.0
    %2333 = vmatprep.subr.mxu0 0.0
    %2334 = vmatpush1.xpose.msra.mxu0 0.0
    %2335 = vmatprep.subr.mxu0 0.0
    %2336 = vmatpush1.xpose.msra.mxu0 0.0
    %2337 = vmatprep.subr.mxu0 0.0
    %2338 = vmatpush1.xpose.msra.mxu0 0.0
    %2339 = vmatprep.subr.mxu0 0.0
    %2340 = vmatpush1.xpose.msra.mxu0 0.0
    %2341 = vmatprep.subr.mxu0 0.0
    %2342 = vmatpush1.xpose.msra.mxu0 0.0
    %2343 = vmatprep.subr.mxu0 0.0
    %2344 = vmatpush1.xpose.msra.mxu0 0.0
    %2345 = vmatprep.subr.mxu0 0.0
    %2346 = vmatpush1.xpose.msra.mxu0 0.0
    %2347 = vmatprep.subr.mxu0 0.0
    %2348 = vmatpush1.xpose.msra.mxu0 0.0
    %2349 = vmatprep.subr.mxu0 0.0
    %2350 = vmatpush1.xpose.msra.mxu0 0.0
    %2351 = vmatprep.subr.mxu0 0.0
    %2352 = vmatpush1.xpose.msra.mxu0 %v2319
    %2353 = vmatprep.subr.mxu0 0.0
    %2354 = vmatpush2.xpose.msra.mxu0 0.0
    %2355 = vmatprep.subr.mxu0 0.0
    %2356 = vmatpush2.xpose.msra.mxu0 0.0
    %2357 = vmatprep.subr.mxu0 0.0
    %2358 = vmatpush2.xpose.msra.mxu0 0.0
    %2359 = vmatprep.subr.mxu0 0.0
    %2360 = vmatpush2.xpose.msra.mxu0 0.0
    %2361 = vmatprep.subr.mxu0 0.0
    %2362 = vmatpush2.xpose.msra.mxu0 0.0
    %2363 = vmatprep.subr.mxu0 0.0
    %2364 = vmatpush2.xpose.msra.mxu0 0.0
    %2365 = vmatprep.subr.mxu0 0.0
    %2366 = vmatpush2.xpose.msra.mxu0 0.0
    %2367 = vmatprep.subr.mxu0 0.0
    %2368 = vmatpush2.xpose.msra.mxu0 0.0
    %2369 = vmatprep.subr.mxu0 0.0
    %2370 = vmatpush2.xpose.msra.mxu0 0.0
    %2371 = vmatprep.subr.mxu0 0.0
    %2372 = vmatpush2.xpose.msra.mxu0 0.0
    %2373 = vmatprep.subr.mxu0 0.0
    %2374 = vmatpush2.xpose.msra.mxu0 0.0
    %2375 = vmatprep.subr.mxu0 0.0
    %2376 = vmatpush2.xpose.msra.mxu0 0.0
    %2377 = vmatprep.subr.mxu0 0.0
    %2378 = vmatpush2.xpose.msra.mxu0 0.0
    %2379 = vmatprep.subr.mxu0 0.0
    %2380 = vmatpush2.xpose.msra.mxu0 0.0
    %2381 = vmatprep.subr.mxu0 0.0
    %2382 = vmatpush2.xpose.msra.mxu0 0.0
    %2383 = vmatprep.subr.mxu0 0.0
    %2384 = vmatpush2.xpose.msra.mxu0 0.0
    %2385 = vmatprep.mubr.f32.mxu0 0.0
    %2386 = vmatmul.mubr.f32.gmra.mxu0 %v2317
    %v2387 = vpop.f32.mrf.mxu0
    %v2388 = vadd.f32 0.0, %v2387
    %v2389 = vpop.f32.mrf.mxu0
    %2390 = vdwg.mxu0
    %2392 = vrot.lane.b32.xlu0 %v2306, 96
    %v2393 = vpop.permute.xlu0 %2392
    %v2394 = vsel %vm214, %v2306, 0
    %v2396 = vsel %vm214, %v2393, 0
    %2398 = vmatprep.subr.mxu0 0.0
    %2399 = vmatpush1.xpose.msra.mxu0 0.0
    %2400 = vmatprep.subr.mxu0 0.0
    %2401 = vmatpush1.xpose.msra.mxu0 0.0
    %2402 = vmatprep.subr.mxu0 0.0
    %2403 = vmatpush1.xpose.msra.mxu0 0.0
    %2404 = vmatprep.subr.mxu0 0.0
    %2405 = vmatpush1.xpose.msra.mxu0 0.0
    %2406 = vmatprep.subr.mxu0 0.0
    %2407 = vmatpush1.xpose.msra.mxu0 0.0
    %2408 = vmatprep.subr.mxu0 0.0
    %2409 = vmatpush1.xpose.msra.mxu0 0.0
    %2410 = vmatprep.subr.mxu0 0.0
    %2411 = vmatpush1.xpose.msra.mxu0 0.0
    %2412 = vmatprep.subr.mxu0 0.0
    %2413 = vmatpush1.xpose.msra.mxu0 0.0
    %2414 = vmatprep.subr.mxu0 0.0
    %2415 = vmatpush1.xpose.msra.mxu0 0.0
    %2416 = vmatprep.subr.mxu0 0.0
    %2417 = vmatpush1.xpose.msra.mxu0 0.0
    %2418 = vmatprep.subr.mxu0 0.0
    %2419 = vmatpush1.xpose.msra.mxu0 0.0
    %2420 = vmatprep.subr.mxu0 0.0
    %2421 = vmatpush1.xpose.msra.mxu0 0.0
    %2422 = vmatprep.subr.mxu0 0.0
    %2423 = vmatpush1.xpose.msra.mxu0 0.0
    %2424 = vmatprep.subr.mxu0 0.0
    %2425 = vmatpush1.xpose.msra.mxu0 0.0
    %2426 = vmatprep.subr.mxu0 0.0
    %2427 = vmatpush1.xpose.msra.mxu0 0.0
    %2428 = vmatprep.subr.mxu0 0.0
    %2429 = vmatpush1.xpose.msra.mxu0 %v2396
    %2430 = vmatprep.subr.mxu0 0.0
    %2431 = vmatpush2.xpose.msra.mxu0 0.0
    %2432 = vmatprep.subr.mxu0 0.0
    %2433 = vmatpush2.xpose.msra.mxu0 0.0
    %2434 = vmatprep.subr.mxu0 0.0
    %2435 = vmatpush2.xpose.msra.mxu0 0.0
    %2436 = vmatprep.subr.mxu0 0.0
    %2437 = vmatpush2.xpose.msra.mxu0 0.0
    %2438 = vmatprep.subr.mxu0 0.0
    %2439 = vmatpush2.xpose.msra.mxu0 0.0
    %2440 = vmatprep.subr.mxu0 0.0
    %2441 = vmatpush2.xpose.msra.mxu0 0.0
    %2442 = vmatprep.subr.mxu0 0.0
    %2443 = vmatpush2.xpose.msra.mxu0 0.0
    %2444 = vmatprep.subr.mxu0 0.0
    %2445 = vmatpush2.xpose.msra.mxu0 0.0
    %2446 = vmatprep.subr.mxu0 0.0
    %2447 = vmatpush2.xpose.msra.mxu0 0.0
    %2448 = vmatprep.subr.mxu0 0.0
    %2449 = vmatpush2.xpose.msra.mxu0 0.0
    %2450 = vmatprep.subr.mxu0 0.0
    %2451 = vmatpush2.xpose.msra.mxu0 0.0
    %2452 = vmatprep.subr.mxu0 0.0
    %2453 = vmatpush2.xpose.msra.mxu0 0.0
    %2454 = vmatprep.subr.mxu0 0.0
    %2455 = vmatpush2.xpose.msra.mxu0 0.0
    %2456 = vmatprep.subr.mxu0 0.0
    %2457 = vmatpush2.xpose.msra.mxu0 0.0
    %2458 = vmatprep.subr.mxu0 0.0
    %2459 = vmatpush2.xpose.msra.mxu0 0.0
    %2460 = vmatprep.subr.mxu0 0.0
    %2461 = vmatpush2.xpose.msra.mxu0 0.0
    %2462 = vmatprep.mubr.f32.mxu0 0.0
    %2463 = vmatmul.mubr.f32.gmra.mxu0 %v2394
    %v2464 = vpop.f32.mrf.mxu0
    %v2465 = vadd.f32 0.0, %v2464
    %v2466 = vpop.f32.mrf.mxu0
    %2467 = vdwg.mxu0
    %v2468 = vmul.f32 %v2388, 0.35355338
    %v2469 = vmul.f32 %v2465, 0.35355338
    %v2470 = vadd.f32 %v2468, %v394
    %v2471 = vadd.f32 %v2469, %v398
    %v2472 = vsel %vm214, %v2470, -inf
    %2473 = vmax.xlane.f32.xlu0 %v2472
    %v2474 = vpop.xlane.xlu0 %2473
    %v2475 = vsel %vm214, %v2471, -inf
    %2476 = vmax.xlane.f32.xlu0 %v2475
    %v2477 = vpop.xlane.xlu0 %2476
    %v2478 = vsub.f32 %v2470, %v2474
    %v2479 = vsub.f32 %v2471, %v2477
    %v2480 = vmul.f32 %v2478, 1.442695
    %v2481 = vpow.pop %v2480
    %v2482 = vmul.f32 %v2479, 1.442695
    %v2483 = vpow.pop %v2482
    %v2484 = vsel %vm214, %v2481, 0.0
    %2485 = vadd.xlane.f32.xlu0 %v2484
    %v2486 = vpop.xlane.xlu0 %2485
    %v2487 = vsel %vm214, %v2483, 0.0
    %2488 = vadd.xlane.f32.xlu0 %v2487
    %v2489 = vpop.xlane.xlu0 %2488
    %v2490 = vrcp.pop %v2486
    %v2491 = vrcp.pop %v2489
    %v2492 = vmul.f32 %v2481, %v2490
    %v2493 = vmul.f32 %v2483, %v2491
    %2494 = vrot.lane.b32.xlu0 %v2301, 64
    %v2495 = vpop.permute.xlu0 %2494
    %v2498 = vsel %vm214, %v2492, 0
    %2500 = vmatprep.subr.mxu0 0.0
    %2501 = vmatpush1.msra.mxu0 0.0
    %2502 = vmatprep.subr.mxu0 0.0
    %2503 = vmatpush1.msra.mxu0 0.0
    %2504 = vmatprep.subr.mxu0 0.0
    %2505 = vmatpush1.msra.mxu0 0.0
    %2506 = vmatprep.subr.mxu0 0.0
    %2507 = vmatpush1.msra.mxu0 0.0
    %2508 = vmatprep.subr.mxu0 0.0
    %2509 = vmatpush1.msra.mxu0 0.0
    %2510 = vmatprep.subr.mxu0 0.0
    %2511 = vmatpush1.msra.mxu0 0.0
    %2512 = vmatprep.subr.mxu0 0.0
    %2513 = vmatpush1.msra.mxu0 0.0
    %2514 = vmatprep.subr.mxu0 0.0
    %2515 = vmatpush1.msra.mxu0 0.0
    %2516 = vmatprep.subr.mxu0 0.0
    %2517 = vmatpush1.msra.mxu0 0.0
    %2518 = vmatprep.subr.mxu0 0.0
    %2519 = vmatpush1.msra.mxu0 0.0
    %2520 = vmatprep.subr.mxu0 0.0
    %2521 = vmatpush1.msra.mxu0 0.0
    %2522 = vmatprep.subr.mxu0 0.0
    %2523 = vmatpush1.msra.mxu0 0.0
    %2524 = vmatprep.subr.mxu0 0.0
    %2525 = vmatpush1.msra.mxu0 0.0
    %2526 = vmatprep.subr.mxu0 0.0
    %2527 = vmatpush1.msra.mxu0 0.0
    %2528 = vmatprep.subr.mxu0 0.0
    %2529 = vmatpush1.msra.mxu0 0.0
    %2530 = vmatprep.subr.mxu0 0.0
    %2531 = vmatpush1.msra.mxu0 %v2495
    %2532 = vmatprep.subr.mxu0 0.0
    %2533 = vmatpush2.msra.mxu0 0.0
    %2534 = vmatprep.subr.mxu0 0.0
    %2535 = vmatpush2.msra.mxu0 0.0
    %2536 = vmatprep.subr.mxu0 0.0
    %2537 = vmatpush2.msra.mxu0 0.0
    %2538 = vmatprep.subr.mxu0 0.0
    %2539 = vmatpush2.msra.mxu0 0.0
    %2540 = vmatprep.subr.mxu0 0.0
    %2541 = vmatpush2.msra.mxu0 0.0
    %2542 = vmatprep.subr.mxu0 0.0
    %2543 = vmatpush2.msra.mxu0 0.0
    %2544 = vmatprep.subr.mxu0 0.0
    %2545 = vmatpush2.msra.mxu0 0.0
    %2546 = vmatprep.subr.mxu0 0.0
    %2547 = vmatpush2.msra.mxu0 0.0
    %2548 = vmatprep.subr.mxu0 0.0
    %2549 = vmatpush2.msra.mxu0 0.0
    %2550 = vmatprep.subr.mxu0 0.0
    %2551 = vmatpush2.msra.mxu0 0.0
    %2552 = vmatprep.subr.mxu0 0.0
    %2553 = vmatpush2.msra.mxu0 0.0
    %2554 = vmatprep.subr.mxu0 0.0
    %2555 = vmatpush2.msra.mxu0 0.0
    %2556 = vmatprep.subr.mxu0 0.0
    %2557 = vmatpush2.msra.mxu0 0.0
    %2558 = vmatprep.subr.mxu0 0.0
    %2559 = vmatpush2.msra.mxu0 0.0
    %2560 = vmatprep.subr.mxu0 0.0
    %2561 = vmatpush2.msra.mxu0 0.0
    %2562 = vmatprep.subr.mxu0 0.0
    %2563 = vmatpush2.msra.mxu0 0.0
    %2564 = vmatprep.mubr.f32.mxu0 0.0
    %2565 = vmatmul.mubr.f32.gmra.mxu0 %v2498
    %v2566 = vpop.f32.mrf.mxu0
    %v2567 = vadd.f32 0.0, %v2566
    %v2568 = vpop.f32.mrf.mxu0
    %2569 = vdwg.mxu0
    %2570 = vrot.lane.b32.xlu0 %v2306, 64
    %v2571 = vpop.permute.xlu0 %2570
    %v2574 = vsel %vm214, %v2493, 0
    %2576 = vmatprep.subr.mxu0 0.0
    %2577 = vmatpush1.msra.mxu0 0.0
    %2578 = vmatprep.subr.mxu0 0.0
    %2579 = vmatpush1.msra.mxu0 0.0
    %2580 = vmatprep.subr.mxu0 0.0
    %2581 = vmatpush1.msra.mxu0 0.0
    %2582 = vmatprep.subr.mxu0 0.0
    %2583 = vmatpush1.msra.mxu0 0.0
    %2584 = vmatprep.subr.mxu0 0.0
    %2585 = vmatpush1.msra.mxu0 0.0
    %2586 = vmatprep.subr.mxu0 0.0
    %2587 = vmatpush1.msra.mxu0 0.0
    %2588 = vmatprep.subr.mxu0 0.0
    %2589 = vmatpush1.msra.mxu0 0.0
    %2590 = vmatprep.subr.mxu0 0.0
    %2591 = vmatpush1.msra.mxu0 0.0
    %2592 = vmatprep.subr.mxu0 0.0
    %2593 = vmatpush1.msra.mxu0 0.0
    %2594 = vmatprep.subr.mxu0 0.0
    %2595 = vmatpush1.msra.mxu0 0.0
    %2596 = vmatprep.subr.mxu0 0.0
    %2597 = vmatpush1.msra.mxu0 0.0
    %2598 = vmatprep.subr.mxu0 0.0
    %2599 = vmatpush1.msra.mxu0 0.0
    %2600 = vmatprep.subr.mxu0 0.0
    %2601 = vmatpush1.msra.mxu0 0.0
    %2602 = vmatprep.subr.mxu0 0.0
    %2603 = vmatpush1.msra.mxu0 0.0
    %2604 = vmatprep.subr.mxu0 0.0
    %2605 = vmatpush1.msra.mxu0 0.0
    %2606 = vmatprep.subr.mxu0 0.0
    %2607 = vmatpush1.msra.mxu0 %v2571
    %2608 = vmatprep.subr.mxu0 0.0
    %2609 = vmatpush2.msra.mxu0 0.0
    %2610 = vmatprep.subr.mxu0 0.0
    %2611 = vmatpush2.msra.mxu0 0.0
    %2612 = vmatprep.subr.mxu0 0.0
    %2613 = vmatpush2.msra.mxu0 0.0
    %2614 = vmatprep.subr.mxu0 0.0
    %2615 = vmatpush2.msra.mxu0 0.0
    %2616 = vmatprep.subr.mxu0 0.0
    %2617 = vmatpush2.msra.mxu0 0.0
    %2618 = vmatprep.subr.mxu0 0.0
    %2619 = vmatpush2.msra.mxu0 0.0
    %2620 = vmatprep.subr.mxu0 0.0
    %2621 = vmatpush2.msra.mxu0 0.0
    %2622 = vmatprep.subr.mxu0 0.0
    %2623 = vmatpush2.msra.mxu0 0.0
    %2624 = vmatprep.subr.mxu0 0.0
    %2625 = vmatpush2.msra.mxu0 0.0
    %2626 = vmatprep.subr.mxu0 0.0
    %2627 = vmatpush2.msra.mxu0 0.0
    %2628 = vmatprep.subr.mxu0 0.0
    %2629 = vmatpush2.msra.mxu0 0.0
    %2630 = vmatprep.subr.mxu0 0.0
    %2631 = vmatpush2.msra.mxu0 0.0
    %2632 = vmatprep.subr.mxu0 0.0
    %2633 = vmatpush2.msra.mxu0 0.0
    %2634 = vmatprep.subr.mxu0 0.0
    %2635 = vmatpush2.msra.mxu0 0.0
    %2636 = vmatprep.subr.mxu0 0.0
    %2637 = vmatpush2.msra.mxu0 0.0
    %2638 = vmatprep.subr.mxu0 0.0
    %2639 = vmatpush2.msra.mxu0 0.0
    %2640 = vmatprep.mubr.f32.mxu0 0.0
    %2641 = vmatmul.mubr.f32.gmra.mxu0 %v2574
    %v2642 = vpop.f32.mrf.mxu0
    %v2643 = vadd.f32 0.0, %v2642
    %v2644 = vpop.f32.mrf.mxu0
    %2645 = vdwg.mxu0
    %2646 = vrot.lane.b32.xlu0 %v2301, 120
    %v2647 = vpop.permute.xlu0 %2646
    %2648 = vrot.lane.b32.xlu0 %v2301, 88
    %v2649 = vpop.permute.xlu0 %2648
    %v2650 = vsel %vm214, %v2647, 0
    %v2652 = vsel %vm214, %v2649, 0
    %2654 = vmatprep.subr.mxu0 0.0
    %2655 = vmatpush1.xpose.msra.mxu0 0.0
    %2656 = vmatprep.subr.mxu0 0.0
    %2657 = vmatpush1.xpose.msra.mxu0 0.0
    %2658 = vmatprep.subr.mxu0 0.0
    %2659 = vmatpush1.xpose.msra.mxu0 0.0
    %2660 = vmatprep.subr.mxu0 0.0
    %2661 = vmatpush1.xpose.msra.mxu0 0.0
    %2662 = vmatprep.subr.mxu0 0.0
    %2663 = vmatpush1.xpose.msra.mxu0 0.0
    %2664 = vmatprep.subr.mxu0 0.0
    %2665 = vmatpush1.xpose.msra.mxu0 0.0
    %2666 = vmatprep.subr.mxu0 0.0
    %2667 = vmatpush1.xpose.msra.mxu0 0.0
    %2668 = vmatprep.subr.mxu0 0.0
    %2669 = vmatpush1.xpose.msra.mxu0 0.0
    %2670 = vmatprep.subr.mxu0 0.0
    %2671 = vmatpush1.xpose.msra.mxu0 0.0
    %2672 = vmatprep.subr.mxu0 0.0
    %2673 = vmatpush1.xpose.msra.mxu0 0.0
    %2674 = vmatprep.subr.mxu0 0.0
    %2675 = vmatpush1.xpose.msra.mxu0 0.0
    %2676 = vmatprep.subr.mxu0 0.0
    %2677 = vmatpush1.xpose.msra.mxu0 0.0
    %2678 = vmatprep.subr.mxu0 0.0
    %2679 = vmatpush1.xpose.msra.mxu0 0.0
    %2680 = vmatprep.subr.mxu0 0.0
    %2681 = vmatpush1.xpose.msra.mxu0 0.0
    %2682 = vmatprep.subr.mxu0 0.0
    %2683 = vmatpush1.xpose.msra.mxu0 0.0
    %2684 = vmatprep.subr.mxu0 0.0
    %2685 = vmatpush1.xpose.msra.mxu0 %v2652
    %2686 = vmatprep.subr.mxu0 0.0
    %2687 = vmatpush2.xpose.msra.mxu0 0.0
    %2688 = vmatprep.subr.mxu0 0.0
    %2689 = vmatpush2.xpose.msra.mxu0 0.0
    %2690 = vmatprep.subr.mxu0 0.0
    %2691 = vmatpush2.xpose.msra.mxu0 0.0
    %2692 = vmatprep.subr.mxu0 0.0
    %2693 = vmatpush2.xpose.msra.mxu0 0.0
    %2694 = vmatprep.subr.mxu0 0.0
    %2695 = vmatpush2.xpose.msra.mxu0 0.0
    %2696 = vmatprep.subr.mxu0 0.0
    %2697 = vmatpush2.xpose.msra.mxu0 0.0
    %2698 = vmatprep.subr.mxu0 0.0
    %2699 = vmatpush2.xpose.msra.mxu0 0.0
    %2700 = vmatprep.subr.mxu0 0.0
    %2701 = vmatpush2.xpose.msra.mxu0 0.0
    %2702 = vmatprep.subr.mxu0 0.0
    %2703 = vmatpush2.xpose.msra.mxu0 0.0
    %2704 = vmatprep.subr.mxu0 0.0
    %2705 = vmatpush2.xpose.msra.mxu0 0.0
    %2706 = vmatprep.subr.mxu0 0.0
    %2707 = vmatpush2.xpose.msra.mxu0 0.0
    %2708 = vmatprep.subr.mxu0 0.0
    %2709 = vmatpush2.xpose.msra.mxu0 0.0
    %2710 = vmatprep.subr.mxu0 0.0
    %2711 = vmatpush2.xpose.msra.mxu0 0.0
    %2712 = vmatprep.subr.mxu0 0.0
    %2713 = vmatpush2.xpose.msra.mxu0 0.0
    %2714 = vmatprep.subr.mxu0 0.0
    %2715 = vmatpush2.xpose.msra.mxu0 0.0
    %2716 = vmatprep.subr.mxu0 0.0
    %2717 = vmatpush2.xpose.msra.mxu0 0.0
    %2718 = vmatprep.mubr.f32.mxu0 0.0
    %2719 = vmatmul.mubr.f32.gmra.mxu0 %v2650
    %v2720 = vpop.f32.mrf.mxu0
    %v2721 = vadd.f32 0.0, %v2720
    %v2722 = vpop.f32.mrf.mxu0
    %2723 = vdwg.mxu0
    %2724 = vrot.lane.b32.xlu0 %v2306, 120
    %v2725 = vpop.permute.xlu0 %2724
    %2726 = vrot.lane.b32.xlu0 %v2306, 88
    %v2727 = vpop.permute.xlu0 %2726
    %v2728 = vsel %vm214, %v2725, 0
    %v2730 = vsel %vm214, %v2727, 0
    %2732 = vmatprep.subr.mxu0 0.0
    %2733 = vmatpush1.xpose.msra.mxu0 0.0
    %2734 = vmatprep.subr.mxu0 0.0
    %2735 = vmatpush1.xpose.msra.mxu0 0.0
    %2736 = vmatprep.subr.mxu0 0.0
    %2737 = vmatpush1.xpose.msra.mxu0 0.0
    %2738 = vmatprep.subr.mxu0 0.0
    %2739 = vmatpush1.xpose.msra.mxu0 0.0
    %2740 = vmatprep.subr.mxu0 0.0
    %2741 = vmatpush1.xpose.msra.mxu0 0.0
    %2742 = vmatprep.subr.mxu0 0.0
    %2743 = vmatpush1.xpose.msra.mxu0 0.0
    %2744 = vmatprep.subr.mxu0 0.0
    %2745 = vmatpush1.xpose.msra.mxu0 0.0
    %2746 = vmatprep.subr.mxu0 0.0
    %2747 = vmatpush1.xpose.msra.mxu0 0.0
    %2748 = vmatprep.subr.mxu0 0.0
    %2749 = vmatpush1.xpose.msra.mxu0 0.0
    %2750 = vmatprep.subr.mxu0 0.0
    %2751 = vmatpush1.xpose.msra.mxu0 0.0
    %2752 = vmatprep.subr.mxu0 0.0
    %2753 = vmatpush1.xpose.msra.mxu0 0.0
    %2754 = vmatprep.subr.mxu0 0.0
    %2755 = vmatpush1.xpose.msra.mxu0 0.0
    %2756 = vmatprep.subr.mxu0 0.0
    %2757 = vmatpush1.xpose.msra.mxu0 0.0
    %2758 = vmatprep.subr.mxu0 0.0
    %2759 = vmatpush1.xpose.msra.mxu0 0.0
    %2760 = vmatprep.subr.mxu0 0.0
    %2761 = vmatpush1.xpose.msra.mxu0 0.0
    %2762 = vmatprep.subr.mxu0 0.0
    %2763 = vmatpush1.xpose.msra.mxu0 %v2730
    %2764 = vmatprep.subr.mxu0 0.0
    %2765 = vmatpush2.xpose.msra.mxu0 0.0
    %2766 = vmatprep.subr.mxu0 0.0
    %2767 = vmatpush2.xpose.msra.mxu0 0.0
    %2768 = vmatprep.subr.mxu0 0.0
    %2769 = vmatpush2.xpose.msra.mxu0 0.0
    %2770 = vmatprep.subr.mxu0 0.0
    %2771 = vmatpush2.xpose.msra.mxu0 0.0
    %2772 = vmatprep.subr.mxu0 0.0
    %2773 = vmatpush2.xpose.msra.mxu0 0.0
    %2774 = vmatprep.subr.mxu0 0.0
    %2775 = vmatpush2.xpose.msra.mxu0 0.0
    %2776 = vmatprep.subr.mxu0 0.0
    %2777 = vmatpush2.xpose.msra.mxu0 0.0
    %2778 = vmatprep.subr.mxu0 0.0
    %2779 = vmatpush2.xpose.msra.mxu0 0.0
    %2780 = vmatprep.subr.mxu0 0.0
    %2781 = vmatpush2.xpose.msra.mxu0 0.0
    %2782 = vmatprep.subr.mxu0 0.0
    %2783 = vmatpush2.xpose.msra.mxu0 0.0
    %2784 = vmatprep.subr.mxu0 0.0
    %2785 = vmatpush2.xpose.msra.mxu0 0.0
    %2786 = vmatprep.subr.mxu0 0.0
    %2787 = vmatpush2.xpose.msra.mxu0 0.0
    %2788 = vmatprep.subr.mxu0 0.0
    %2789 = vmatpush2.xpose.msra.mxu0 0.0
    %2790 = vmatprep.subr.mxu0 0.0
    %2791 = vmatpush2.xpose.msra.mxu0 0.0
    %2792 = vmatprep.subr.mxu0 0.0
    %2793 = vmatpush2.xpose.msra.mxu0 0.0
    %2794 = vmatprep.subr.mxu0 0.0
    %2795 = vmatpush2.xpose.msra.mxu0 0.0
    %2796 = vmatprep.mubr.f32.mxu0 0.0
    %2797 = vmatmul.mubr.f32.gmra.mxu0 %v2728
    %v2798 = vpop.f32.mrf.mxu0
    %v2799 = vadd.f32 0.0, %v2798
    %v2800 = vpop.f32.mrf.mxu0
    %2801 = vdwg.mxu0
    %v2802 = vmul.f32 %v2721, 0.35355338
    %v2803 = vmul.f32 %v2799, 0.35355338
    %v2804 = vadd.f32 %v2802, %v394
    %v2805 = vadd.f32 %v2803, %v398
    %v2806 = vsel %vm214, %v2804, -inf
    %2807 = vmax.xlane.f32.xlu0 %v2806
    %v2808 = vpop.xlane.xlu0 %2807
    %v2809 = vsel %vm214, %v2805, -inf
    %2810 = vmax.xlane.f32.xlu0 %v2809
    %v2811 = vpop.xlane.xlu0 %2810
    %v2812 = vsub.f32 %v2804, %v2808
    %v2813 = vsub.f32 %v2805, %v2811
    %v2814 = vmul.f32 %v2812, 1.442695
    %v2815 = vpow.pop %v2814
    %v2816 = vmul.f32 %v2813, 1.442695
    %v2817 = vpow.pop %v2816
    %v2818 = vsel %vm214, %v2815, 0.0
    %2819 = vadd.xlane.f32.xlu0 %v2818
    %v2820 = vpop.xlane.xlu0 %2819
    %v2821 = vsel %vm214, %v2817, 0.0
    %2822 = vadd.xlane.f32.xlu0 %v2821
    %v2823 = vpop.xlane.xlu0 %2822
    %v2824 = vrcp.pop %v2820
    %v2825 = vrcp.pop %v2823
    %v2826 = vmul.f32 %v2815, %v2824
    %v2827 = vmul.f32 %v2817, %v2825
    %2828 = vrot.lane.b32.xlu0 %v2301, 56
    %v2829 = vpop.permute.xlu0 %2828
    %v2832 = vsel %vm214, %v2826, 0
    %2834 = vmatprep.subr.mxu0 0.0
    %2835 = vmatpush1.msra.mxu0 0.0
    %2836 = vmatprep.subr.mxu0 0.0
    %2837 = vmatpush1.msra.mxu0 0.0
    %2838 = vmatprep.subr.mxu0 0.0
    %2839 = vmatpush1.msra.mxu0 0.0
    %2840 = vmatprep.subr.mxu0 0.0
    %2841 = vmatpush1.msra.mxu0 0.0
    %2842 = vmatprep.subr.mxu0 0.0
    %2843 = vmatpush1.msra.mxu0 0.0
    %2844 = vmatprep.subr.mxu0 0.0
    %2845 = vmatpush1.msra.mxu0 0.0
    %2846 = vmatprep.subr.mxu0 0.0
    %2847 = vmatpush1.msra.mxu0 0.0
    %2848 = vmatprep.subr.mxu0 0.0
    %2849 = vmatpush1.msra.mxu0 0.0
    %2850 = vmatprep.subr.mxu0 0.0
    %2851 = vmatpush1.msra.mxu0 0.0
    %2852 = vmatprep.subr.mxu0 0.0
    %2853 = vmatpush1.msra.mxu0 0.0
    %2854 = vmatprep.subr.mxu0 0.0
    %2855 = vmatpush1.msra.mxu0 0.0
    %2856 = vmatprep.subr.mxu0 0.0
    %2857 = vmatpush1.msra.mxu0 0.0
    %2858 = vmatprep.subr.mxu0 0.0
    %2859 = vmatpush1.msra.mxu0 0.0
    %2860 = vmatprep.subr.mxu0 0.0
    %2861 = vmatpush1.msra.mxu0 0.0
    %2862 = vmatprep.subr.mxu0 0.0
    %2863 = vmatpush1.msra.mxu0 0.0
    %2864 = vmatprep.subr.mxu0 0.0
    %2865 = vmatpush1.msra.mxu0 %v2829
    %2866 = vmatprep.subr.mxu0 0.0
    %2867 = vmatpush2.msra.mxu0 0.0
    %2868 = vmatprep.subr.mxu0 0.0
    %2869 = vmatpush2.msra.mxu0 0.0
    %2870 = vmatprep.subr.mxu0 0.0
    %2871 = vmatpush2.msra.mxu0 0.0
    %2872 = vmatprep.subr.mxu0 0.0
    %2873 = vmatpush2.msra.mxu0 0.0
    %2874 = vmatprep.subr.mxu0 0.0
    %2875 = vmatpush2.msra.mxu0 0.0
    %2876 = vmatprep.subr.mxu0 0.0
    %2877 = vmatpush2.msra.mxu0 0.0
    %2878 = vmatprep.subr.mxu0 0.0
    %2879 = vmatpush2.msra.mxu0 0.0
    %2880 = vmatprep.subr.mxu0 0.0
    %2881 = vmatpush2.msra.mxu0 0.0
    %2882 = vmatprep.subr.mxu0 0.0
    %2883 = vmatpush2.msra.mxu0 0.0
    %2884 = vmatprep.subr.mxu0 0.0
    %2885 = vmatpush2.msra.mxu0 0.0
    %2886 = vmatprep.subr.mxu0 0.0
    %2887 = vmatpush2.msra.mxu0 0.0
    %2888 = vmatprep.subr.mxu0 0.0
    %2889 = vmatpush2.msra.mxu0 0.0
    %2890 = vmatprep.subr.mxu0 0.0
    %2891 = vmatpush2.msra.mxu0 0.0
    %2892 = vmatprep.subr.mxu0 0.0
    %2893 = vmatpush2.msra.mxu0 0.0
    %2894 = vmatprep.subr.mxu0 0.0
    %2895 = vmatpush2.msra.mxu0 0.0
    %2896 = vmatprep.subr.mxu0 0.0
    %2897 = vmatpush2.msra.mxu0 0.0
    %2898 = vmatprep.mubr.f32.mxu0 0.0
    %2899 = vmatmul.mubr.f32.gmra.mxu0 %v2832
    %v2900 = vpop.f32.mrf.mxu0
    %v2901 = vadd.f32 0.0, %v2900
    %v2902 = vpop.f32.mrf.mxu0
    %2903 = vdwg.mxu0
    %2904 = vrot.lane.b32.xlu0 %v2306, 56
    %v2905 = vpop.permute.xlu0 %2904
    %v2908 = vsel %vm214, %v2827, 0
    %2910 = vmatprep.subr.mxu0 0.0
    %2911 = vmatpush1.msra.mxu0 0.0
    %2912 = vmatprep.subr.mxu0 0.0
    %2913 = vmatpush1.msra.mxu0 0.0
    %2914 = vmatprep.subr.mxu0 0.0
    %2915 = vmatpush1.msra.mxu0 0.0
    %2916 = vmatprep.subr.mxu0 0.0
    %2917 = vmatpush1.msra.mxu0 0.0
    %2918 = vmatprep.subr.mxu0 0.0
    %2919 = vmatpush1.msra.mxu0 0.0
    %2920 = vmatprep.subr.mxu0 0.0
    %2921 = vmatpush1.msra.mxu0 0.0
    %2922 = vmatprep.subr.mxu0 0.0
    %2923 = vmatpush1.msra.mxu0 0.0
    %2924 = vmatprep.subr.mxu0 0.0
    %2925 = vmatpush1.msra.mxu0 0.0
    %2926 = vmatprep.subr.mxu0 0.0
    %2927 = vmatpush1.msra.mxu0 0.0
    %2928 = vmatprep.subr.mxu0 0.0
    %2929 = vmatpush1.msra.mxu0 0.0
    %2930 = vmatprep.subr.mxu0 0.0
    %2931 = vmatpush1.msra.mxu0 0.0
    %2932 = vmatprep.subr.mxu0 0.0
    %2933 = vmatpush1.msra.mxu0 0.0
    %2934 = vmatprep.subr.mxu0 0.0
    %2935 = vmatpush1.msra.mxu0 0.0
    %2936 = vmatprep.subr.mxu0 0.0
    %2937 = vmatpush1.msra.mxu0 0.0
    %2938 = vmatprep.subr.mxu0 0.0
    %2939 = vmatpush1.msra.mxu0 0.0
    %2940 = vmatprep.subr.mxu0 0.0
    %2941 = vmatpush1.msra.mxu0 %v2905
    %2942 = vmatprep.subr.mxu0 0.0
    %2943 = vmatpush2.msra.mxu0 0.0
    %2944 = vmatprep.subr.mxu0 0.0
    %2945 = vmatpush2.msra.mxu0 0.0
    %2946 = vmatprep.subr.mxu0 0.0
    %2947 = vmatpush2.msra.mxu0 0.0
    %2948 = vmatprep.subr.mxu0 0.0
    %2949 = vmatpush2.msra.mxu0 0.0
    %2950 = vmatprep.subr.mxu0 0.0
    %2951 = vmatpush2.msra.mxu0 0.0
    %2952 = vmatprep.subr.mxu0 0.0
    %2953 = vmatpush2.msra.mxu0 0.0
    %2954 = vmatprep.subr.mxu0 0.0
    %2955 = vmatpush2.msra.mxu0 0.0
    %2956 = vmatprep.subr.mxu0 0.0
    %2957 = vmatpush2.msra.mxu0 0.0
    %2958 = vmatprep.subr.mxu0 0.0
    %2959 = vmatpush2.msra.mxu0 0.0
    %2960 = vmatprep.subr.mxu0 0.0
    %2961 = vmatpush2.msra.mxu0 0.0
    %2962 = vmatprep.subr.mxu0 0.0
    %2963 = vmatpush2.msra.mxu0 0.0
    %2964 = vmatprep.subr.mxu0 0.0
    %2965 = vmatpush2.msra.mxu0 0.0
    %2966 = vmatprep.subr.mxu0 0.0
    %2967 = vmatpush2.msra.mxu0 0.0
    %2968 = vmatprep.subr.mxu0 0.0
    %2969 = vmatpush2.msra.mxu0 0.0
    %2970 = vmatprep.subr.mxu0 0.0
    %2971 = vmatpush2.msra.mxu0 0.0
    %2972 = vmatprep.subr.mxu0 0.0
    %2973 = vmatpush2.msra.mxu0 0.0
    %2974 = vmatprep.mubr.f32.mxu0 0.0
    %2975 = vmatmul.mubr.f32.gmra.mxu0 %v2908
    %v2976 = vpop.f32.mrf.mxu0
    %v2977 = vadd.f32 0.0, %v2976
    %v2978 = vpop.f32.mrf.mxu0
    %2979 = vdwg.mxu0
    %v2981 = vsel %vm214, %v2901, 0
    %v2984 = vsel %vm214, %v2977, 0
    %2986 = vmatprep.subr.mxu0 0.0
    %2987 = vmatpush1.msra.mxu0 0.0
    %2988 = vmatprep.subr.mxu0 0.0
    %2989 = vmatpush1.msra.mxu0 0.0
    %2990 = vmatprep.subr.mxu0 0.0
    %2991 = vmatpush1.msra.mxu0 0.0
    %2992 = vmatprep.subr.mxu0 0.0
    %2993 = vmatpush1.msra.mxu0 0.0
    %2994 = vmatprep.subr.mxu0 0.0
    %2995 = vmatpush1.msra.mxu0 0.0
    %2996 = vmatprep.subr.mxu0 0.0
    %2997 = vmatpush1.msra.mxu0 0.0
    %2998 = vmatprep.subr.mxu0 0.0
    %2999 = vmatpush1.msra.mxu0 0.0
    %3000 = vmatprep.subr.mxu0 0.0
    %3001 = vmatpush1.msra.mxu0 0.0
    %3002 = vmatprep.subr.mxu0 0.0
    %3003 = vmatpush1.msra.mxu0 0.0
    %3004 = vmatprep.subr.mxu0 0.0
    %3005 = vmatpush1.msra.mxu0 0.0
    %3006 = vmatprep.subr.mxu0 0.0
    %3007 = vmatpush1.msra.mxu0 0.0
    %3008 = vmatprep.subr.mxu0 0.0
    %3009 = vmatpush1.msra.mxu0 0.0
    %3010 = vmatprep.subr.mxu0 0.0
    %3011 = vmatpush1.msra.mxu0 0.0
    %3012 = vmatprep.subr.mxu0 0.0
    %3013 = vmatpush1.msra.mxu0 0.0
    %3014 = vmatprep.subr.mxu0 0.0
    %3015 = vmatpush1.msra.mxu0 0.0
    %3016 = vmatprep.subr.mxu0 0.0
    %3017 = vmatpush1.msra.mxu0 %v2311
    %3018 = vmatprep.subr.mxu0 0.0
    %3019 = vmatpush2.msra.mxu0 0.0
    %3020 = vmatprep.subr.mxu0 0.0
    %3021 = vmatpush2.msra.mxu0 0.0
    %3022 = vmatprep.subr.mxu0 0.0
    %3023 = vmatpush2.msra.mxu0 0.0
    %3024 = vmatprep.subr.mxu0 0.0
    %3025 = vmatpush2.msra.mxu0 0.0
    %3026 = vmatprep.subr.mxu0 0.0
    %3027 = vmatpush2.msra.mxu0 0.0
    %3028 = vmatprep.subr.mxu0 0.0
    %3029 = vmatpush2.msra.mxu0 0.0
    %3030 = vmatprep.subr.mxu0 0.0
    %3031 = vmatpush2.msra.mxu0 0.0
    %3032 = vmatprep.subr.mxu0 0.0
    %3033 = vmatpush2.msra.mxu0 0.0
    %3034 = vmatprep.subr.mxu0 0.0
    %3035 = vmatpush2.msra.mxu0 0.0
    %3036 = vmatprep.subr.mxu0 0.0
    %3037 = vmatpush2.msra.mxu0 0.0
    %3038 = vmatprep.subr.mxu0 0.0
    %3039 = vmatpush2.msra.mxu0 0.0
    %3040 = vmatprep.subr.mxu0 0.0
    %3041 = vmatpush2.msra.mxu0 0.0
    %3042 = vmatprep.subr.mxu0 0.0
    %3043 = vmatpush2.msra.mxu0 0.0
    %3044 = vmatprep.subr.mxu0 0.0
    %3045 = vmatpush2.msra.mxu0 0.0
    %3046 = vmatprep.subr.mxu0 0.0
    %3047 = vmatpush2.msra.mxu0 0.0
    %3048 = vmatprep.subr.mxu0 0.0
    %3049 = vmatpush2.msra.mxu0 0.0
    %3050 = vmatprep.mubr.f32.mxu0 0.0
    %3051 = vmatmul.mubr.f32.gmra.mxu0 %v2981
    %v3052 = vpop.f32.mrf.mxu0
    %v3053 = vadd.f32 0.0, %v3052
    %v3054 = vpop.f32.mrf.mxu0
    %3055 = vmatprep.mubr.f32.mxu0 0.0
    %3056 = vmatmul.mubr.f32.gmra.mxu0 %v2984
    %v3057 = vpop.f32.mrf.mxu0
    %v3058 = vadd.f32 0.0, %v3057
    %v3059 = vpop.f32.mrf.mxu0
    %3060 = vdwg.mxu0
    %v3062 = vsel %vm214, %v2567, 0
    %v3065 = vsel %vm214, %v2643, 0
    %3067 = vmatprep.subr.mxu0 0.0
    %3068 = vmatpush1.msra.mxu0 0.0
    %3069 = vmatprep.subr.mxu0 0.0
    %3070 = vmatpush1.msra.mxu0 0.0
    %3071 = vmatprep.subr.mxu0 0.0
    %3072 = vmatpush1.msra.mxu0 0.0
    %3073 = vmatprep.subr.mxu0 0.0
    %3074 = vmatpush1.msra.mxu0 0.0
    %3075 = vmatprep.subr.mxu0 0.0
    %3076 = vmatpush1.msra.mxu0 0.0
    %3077 = vmatprep.subr.mxu0 0.0
    %3078 = vmatpush1.msra.mxu0 0.0
    %3079 = vmatprep.subr.mxu0 0.0
    %3080 = vmatpush1.msra.mxu0 0.0
    %3081 = vmatprep.subr.mxu0 0.0
    %3082 = vmatpush1.msra.mxu0 0.0
    %3083 = vmatprep.subr.mxu0 0.0
    %3084 = vmatpush1.msra.mxu0 0.0
    %3085 = vmatprep.subr.mxu0 0.0
    %3086 = vmatpush1.msra.mxu0 0.0
    %3087 = vmatprep.subr.mxu0 0.0
    %3088 = vmatpush1.msra.mxu0 0.0
    %3089 = vmatprep.subr.mxu0 0.0
    %3090 = vmatpush1.msra.mxu0 0.0
    %3091 = vmatprep.subr.mxu0 0.0
    %3092 = vmatpush1.msra.mxu0 0.0
    %3093 = vmatprep.subr.mxu0 0.0
    %3094 = vmatpush1.msra.mxu0 0.0
    %3095 = vmatprep.subr.mxu0 0.0
    %3096 = vmatpush1.msra.mxu0 0.0
    %3097 = vmatprep.subr.mxu0 0.0
    %3098 = vmatpush1.msra.mxu0 %v2310
    %3099 = vmatprep.subr.mxu0 0.0
    %3100 = vmatpush2.msra.mxu0 0.0
    %3101 = vmatprep.subr.mxu0 0.0
    %3102 = vmatpush2.msra.mxu0 0.0
    %3103 = vmatprep.subr.mxu0 0.0
    %3104 = vmatpush2.msra.mxu0 0.0
    %3105 = vmatprep.subr.mxu0 0.0
    %3106 = vmatpush2.msra.mxu0 0.0
    %3107 = vmatprep.subr.mxu0 0.0
    %3108 = vmatpush2.msra.mxu0 0.0
    %3109 = vmatprep.subr.mxu0 0.0
    %3110 = vmatpush2.msra.mxu0 0.0
    %3111 = vmatprep.subr.mxu0 0.0
    %3112 = vmatpush2.msra.mxu0 0.0
    %3113 = vmatprep.subr.mxu0 0.0
    %3114 = vmatpush2.msra.mxu0 0.0
    %3115 = vmatprep.subr.mxu0 0.0
    %3116 = vmatpush2.msra.mxu0 0.0
    %3117 = vmatprep.subr.mxu0 0.0
    %3118 = vmatpush2.msra.mxu0 0.0
    %3119 = vmatprep.subr.mxu0 0.0
    %3120 = vmatpush2.msra.mxu0 0.0
    %3121 = vmatprep.subr.mxu0 0.0
    %3122 = vmatpush2.msra.mxu0 0.0
    %3123 = vmatprep.subr.mxu0 0.0
    %3124 = vmatpush2.msra.mxu0 0.0
    %3125 = vmatprep.subr.mxu0 0.0
    %3126 = vmatpush2.msra.mxu0 0.0
    %3127 = vmatprep.subr.mxu0 0.0
    %3128 = vmatpush2.msra.mxu0 0.0
    %3129 = vmatprep.subr.mxu0 0.0
    %3130 = vmatpush2.msra.mxu0 0.0
    %3131 = vmatprep.mubr.f32.mxu0 0.0
    %3132 = vmatmul.mubr.f32.gmra.mxu0 %v3062
    %v3133 = vpop.f32.mrf.mxu0
    %v3134 = vadd.f32 %v3053, %v3133
    %v3135 = vpop.f32.mrf.mxu0
    %3136 = vmatprep.mubr.f32.mxu0 0.0
    %3137 = vmatmul.mubr.f32.gmra.mxu0 %v3065
    %v3138 = vpop.f32.mrf.mxu0
    %v3139 = vadd.f32 %v3058, %v3138
    %v3140 = vpop.f32.mrf.mxu0
    %3141 = vdwg.mxu0
    %3142 = vrot.lane.b32.xlu0 %v2301, 112
    %v3143 = vpop.permute.xlu0 %3142
    %3144 = vrot.lane.b32.xlu0 %v2301, 80
    %v3145 = vpop.permute.xlu0 %3144
    %v3146 = vsel %vm214, %v3143, 0
    %v3148 = vsel %vm214, %v3145, 0
    %3150 = vmatprep.subr.mxu0 0.0
    %3151 = vmatpush1.xpose.msra.mxu0 0.0
    %3152 = vmatprep.subr.mxu0 0.0
    %3153 = vmatpush1.xpose.msra.mxu0 0.0
    %3154 = vmatprep.subr.mxu0 0.0
    %3155 = vmatpush1.xpose.msra.mxu0 0.0
    %3156 = vmatprep.subr.mxu0 0.0
    %3157 = vmatpush1.xpose.msra.mxu0 0.0
    %3158 = vmatprep.subr.mxu0 0.0
    %3159 = vmatpush1.xpose.msra.mxu0 0.0
    %3160 = vmatprep.subr.mxu0 0.0
    %3161 = vmatpush1.xpose.msra.mxu0 0.0
    %3162 = vmatprep.subr.mxu0 0.0
    %3163 = vmatpush1.xpose.msra.mxu0 0.0
    %3164 = vmatprep.subr.mxu0 0.0
    %3165 = vmatpush1.xpose.msra.mxu0 0.0
    %3166 = vmatprep.subr.mxu0 0.0
    %3167 = vmatpush1.xpose.msra.mxu0 0.0
    %3168 = vmatprep.subr.mxu0 0.0
    %3169 = vmatpush1.xpose.msra.mxu0 0.0
    %3170 = vmatprep.subr.mxu0 0.0
    %3171 = vmatpush1.xpose.msra.mxu0 0.0
    %3172 = vmatprep.subr.mxu0 0.0
    %3173 = vmatpush1.xpose.msra.mxu0 0.0
    %3174 = vmatprep.subr.mxu0 0.0
    %3175 = vmatpush1.xpose.msra.mxu0 0.0
    %3176 = vmatprep.subr.mxu0 0.0
    %3177 = vmatpush1.xpose.msra.mxu0 0.0
    %3178 = vmatprep.subr.mxu0 0.0
    %3179 = vmatpush1.xpose.msra.mxu0 0.0
    %3180 = vmatprep.subr.mxu0 0.0
    %3181 = vmatpush1.xpose.msra.mxu0 %v3148
    %3182 = vmatprep.subr.mxu0 0.0
    %3183 = vmatpush2.xpose.msra.mxu0 0.0
    %3184 = vmatprep.subr.mxu0 0.0
    %3185 = vmatpush2.xpose.msra.mxu0 0.0
    %3186 = vmatprep.subr.mxu0 0.0
    %3187 = vmatpush2.xpose.msra.mxu0 0.0
    %3188 = vmatprep.subr.mxu0 0.0
    %3189 = vmatpush2.xpose.msra.mxu0 0.0
    %3190 = vmatprep.subr.mxu0 0.0
    %3191 = vmatpush2.xpose.msra.mxu0 0.0
    %3192 = vmatprep.subr.mxu0 0.0
    %3193 = vmatpush2.xpose.msra.mxu0 0.0
    %3194 = vmatprep.subr.mxu0 0.0
    %3195 = vmatpush2.xpose.msra.mxu0 0.0
    %3196 = vmatprep.subr.mxu0 0.0
    %3197 = vmatpush2.xpose.msra.mxu0 0.0
    %3198 = vmatprep.subr.mxu0 0.0
    %3199 = vmatpush2.xpose.msra.mxu0 0.0
    %3200 = vmatprep.subr.mxu0 0.0
    %3201 = vmatpush2.xpose.msra.mxu0 0.0
    %3202 = vmatprep.subr.mxu0 0.0
    %3203 = vmatpush2.xpose.msra.mxu0 0.0
    %3204 = vmatprep.subr.mxu0 0.0
    %3205 = vmatpush2.xpose.msra.mxu0 0.0
    %3206 = vmatprep.subr.mxu0 0.0
    %3207 = vmatpush2.xpose.msra.mxu0 0.0
    %3208 = vmatprep.subr.mxu0 0.0
    %3209 = vmatpush2.xpose.msra.mxu0 0.0
    %3210 = vmatprep.subr.mxu0 0.0
    %3211 = vmatpush2.xpose.msra.mxu0 0.0
    %3212 = vmatprep.subr.mxu0 0.0
    %3213 = vmatpush2.xpose.msra.mxu0 0.0
    %3214 = vmatprep.mubr.f32.mxu0 0.0
    %3215 = vmatmul.mubr.f32.gmra.mxu0 %v3146
    %v3216 = vpop.f32.mrf.mxu0
    %v3217 = vadd.f32 0.0, %v3216
    %v3218 = vpop.f32.mrf.mxu0
    %3219 = vdwg.mxu0
    %3220 = vrot.lane.b32.xlu0 %v2306, 112
    %v3221 = vpop.permute.xlu0 %3220
    %3222 = vrot.lane.b32.xlu0 %v2306, 80
    %v3223 = vpop.permute.xlu0 %3222
    %v3224 = vsel %vm214, %v3221, 0
    %v3226 = vsel %vm214, %v3223, 0
    %3228 = vmatprep.subr.mxu0 0.0
    %3229 = vmatpush1.xpose.msra.mxu0 0.0
    %3230 = vmatprep.subr.mxu0 0.0
    %3231 = vmatpush1.xpose.msra.mxu0 0.0
    %3232 = vmatprep.subr.mxu0 0.0
    %3233 = vmatpush1.xpose.msra.mxu0 0.0
    %3234 = vmatprep.subr.mxu0 0.0
    %3235 = vmatpush1.xpose.msra.mxu0 0.0
    %3236 = vmatprep.subr.mxu0 0.0
    %3237 = vmatpush1.xpose.msra.mxu0 0.0
    %3238 = vmatprep.subr.mxu0 0.0
    %3239 = vmatpush1.xpose.msra.mxu0 0.0
    %3240 = vmatprep.subr.mxu0 0.0
    %3241 = vmatpush1.xpose.msra.mxu0 0.0
    %3242 = vmatprep.subr.mxu0 0.0
    %3243 = vmatpush1.xpose.msra.mxu0 0.0
    %3244 = vmatprep.subr.mxu0 0.0
    %3245 = vmatpush1.xpose.msra.mxu0 0.0
    %3246 = vmatprep.subr.mxu0 0.0
    %3247 = vmatpush1.xpose.msra.mxu0 0.0
    %3248 = vmatprep.subr.mxu0 0.0
    %3249 = vmatpush1.xpose.msra.mxu0 0.0
    %3250 = vmatprep.subr.mxu0 0.0
    %3251 = vmatpush1.xpose.msra.mxu0 0.0
    %3252 = vmatprep.subr.mxu0 0.0
    %3253 = vmatpush1.xpose.msra.mxu0 0.0
    %3254 = vmatprep.subr.mxu0 0.0
    %3255 = vmatpush1.xpose.msra.mxu0 0.0
    %3256 = vmatprep.subr.mxu0 0.0
    %3257 = vmatpush1.xpose.msra.mxu0 0.0
    %3258 = vmatprep.subr.mxu0 0.0
    %3259 = vmatpush1.xpose.msra.mxu0 %v3226
    %3260 = vmatprep.subr.mxu0 0.0
    %3261 = vmatpush2.xpose.msra.mxu0 0.0
    %3262 = vmatprep.subr.mxu0 0.0
    %3263 = vmatpush2.xpose.msra.mxu0 0.0
    %3264 = vmatprep.subr.mxu0 0.0
    %3265 = vmatpush2.xpose.msra.mxu0 0.0
    %3266 = vmatprep.subr.mxu0 0.0
    %3267 = vmatpush2.xpose.msra.mxu0 0.0
    %3268 = vmatprep.subr.mxu0 0.0
    %3269 = vmatpush2.xpose.msra.mxu0 0.0
    %3270 = vmatprep.subr.mxu0 0.0
    %3271 = vmatpush2.xpose.msra.mxu0 0.0
    %3272 = vmatprep.subr.mxu0 0.0
    %3273 = vmatpush2.xpose.msra.mxu0 0.0
    %3274 = vmatprep.subr.mxu0 0.0
    %3275 = vmatpush2.xpose.msra.mxu0 0.0
    %3276 = vmatprep.subr.mxu0 0.0
    %3277 = vmatpush2.xpose.msra.mxu0 0.0
    %3278 = vmatprep.subr.mxu0 0.0
    %3279 = vmatpush2.xpose.msra.mxu0 0.0
    %3280 = vmatprep.subr.mxu0 0.0
    %3281 = vmatpush2.xpose.msra.mxu0 0.0
    %3282 = vmatprep.subr.mxu0 0.0
    %3283 = vmatpush2.xpose.msra.mxu0 0.0
    %3284 = vmatprep.subr.mxu0 0.0
    %3285 = vmatpush2.xpose.msra.mxu0 0.0
    %3286 = vmatprep.subr.mxu0 0.0
    %3287 = vmatpush2.xpose.msra.mxu0 0.0
    %3288 = vmatprep.subr.mxu0 0.0
    %3289 = vmatpush2.xpose.msra.mxu0 0.0
    %3290 = vmatprep.subr.mxu0 0.0
    %3291 = vmatpush2.xpose.msra.mxu0 0.0
    %3292 = vmatprep.mubr.f32.mxu0 0.0
    %3293 = vmatmul.mubr.f32.gmra.mxu0 %v3224
    %v3294 = vpop.f32.mrf.mxu0
    %v3295 = vadd.f32 0.0, %v3294
    %v3296 = vpop.f32.mrf.mxu0
    %3297 = vdwg.mxu0
    %v3298 = vmul.f32 %v3217, 0.35355338
    %v3299 = vmul.f32 %v3295, 0.35355338
    %v3300 = vadd.f32 %v3298, %v394
    %v3301 = vadd.f32 %v3299, %v398
    %v3302 = vsel %vm214, %v3300, -inf
    %3303 = vmax.xlane.f32.xlu0 %v3302
    %v3304 = vpop.xlane.xlu0 %3303
    %v3305 = vsel %vm214, %v3301, -inf
    %3306 = vmax.xlane.f32.xlu0 %v3305
    %v3307 = vpop.xlane.xlu0 %3306
    %v3308 = vsub.f32 %v3300, %v3304
    %v3309 = vsub.f32 %v3301, %v3307
    %v3310 = vmul.f32 %v3308, 1.442695
    %v3311 = vpow.pop %v3310
    %v3312 = vmul.f32 %v3309, 1.442695
    %v3313 = vpow.pop %v3312
    %v3314 = vsel %vm214, %v3311, 0.0
    %3315 = vadd.xlane.f32.xlu0 %v3314
    %v3316 = vpop.xlane.xlu0 %3315
    %v3317 = vsel %vm214, %v3313, 0.0
    %3318 = vadd.xlane.f32.xlu0 %v3317
    %v3319 = vpop.xlane.xlu0 %3318
    %v3320 = vrcp.pop %v3316
    %v3321 = vrcp.pop %v3319
    %v3322 = vmul.f32 %v3311, %v3320
    %v3323 = vmul.f32 %v3313, %v3321
    %3324 = vrot.lane.b32.xlu0 %v2301, 48
    %v3325 = vpop.permute.xlu0 %3324
    %v3328 = vsel %vm214, %v3322, 0
    %3330 = vmatprep.subr.mxu0 0.0
    %3331 = vmatpush1.msra.mxu0 0.0
    %3332 = vmatprep.subr.mxu0 0.0
    %3333 = vmatpush1.msra.mxu0 0.0
    %3334 = vmatprep.subr.mxu0 0.0
    %3335 = vmatpush1.msra.mxu0 0.0
    %3336 = vmatprep.subr.mxu0 0.0
    %3337 = vmatpush1.msra.mxu0 0.0
    %3338 = vmatprep.subr.mxu0 0.0
    %3339 = vmatpush1.msra.mxu0 0.0
    %3340 = vmatprep.subr.mxu0 0.0
    %3341 = vmatpush1.msra.mxu0 0.0
    %3342 = vmatprep.subr.mxu0 0.0
    %3343 = vmatpush1.msra.mxu0 0.0
    %3344 = vmatprep.subr.mxu0 0.0
    %3345 = vmatpush1.msra.mxu0 0.0
    %3346 = vmatprep.subr.mxu0 0.0
    %3347 = vmatpush1.msra.mxu0 0.0
    %3348 = vmatprep.subr.mxu0 0.0
    %3349 = vmatpush1.msra.mxu0 0.0
    %3350 = vmatprep.subr.mxu0 0.0
    %3351 = vmatpush1.msra.mxu0 0.0
    %3352 = vmatprep.subr.mxu0 0.0
    %3353 = vmatpush1.msra.mxu0 0.0
    %3354 = vmatprep.subr.mxu0 0.0
    %3355 = vmatpush1.msra.mxu0 0.0
    %3356 = vmatprep.subr.mxu0 0.0
    %3357 = vmatpush1.msra.mxu0 0.0
    %3358 = vmatprep.subr.mxu0 0.0
    %3359 = vmatpush1.msra.mxu0 0.0
    %3360 = vmatprep.subr.mxu0 0.0
    %3361 = vmatpush1.msra.mxu0 %v3325
    %3362 = vmatprep.subr.mxu0 0.0
    %3363 = vmatpush2.msra.mxu0 0.0
    %3364 = vmatprep.subr.mxu0 0.0
    %3365 = vmatpush2.msra.mxu0 0.0
    %3366 = vmatprep.subr.mxu0 0.0
    %3367 = vmatpush2.msra.mxu0 0.0
    %3368 = vmatprep.subr.mxu0 0.0
    %3369 = vmatpush2.msra.mxu0 0.0
    %3370 = vmatprep.subr.mxu0 0.0
    %3371 = vmatpush2.msra.mxu0 0.0
    %3372 = vmatprep.subr.mxu0 0.0
    %3373 = vmatpush2.msra.mxu0 0.0
    %3374 = vmatprep.subr.mxu0 0.0
    %3375 = vmatpush2.msra.mxu0 0.0
    %3376 = vmatprep.subr.mxu0 0.0
    %3377 = vmatpush2.msra.mxu0 0.0
    %3378 = vmatprep.subr.mxu0 0.0
    %3379 = vmatpush2.msra.mxu0 0.0
    %3380 = vmatprep.subr.mxu0 0.0
    %3381 = vmatpush2.msra.mxu0 0.0
    %3382 = vmatprep.subr.mxu0 0.0
    %3383 = vmatpush2.msra.mxu0 0.0
    %3384 = vmatprep.subr.mxu0 0.0
    %3385 = vmatpush2.msra.mxu0 0.0
    %3386 = vmatprep.subr.mxu0 0.0
    %3387 = vmatpush2.msra.mxu0 0.0
    %3388 = vmatprep.subr.mxu0 0.0
    %3389 = vmatpush2.msra.mxu0 0.0
    %3390 = vmatprep.subr.mxu0 0.0
    %3391 = vmatpush2.msra.mxu0 0.0
    %3392 = vmatprep.subr.mxu0 0.0
    %3393 = vmatpush2.msra.mxu0 0.0
    %3394 = vmatprep.mubr.f32.mxu0 0.0
    %3395 = vmatmul.mubr.f32.gmra.mxu0 %v3328
    %v3396 = vpop.f32.mrf.mxu0
    %v3397 = vadd.f32 0.0, %v3396
    %v3398 = vpop.f32.mrf.mxu0
    %3399 = vdwg.mxu0
    %3400 = vrot.lane.b32.xlu0 %v2306, 48
    %v3401 = vpop.permute.xlu0 %3400
    %v3404 = vsel %vm214, %v3323, 0
    %3406 = vmatprep.subr.mxu0 0.0
    %3407 = vmatpush1.msra.mxu0 0.0
    %3408 = vmatprep.subr.mxu0 0.0
    %3409 = vmatpush1.msra.mxu0 0.0
    %3410 = vmatprep.subr.mxu0 0.0
    %3411 = vmatpush1.msra.mxu0 0.0
    %3412 = vmatprep.subr.mxu0 0.0
    %3413 = vmatpush1.msra.mxu0 0.0
    %3414 = vmatprep.subr.mxu0 0.0
    %3415 = vmatpush1.msra.mxu0 0.0
    %3416 = vmatprep.subr.mxu0 0.0
    %3417 = vmatpush1.msra.mxu0 0.0
    %3418 = vmatprep.subr.mxu0 0.0
    %3419 = vmatpush1.msra.mxu0 0.0
    %3420 = vmatprep.subr.mxu0 0.0
    %3421 = vmatpush1.msra.mxu0 0.0
    %3422 = vmatprep.subr.mxu0 0.0
    %3423 = vmatpush1.msra.mxu0 0.0
    %3424 = vmatprep.subr.mxu0 0.0
    %3425 = vmatpush1.msra.mxu0 0.0
    %3426 = vmatprep.subr.mxu0 0.0
    %3427 = vmatpush1.msra.mxu0 0.0
    %3428 = vmatprep.subr.mxu0 0.0
    %3429 = vmatpush1.msra.mxu0 0.0
    %3430 = vmatprep.subr.mxu0 0.0
    %3431 = vmatpush1.msra.mxu0 0.0
    %3432 = vmatprep.subr.mxu0 0.0
    %3433 = vmatpush1.msra.mxu0 0.0
    %3434 = vmatprep.subr.mxu0 0.0
    %3435 = vmatpush1.msra.mxu0 0.0
    %3436 = vmatprep.subr.mxu0 0.0
    %3437 = vmatpush1.msra.mxu0 %v3401
    %3438 = vmatprep.subr.mxu0 0.0
    %3439 = vmatpush2.msra.mxu0 0.0
    %3440 = vmatprep.subr.mxu0 0.0
    %3441 = vmatpush2.msra.mxu0 0.0
    %3442 = vmatprep.subr.mxu0 0.0
    %3443 = vmatpush2.msra.mxu0 0.0
    %3444 = vmatprep.subr.mxu0 0.0
    %3445 = vmatpush2.msra.mxu0 0.0
    %3446 = vmatprep.subr.mxu0 0.0
    %3447 = vmatpush2.msra.mxu0 0.0
    %3448 = vmatprep.subr.mxu0 0.0
    %3449 = vmatpush2.msra.mxu0 0.0
    %3450 = vmatprep.subr.mxu0 0.0
    %3451 = vmatpush2.msra.mxu0 0.0
    %3452 = vmatprep.subr.mxu0 0.0
    %3453 = vmatpush2.msra.mxu0 0.0
    %3454 = vmatprep.subr.mxu0 0.0
    %3455 = vmatpush2.msra.mxu0 0.0
    %3456 = vmatprep.subr.mxu0 0.0
    %3457 = vmatpush2.msra.mxu0 0.0
    %3458 = vmatprep.subr.mxu0 0.0
    %3459 = vmatpush2.msra.mxu0 0.0
    %3460 = vmatprep.subr.mxu0 0.0
    %3461 = vmatpush2.msra.mxu0 0.0
    %3462 = vmatprep.subr.mxu0 0.0
    %3463 = vmatpush2.msra.mxu0 0.0
    %3464 = vmatprep.subr.mxu0 0.0
    %3465 = vmatpush2.msra.mxu0 0.0
    %3466 = vmatprep.subr.mxu0 0.0
    %3467 = vmatpush2.msra.mxu0 0.0
    %3468 = vmatprep.subr.mxu0 0.0
    %3469 = vmatpush2.msra.mxu0 0.0
    %3470 = vmatprep.mubr.f32.mxu0 0.0
    %3471 = vmatmul.mubr.f32.gmra.mxu0 %v3404
    %v3472 = vpop.f32.mrf.mxu0
    %v3473 = vadd.f32 0.0, %v3472
    %v3474 = vpop.f32.mrf.mxu0
    %3475 = vdwg.mxu0
    %v3477 = vsel %vm214, %v3397, 0
    %v3480 = vsel %vm214, %v3473, 0
    %3482 = vmatprep.subr.mxu0 0.0
    %3483 = vmatpush1.msra.mxu0 0.0
    %3484 = vmatprep.subr.mxu0 0.0
    %3485 = vmatpush1.msra.mxu0 0.0
    %3486 = vmatprep.subr.mxu0 0.0
    %3487 = vmatpush1.msra.mxu0 0.0
    %3488 = vmatprep.subr.mxu0 0.0
    %3489 = vmatpush1.msra.mxu0 0.0
    %3490 = vmatprep.subr.mxu0 0.0
    %3491 = vmatpush1.msra.mxu0 0.0
    %3492 = vmatprep.subr.mxu0 0.0
    %3493 = vmatpush1.msra.mxu0 0.0
    %3494 = vmatprep.subr.mxu0 0.0
    %3495 = vmatpush1.msra.mxu0 0.0
    %3496 = vmatprep.subr.mxu0 0.0
    %3497 = vmatpush1.msra.mxu0 0.0
    %3498 = vmatprep.subr.mxu0 0.0
    %3499 = vmatpush1.msra.mxu0 0.0
    %3500 = vmatprep.subr.mxu0 0.0
    %3501 = vmatpush1.msra.mxu0 0.0
    %3502 = vmatprep.subr.mxu0 0.0
    %3503 = vmatpush1.msra.mxu0 0.0
    %3504 = vmatprep.subr.mxu0 0.0
    %3505 = vmatpush1.msra.mxu0 0.0
    %3506 = vmatprep.subr.mxu0 0.0
    %3507 = vmatpush1.msra.mxu0 0.0
    %3508 = vmatprep.subr.mxu0 0.0
    %3509 = vmatpush1.msra.mxu0 0.0
    %3510 = vmatprep.subr.mxu0 0.0
    %3511 = vmatpush1.msra.mxu0 0.0
    %3512 = vmatprep.subr.mxu0 0.0
    %3513 = vmatpush1.msra.mxu0 %v2312
    %3514 = vmatprep.subr.mxu0 0.0
    %3515 = vmatpush2.msra.mxu0 0.0
    %3516 = vmatprep.subr.mxu0 0.0
    %3517 = vmatpush2.msra.mxu0 0.0
    %3518 = vmatprep.subr.mxu0 0.0
    %3519 = vmatpush2.msra.mxu0 0.0
    %3520 = vmatprep.subr.mxu0 0.0
    %3521 = vmatpush2.msra.mxu0 0.0
    %3522 = vmatprep.subr.mxu0 0.0
    %3523 = vmatpush2.msra.mxu0 0.0
    %3524 = vmatprep.subr.mxu0 0.0
    %3525 = vmatpush2.msra.mxu0 0.0
    %3526 = vmatprep.subr.mxu0 0.0
    %3527 = vmatpush2.msra.mxu0 0.0
    %3528 = vmatprep.subr.mxu0 0.0
    %3529 = vmatpush2.msra.mxu0 0.0
    %3530 = vmatprep.subr.mxu0 0.0
    %3531 = vmatpush2.msra.mxu0 0.0
    %3532 = vmatprep.subr.mxu0 0.0
    %3533 = vmatpush2.msra.mxu0 0.0
    %3534 = vmatprep.subr.mxu0 0.0
    %3535 = vmatpush2.msra.mxu0 0.0
    %3536 = vmatprep.subr.mxu0 0.0
    %3537 = vmatpush2.msra.mxu0 0.0
    %3538 = vmatprep.subr.mxu0 0.0
    %3539 = vmatpush2.msra.mxu0 0.0
    %3540 = vmatprep.subr.mxu0 0.0
    %3541 = vmatpush2.msra.mxu0 0.0
    %3542 = vmatprep.subr.mxu0 0.0
    %3543 = vmatpush2.msra.mxu0 0.0
    %3544 = vmatprep.subr.mxu0 0.0
    %3545 = vmatpush2.msra.mxu0 0.0
    %3546 = vmatprep.mubr.f32.mxu0 0.0
    %3547 = vmatmul.mubr.f32.gmra.mxu0 %v3477
    %v3548 = vpop.f32.mrf.mxu0
    %v3549 = vadd.f32 0.0, %v3548
    %v3550 = vpop.f32.mrf.mxu0
    %3551 = vmatprep.mubr.f32.mxu0 0.0
    %3552 = vmatmul.mubr.f32.gmra.mxu0 %v3480
    %v3553 = vpop.f32.mrf.mxu0
    %v3554 = vadd.f32 0.0, %v3553
    %v3555 = vpop.f32.mrf.mxu0
    %3556 = vdwg.mxu0
    %v3557 = vadd.f32 %v3134, %v3549
    %v3558 = vadd.f32 %v3139, %v3554
    %3559 = vrot.lane.b32.xlu0 %v2301, 104
    %v3560 = vpop.permute.xlu0 %3559
    %3561 = vrot.lane.b32.xlu0 %v2301, 72
    %v3562 = vpop.permute.xlu0 %3561
    %v3563 = vsel %vm214, %v3560, 0
    %v3565 = vsel %vm214, %v3562, 0
    %3567 = vmatprep.subr.mxu0 0.0
    %3568 = vmatpush1.xpose.msra.mxu0 0.0
    %3569 = vmatprep.subr.mxu0 0.0
    %3570 = vmatpush1.xpose.msra.mxu0 0.0
    %3571 = vmatprep.subr.mxu0 0.0
    %3572 = vmatpush1.xpose.msra.mxu0 0.0
    %3573 = vmatprep.subr.mxu0 0.0
    %3574 = vmatpush1.xpose.msra.mxu0 0.0
    %3575 = vmatprep.subr.mxu0 0.0
    %3576 = vmatpush1.xpose.msra.mxu0 0.0
    %3577 = vmatprep.subr.mxu0 0.0
    %3578 = vmatpush1.xpose.msra.mxu0 0.0
    %3579 = vmatprep.subr.mxu0 0.0
    %3580 = vmatpush1.xpose.msra.mxu0 0.0
    %3581 = vmatprep.subr.mxu0 0.0
    %3582 = vmatpush1.xpose.msra.mxu0 0.0
    %3583 = vmatprep.subr.mxu0 0.0
    %3584 = vmatpush1.xpose.msra.mxu0 0.0
    %3585 = vmatprep.subr.mxu0 0.0
    %3586 = vmatpush1.xpose.msra.mxu0 0.0
    %3587 = vmatprep.subr.mxu0 0.0
    %3588 = vmatpush1.xpose.msra.mxu0 0.0
    %3589 = vmatprep.subr.mxu0 0.0
    %3590 = vmatpush1.xpose.msra.mxu0 0.0
    %3591 = vmatprep.subr.mxu0 0.0
    %3592 = vmatpush1.xpose.msra.mxu0 0.0
    %3593 = vmatprep.subr.mxu0 0.0
    %3594 = vmatpush1.xpose.msra.mxu0 0.0
    %3595 = vmatprep.subr.mxu0 0.0
    %3596 = vmatpush1.xpose.msra.mxu0 0.0
    %3597 = vmatprep.subr.mxu0 0.0
    %3598 = vmatpush1.xpose.msra.mxu0 %v3565
    %3599 = vmatprep.subr.mxu0 0.0
    %3600 = vmatpush2.xpose.msra.mxu0 0.0
    %3601 = vmatprep.subr.mxu0 0.0
    %3602 = vmatpush2.xpose.msra.mxu0 0.0
    %3603 = vmatprep.subr.mxu0 0.0
    %3604 = vmatpush2.xpose.msra.mxu0 0.0
    %3605 = vmatprep.subr.mxu0 0.0
    %3606 = vmatpush2.xpose.msra.mxu0 0.0
    %3607 = vmatprep.subr.mxu0 0.0
    %3608 = vmatpush2.xpose.msra.mxu0 0.0
    %3609 = vmatprep.subr.mxu0 0.0
    %3610 = vmatpush2.xpose.msra.mxu0 0.0
    %3611 = vmatprep.subr.mxu0 0.0
    %3612 = vmatpush2.xpose.msra.mxu0 0.0
    %3613 = vmatprep.subr.mxu0 0.0
    %3614 = vmatpush2.xpose.msra.mxu0 0.0
    %3615 = vmatprep.subr.mxu0 0.0
    %3616 = vmatpush2.xpose.msra.mxu0 0.0
    %3617 = vmatprep.subr.mxu0 0.0
    %3618 = vmatpush2.xpose.msra.mxu0 0.0
    %3619 = vmatprep.subr.mxu0 0.0
    %3620 = vmatpush2.xpose.msra.mxu0 0.0
    %3621 = vmatprep.subr.mxu0 0.0
    %3622 = vmatpush2.xpose.msra.mxu0 0.0
    %3623 = vmatprep.subr.mxu0 0.0
    %3624 = vmatpush2.xpose.msra.mxu0 0.0
    %3625 = vmatprep.subr.mxu0 0.0
    %3626 = vmatpush2.xpose.msra.mxu0 0.0
    %3627 = vmatprep.subr.mxu0 0.0
    %3628 = vmatpush2.xpose.msra.mxu0 0.0
    %3629 = vmatprep.subr.mxu0 0.0
    %3630 = vmatpush2.xpose.msra.mxu0 0.0
    %3631 = vmatprep.mubr.f32.mxu0 0.0
    %3632 = vmatmul.mubr.f32.gmra.mxu0 %v3563
    %v3633 = vpop.f32.mrf.mxu0
    %v3634 = vadd.f32 0.0, %v3633
    %v3635 = vpop.f32.mrf.mxu0
    %3636 = vdwg.mxu0
    %3637 = vrot.lane.b32.xlu0 %v2306, 104
    %v3638 = vpop.permute.xlu0 %3637
    %3639 = vrot.lane.b32.xlu0 %v2306, 72
    %v3640 = vpop.permute.xlu0 %3639
    %v3641 = vsel %vm214, %v3638, 0
    %v3643 = vsel %vm214, %v3640, 0
    %3645 = vmatprep.subr.mxu0 0.0
    %3646 = vmatpush1.xpose.msra.mxu0 0.0
    %3647 = vmatprep.subr.mxu0 0.0
    %3648 = vmatpush1.xpose.msra.mxu0 0.0
    %3649 = vmatprep.subr.mxu0 0.0
    %3650 = vmatpush1.xpose.msra.mxu0 0.0
    %3651 = vmatprep.subr.mxu0 0.0
    %3652 = vmatpush1.xpose.msra.mxu0 0.0
    %3653 = vmatprep.subr.mxu0 0.0
    %3654 = vmatpush1.xpose.msra.mxu0 0.0
    %3655 = vmatprep.subr.mxu0 0.0
    %3656 = vmatpush1.xpose.msra.mxu0 0.0
    %3657 = vmatprep.subr.mxu0 0.0
    %3658 = vmatpush1.xpose.msra.mxu0 0.0
    %3659 = vmatprep.subr.mxu0 0.0
    %3660 = vmatpush1.xpose.msra.mxu0 0.0
    %3661 = vmatprep.subr.mxu0 0.0
    %3662 = vmatpush1.xpose.msra.mxu0 0.0
    %3663 = vmatprep.subr.mxu0 0.0
    %3664 = vmatpush1.xpose.msra.mxu0 0.0
    %3665 = vmatprep.subr.mxu0 0.0
    %3666 = vmatpush1.xpose.msra.mxu0 0.0
    %3667 = vmatprep.subr.mxu0 0.0
    %3668 = vmatpush1.xpose.msra.mxu0 0.0
    %3669 = vmatprep.subr.mxu0 0.0
    %3670 = vmatpush1.xpose.msra.mxu0 0.0
    %3671 = vmatprep.subr.mxu0 0.0
    %3672 = vmatpush1.xpose.msra.mxu0 0.0
    %3673 = vmatprep.subr.mxu0 0.0
    %3674 = vmatpush1.xpose.msra.mxu0 0.0
    %3675 = vmatprep.subr.mxu0 0.0
    %3676 = vmatpush1.xpose.msra.mxu0 %v3643
    %3677 = vmatprep.subr.mxu0 0.0
    %3678 = vmatpush2.xpose.msra.mxu0 0.0
    %3679 = vmatprep.subr.mxu0 0.0
    %3680 = vmatpush2.xpose.msra.mxu0 0.0
    %3681 = vmatprep.subr.mxu0 0.0
    %3682 = vmatpush2.xpose.msra.mxu0 0.0
    %3683 = vmatprep.subr.mxu0 0.0
    %3684 = vmatpush2.xpose.msra.mxu0 0.0
    %3685 = vmatprep.subr.mxu0 0.0
    %3686 = vmatpush2.xpose.msra.mxu0 0.0
    %3687 = vmatprep.subr.mxu0 0.0
    %3688 = vmatpush2.xpose.msra.mxu0 0.0
    %3689 = vmatprep.subr.mxu0 0.0
    %3690 = vmatpush2.xpose.msra.mxu0 0.0
    %3691 = vmatprep.subr.mxu0 0.0
    %3692 = vmatpush2.xpose.msra.mxu0 0.0
    %3693 = vmatprep.subr.mxu0 0.0
    %3694 = vmatpush2.xpose.msra.mxu0 0.0
    %3695 = vmatprep.subr.mxu0 0.0
    %3696 = vmatpush2.xpose.msra.mxu0 0.0
    %3697 = vmatprep.subr.mxu0 0.0
    %3698 = vmatpush2.xpose.msra.mxu0 0.0
    %3699 = vmatprep.subr.mxu0 0.0
    %3700 = vmatpush2.xpose.msra.mxu0 0.0
    %3701 = vmatprep.subr.mxu0 0.0
    %3702 = vmatpush2.xpose.msra.mxu0 0.0
    %3703 = vmatprep.subr.mxu0 0.0
    %3704 = vmatpush2.xpose.msra.mxu0 0.0
    %3705 = vmatprep.subr.mxu0 0.0
    %3706 = vmatpush2.xpose.msra.mxu0 0.0
    %3707 = vmatprep.subr.mxu0 0.0
    %3708 = vmatpush2.xpose.msra.mxu0 0.0
    %3709 = vmatprep.mubr.f32.mxu0 0.0
    %3710 = vmatmul.mubr.f32.gmra.mxu0 %v3641
    %v3711 = vpop.f32.mrf.mxu0
    %v3712 = vadd.f32 0.0, %v3711
    %v3713 = vpop.f32.mrf.mxu0
    %3714 = vdwg.mxu0
    %v3715 = vmul.f32 %v3634, 0.35355338
    %v3716 = vmul.f32 %v3712, 0.35355338
    %v3717 = vadd.f32 %v3715, %v394
    %v3718 = vadd.f32 %v3716, %v398
    %v3719 = vsel %vm214, %v3717, -inf
    %3720 = vmax.xlane.f32.xlu0 %v3719
    %v3721 = vpop.xlane.xlu0 %3720
    %v3722 = vsel %vm214, %v3718, -inf
    %3723 = vmax.xlane.f32.xlu0 %v3722
    %v3724 = vpop.xlane.xlu0 %3723
    %v3725 = vsub.f32 %v3717, %v3721
    %v3726 = vsub.f32 %v3718, %v3724
    %v3727 = vmul.f32 %v3725, 1.442695
    %v3728 = vpow.pop %v3727
    %v3729 = vmul.f32 %v3726, 1.442695
    %v3730 = vpow.pop %v3729
    %v3731 = vsel %vm214, %v3728, 0.0
    %3732 = vadd.xlane.f32.xlu0 %v3731
    %v3733 = vpop.xlane.xlu0 %3732
    %v3734 = vsel %vm214, %v3730, 0.0
    %3735 = vadd.xlane.f32.xlu0 %v3734
    %v3736 = vpop.xlane.xlu0 %3735
    %v3737 = vrcp.pop %v3733
    %v3738 = vrcp.pop %v3736
    %v3739 = vmul.f32 %v3728, %v3737
    %v3740 = vmul.f32 %v3730, %v3738
    %3741 = vrot.lane.b32.xlu0 %v2301, 40
    %v3742 = vpop.permute.xlu0 %3741
    %v3745 = vsel %vm214, %v3739, 0
    %3747 = vmatprep.subr.mxu0 0.0
    %3748 = vmatpush1.msra.mxu0 0.0
    %3749 = vmatprep.subr.mxu0 0.0
    %3750 = vmatpush1.msra.mxu0 0.0
    %3751 = vmatprep.subr.mxu0 0.0
    %3752 = vmatpush1.msra.mxu0 0.0
    %3753 = vmatprep.subr.mxu0 0.0
    %3754 = vmatpush1.msra.mxu0 0.0
    %3755 = vmatprep.subr.mxu0 0.0
    %3756 = vmatpush1.msra.mxu0 0.0
    %3757 = vmatprep.subr.mxu0 0.0
    %3758 = vmatpush1.msra.mxu0 0.0
    %3759 = vmatprep.subr.mxu0 0.0
    %3760 = vmatpush1.msra.mxu0 0.0
    %3761 = vmatprep.subr.mxu0 0.0
    %3762 = vmatpush1.msra.mxu0 0.0
    %3763 = vmatprep.subr.mxu0 0.0
    %3764 = vmatpush1.msra.mxu0 0.0
    %3765 = vmatprep.subr.mxu0 0.0
    %3766 = vmatpush1.msra.mxu0 0.0
    %3767 = vmatprep.subr.mxu0 0.0
    %3768 = vmatpush1.msra.mxu0 0.0
    %3769 = vmatprep.subr.mxu0 0.0
    %3770 = vmatpush1.msra.mxu0 0.0
    %3771 = vmatprep.subr.mxu0 0.0
    %3772 = vmatpush1.msra.mxu0 0.0
    %3773 = vmatprep.subr.mxu0 0.0
    %3774 = vmatpush1.msra.mxu0 0.0
    %3775 = vmatprep.subr.mxu0 0.0
    %3776 = vmatpush1.msra.mxu0 0.0
    %3777 = vmatprep.subr.mxu0 0.0
    %3778 = vmatpush1.msra.mxu0 %v3742
    %3779 = vmatprep.subr.mxu0 0.0
    %3780 = vmatpush2.msra.mxu0 0.0
    %3781 = vmatprep.subr.mxu0 0.0
    %3782 = vmatpush2.msra.mxu0 0.0
    %3783 = vmatprep.subr.mxu0 0.0
    %3784 = vmatpush2.msra.mxu0 0.0
    %3785 = vmatprep.subr.mxu0 0.0
    %3786 = vmatpush2.msra.mxu0 0.0
    %3787 = vmatprep.subr.mxu0 0.0
    %3788 = vmatpush2.msra.mxu0 0.0
    %3789 = vmatprep.subr.mxu0 0.0
    %3790 = vmatpush2.msra.mxu0 0.0
    %3791 = vmatprep.subr.mxu0 0.0
    %3792 = vmatpush2.msra.mxu0 0.0
    %3793 = vmatprep.subr.mxu0 0.0
    %3794 = vmatpush2.msra.mxu0 0.0
    %3795 = vmatprep.subr.mxu0 0.0
    %3796 = vmatpush2.msra.mxu0 0.0
    %3797 = vmatprep.subr.mxu0 0.0
    %3798 = vmatpush2.msra.mxu0 0.0
    %3799 = vmatprep.subr.mxu0 0.0
    %3800 = vmatpush2.msra.mxu0 0.0
    %3801 = vmatprep.subr.mxu0 0.0
    %3802 = vmatpush2.msra.mxu0 0.0
    %3803 = vmatprep.subr.mxu0 0.0
    %3804 = vmatpush2.msra.mxu0 0.0
    %3805 = vmatprep.subr.mxu0 0.0
    %3806 = vmatpush2.msra.mxu0 0.0
    %3807 = vmatprep.subr.mxu0 0.0
    %3808 = vmatpush2.msra.mxu0 0.0
    %3809 = vmatprep.subr.mxu0 0.0
    %3810 = vmatpush2.msra.mxu0 0.0
    %3811 = vmatprep.mubr.f32.mxu0 0.0
    %3812 = vmatmul.mubr.f32.gmra.mxu0 %v3745
    %v3813 = vpop.f32.mrf.mxu0
    %v3814 = vadd.f32 0.0, %v3813
    %v3815 = vpop.f32.mrf.mxu0
    %3816 = vdwg.mxu0
    %3817 = vrot.lane.b32.xlu0 %v2306, 40
    %v3818 = vpop.permute.xlu0 %3817
    %v3821 = vsel %vm214, %v3740, 0
    %3823 = vmatprep.subr.mxu0 0.0
    %3824 = vmatpush1.msra.mxu0 0.0
    %3825 = vmatprep.subr.mxu0 0.0
    %3826 = vmatpush1.msra.mxu0 0.0
    %3827 = vmatprep.subr.mxu0 0.0
    %3828 = vmatpush1.msra.mxu0 0.0
    %3829 = vmatprep.subr.mxu0 0.0
    %3830 = vmatpush1.msra.mxu0 0.0
    %3831 = vmatprep.subr.mxu0 0.0
    %3832 = vmatpush1.msra.mxu0 0.0
    %3833 = vmatprep.subr.mxu0 0.0
    %3834 = vmatpush1.msra.mxu0 0.0
    %3835 = vmatprep.subr.mxu0 0.0
    %3836 = vmatpush1.msra.mxu0 0.0
    %3837 = vmatprep.subr.mxu0 0.0
    %3838 = vmatpush1.msra.mxu0 0.0
    %3839 = vmatprep.subr.mxu0 0.0
    %3840 = vmatpush1.msra.mxu0 0.0
    %3841 = vmatprep.subr.mxu0 0.0
    %3842 = vmatpush1.msra.mxu0 0.0
    %3843 = vmatprep.subr.mxu0 0.0
    %3844 = vmatpush1.msra.mxu0 0.0
    %3845 = vmatprep.subr.mxu0 0.0
    %3846 = vmatpush1.msra.mxu0 0.0
    %3847 = vmatprep.subr.mxu0 0.0
    %3848 = vmatpush1.msra.mxu0 0.0
    %3849 = vmatprep.subr.mxu0 0.0
    %3850 = vmatpush1.msra.mxu0 0.0
    %3851 = vmatprep.subr.mxu0 0.0
    %3852 = vmatpush1.msra.mxu0 0.0
    %3853 = vmatprep.subr.mxu0 0.0
    %3854 = vmatpush1.msra.mxu0 %v3818
    %3855 = vmatprep.subr.mxu0 0.0
    %3856 = vmatpush2.msra.mxu0 0.0
    %3857 = vmatprep.subr.mxu0 0.0
    %3858 = vmatpush2.msra.mxu0 0.0
    %3859 = vmatprep.subr.mxu0 0.0
    %3860 = vmatpush2.msra.mxu0 0.0
    %3861 = vmatprep.subr.mxu0 0.0
    %3862 = vmatpush2.msra.mxu0 0.0
    %3863 = vmatprep.subr.mxu0 0.0
    %3864 = vmatpush2.msra.mxu0 0.0
    %3865 = vmatprep.subr.mxu0 0.0
    %3866 = vmatpush2.msra.mxu0 0.0
    %3867 = vmatprep.subr.mxu0 0.0
    %3868 = vmatpush2.msra.mxu0 0.0
    %3869 = vmatprep.subr.mxu0 0.0
    %3870 = vmatpush2.msra.mxu0 0.0
    %3871 = vmatprep.subr.mxu0 0.0
    %3872 = vmatpush2.msra.mxu0 0.0
    %3873 = vmatprep.subr.mxu0 0.0
    %3874 = vmatpush2.msra.mxu0 0.0
    %3875 = vmatprep.subr.mxu0 0.0
    %3876 = vmatpush2.msra.mxu0 0.0
    %3877 = vmatprep.subr.mxu0 0.0
    %3878 = vmatpush2.msra.mxu0 0.0
    %3879 = vmatprep.subr.mxu0 0.0
    %3880 = vmatpush2.msra.mxu0 0.0
    %3881 = vmatprep.subr.mxu0 0.0
    %3882 = vmatpush2.msra.mxu0 0.0
    %3883 = vmatprep.subr.mxu0 0.0
    %3884 = vmatpush2.msra.mxu0 0.0
    %3885 = vmatprep.subr.mxu0 0.0
    %3886 = vmatpush2.msra.mxu0 0.0
    %3887 = vmatprep.mubr.f32.mxu0 0.0
    %3888 = vmatmul.mubr.f32.gmra.mxu0 %v3821
    %v3889 = vpop.f32.mrf.mxu0
    %v3890 = vadd.f32 0.0, %v3889
    %v3891 = vpop.f32.mrf.mxu0
    %3892 = vdwg.mxu0
    %v3894 = vsel %vm214, %v3814, 0
    %v3897 = vsel %vm214, %v3890, 0
    %3899 = vmatprep.subr.mxu0 0.0
    %3900 = vmatpush1.msra.mxu0 0.0
    %3901 = vmatprep.subr.mxu0 0.0
    %3902 = vmatpush1.msra.mxu0 0.0
    %3903 = vmatprep.subr.mxu0 0.0
    %3904 = vmatpush1.msra.mxu0 0.0
    %3905 = vmatprep.subr.mxu0 0.0
    %3906 = vmatpush1.msra.mxu0 0.0
    %3907 = vmatprep.subr.mxu0 0.0
    %3908 = vmatpush1.msra.mxu0 0.0
    %3909 = vmatprep.subr.mxu0 0.0
    %3910 = vmatpush1.msra.mxu0 0.0
    %3911 = vmatprep.subr.mxu0 0.0
    %3912 = vmatpush1.msra.mxu0 0.0
    %3913 = vmatprep.subr.mxu0 0.0
    %3914 = vmatpush1.msra.mxu0 0.0
    %3915 = vmatprep.subr.mxu0 0.0
    %3916 = vmatpush1.msra.mxu0 0.0
    %3917 = vmatprep.subr.mxu0 0.0
    %3918 = vmatpush1.msra.mxu0 0.0
    %3919 = vmatprep.subr.mxu0 0.0
    %3920 = vmatpush1.msra.mxu0 0.0
    %3921 = vmatprep.subr.mxu0 0.0
    %3922 = vmatpush1.msra.mxu0 0.0
    %3923 = vmatprep.subr.mxu0 0.0
    %3924 = vmatpush1.msra.mxu0 0.0
    %3925 = vmatprep.subr.mxu0 0.0
    %3926 = vmatpush1.msra.mxu0 0.0
    %3927 = vmatprep.subr.mxu0 0.0
    %3928 = vmatpush1.msra.mxu0 0.0
    %3929 = vmatprep.subr.mxu0 0.0
    %3930 = vmatpush1.msra.mxu0 %v2313
    %3931 = vmatprep.subr.mxu0 0.0
    %3932 = vmatpush2.msra.mxu0 0.0
    %3933 = vmatprep.subr.mxu0 0.0
    %3934 = vmatpush2.msra.mxu0 0.0
    %3935 = vmatprep.subr.mxu0 0.0
    %3936 = vmatpush2.msra.mxu0 0.0
    %3937 = vmatprep.subr.mxu0 0.0
    %3938 = vmatpush2.msra.mxu0 0.0
    %3939 = vmatprep.subr.mxu0 0.0
    %3940 = vmatpush2.msra.mxu0 0.0
    %3941 = vmatprep.subr.mxu0 0.0
    %3942 = vmatpush2.msra.mxu0 0.0
    %3943 = vmatprep.subr.mxu0 0.0
    %3944 = vmatpush2.msra.mxu0 0.0
    %3945 = vmatprep.subr.mxu0 0.0
    %3946 = vmatpush2.msra.mxu0 0.0
    %3947 = vmatprep.subr.mxu0 0.0
    %3948 = vmatpush2.msra.mxu0 0.0
    %3949 = vmatprep.subr.mxu0 0.0
    %3950 = vmatpush2.msra.mxu0 0.0
    %3951 = vmatprep.subr.mxu0 0.0
    %3952 = vmatpush2.msra.mxu0 0.0
    %3953 = vmatprep.subr.mxu0 0.0
    %3954 = vmatpush2.msra.mxu0 0.0
    %3955 = vmatprep.subr.mxu0 0.0
    %3956 = vmatpush2.msra.mxu0 0.0
    %3957 = vmatprep.subr.mxu0 0.0
    %3958 = vmatpush2.msra.mxu0 0.0
    %3959 = vmatprep.subr.mxu0 0.0
    %3960 = vmatpush2.msra.mxu0 0.0
    %3961 = vmatprep.subr.mxu0 0.0
    %3962 = vmatpush2.msra.mxu0 0.0
    %3963 = vmatprep.mubr.f32.mxu0 0.0
    %3964 = vmatmul.mubr.f32.gmra.mxu0 %v3894
    %v3965 = vpop.f32.mrf.mxu0
    %v3966 = vadd.f32 0.0, %v3965
    %v3967 = vpop.f32.mrf.mxu0
    %3968 = vmatprep.mubr.f32.mxu0 0.0
    %3969 = vmatmul.mubr.f32.gmra.mxu0 %v3897
    %v3970 = vpop.f32.mrf.mxu0
    %v3971 = vadd.f32 0.0, %v3970
    %v3972 = vpop.f32.mrf.mxu0
    %3973 = vdwg.mxu0
    %v3974 = vadd.f32 %v3557, %v3966
    %v3975 = vadd.f32 %v3558, %v3971
    %s3976 = scalar_lea.vmem %s7, 1
    %v3977 = vld [vmem:[%s3976] sm:$0x1]
    %v3979 = vlaneseq
    %v3980 = vshrl.u32 %v3979, 7
    %v3981 = vsub.s32 0, %v3980
    %v3982 = vrot.slane %v3977, %v3981
    %v3984 = vadd.f32 %v3974, %v3982
    %v3985 = vadd.f32 %v3975, %v3982
    %v3986 = vadd.f32 %v3984, %v2213
    %v3987 = vadd.f32 %v3985, %v2214
    %s3988 = scalar_lea.vmem %s8, 1
    %v3989 = vld [vmem:[%s3988] sm:$0x1]
    %s3990 = scalar_lea.vmem %s9, 1
    %v3991 = vld [vmem:[%s3990] sm:$0x1]
    %v3992 = vsel %vm70, %v3986, 0.0
    %3993 = vadd.xlane.f32.xlu0 %v3992
    %v3994 = vpop.xlane.xlu0 %3993
    %v3995 = vsel %vm70, %v3987, 0.0
    %3996 = vadd.xlane.f32.xlu0 %v3995
    %v3997 = vpop.xlane.xlu0 %3996
    %v3998 = vmul.f32 %v3994, %v77
    %v3999 = vmul.f32 %v3997, %v77
    %v4000 = vsub.f32 %v3986, %v3998
    %v4001 = vsub.f32 %v3987, %v3999
    %v4002 = vmul.f32 %v4000, %v4000
    %v4003 = vmul.f32 %v4001, %v4001
    %v4004 = vsel %vm70, %v4002, 0.0
    %4005 = vadd.xlane.f32.xlu0 %v4004
    %v4006 = vpop.xlane.xlu0 %4005
    %v4007 = vsel %vm70, %v4003, 0.0
    %4008 = vadd.xlane.f32.xlu0 %v4007
    %v4009 = vpop.xlane.xlu0 %4008
    %v4010 = vmul.f32 %v4006, %v77
    %v4011 = vmul.f32 %v4009, %v77
    %v4012 = vadd.f32 %v4010, 1e-12
    %v4013 = vadd.f32 %v4011, 1e-12
    %v4014 = vrsqrt.pop %v4012
    %v4015 = vrsqrt.pop %v4013
    %v4016 = vmul.f32 %v4000, %v4014
    %v4017 = vmul.f32 %v4001, %v4015
    %v4019 = vlaneseq
    %v4020 = vshrl.u32 %v4019, 7
    %v4021 = vsub.s32 0, %v4020
    %v4022 = vrot.slane %v3989, %v4021
    %v4024 = vmul.f32 %v4016, %v4022
    %v4025 = vmul.f32 %v4017, %v4022
    %v4027 = vlaneseq
    %v4028 = vshrl.u32 %v4027, 7
    %v4029 = vsub.s32 0, %v4028
    %v4030 = vrot.slane %v3991, %v4029
    %v4032 = vadd.f32 %v4024, %v4030
    %v4033 = vadd.f32 %v4025, %v4030
    %s4034 = scalar_lea.vmem %s10, 32
    %v4035 = vld [vmem:[%s4034] sm:$0xff]
    %v4036 = vld [vmem:[%s4034 + $0x8] sm:$0xff]
    %v4037 = vld [vmem:[%s4034 + $0x10] sm:$0xff]
    %v4038 = vld [vmem:[%s4034 + $0x18] sm:$0xff]
    %s4039 = scalar_lea.vmem %s11, 1
    %v4040 = vld [vmem:[%s4039] sm:$0x1]
    %v4042 = vlaneseq
    %v4043 = vshrl.u32 %v4042, 7
    %v4044 = vsub.s32 0, %v4043
    %v4045 = vrot.slane %v4040, %v4044
    %v4048 = vsel %vm70, %v4032, 0
    %v4051 = vsel %vm70, %v4033, 0
    %4053 = vmatprep.subr.mxu0 0.0
    %4054 = vmatpush1.msra.mxu0 0.0
    %4055 = vmatprep.subr.mxu0 0.0
    %4056 = vmatpush1.msra.mxu0 0.0
    %4057 = vmatprep.subr.mxu0 0.0
    %4058 = vmatpush1.msra.mxu0 0.0
    %4059 = vmatprep.subr.mxu0 0.0
    %4060 = vmatpush1.msra.mxu0 0.0
    %4061 = vmatprep.subr.mxu0 0.0
    %4062 = vmatpush1.msra.mxu0 0.0
    %4063 = vmatprep.subr.mxu0 0.0
    %4064 = vmatpush1.msra.mxu0 0.0
    %4065 = vmatprep.subr.mxu0 0.0
    %4066 = vmatpush1.msra.mxu0 0.0
    %4067 = vmatprep.subr.mxu0 0.0
    %4068 = vmatpush1.msra.mxu0 0.0
    %4069 = vmatprep.subr.mxu0 0.0
    %4070 = vmatpush1.msra.mxu0 0.0
    %4071 = vmatprep.subr.mxu0 0.0
    %4072 = vmatpush1.msra.mxu0 0.0
    %4073 = vmatprep.subr.mxu0 0.0
    %4074 = vmatpush1.msra.mxu0 0.0
    %4075 = vmatprep.subr.mxu0 0.0
    %4076 = vmatpush1.msra.mxu0 0.0
    %4077 = vmatprep.subr.mxu0 0.0
    %4078 = vmatpush1.msra.mxu0 %v4038
    %4079 = vmatprep.subr.mxu0 0.0
    %4080 = vmatpush1.msra.mxu0 %v4037
    %4081 = vmatprep.subr.mxu0 0.0
    %4082 = vmatpush1.msra.mxu0 %v4036
    %4083 = vmatprep.subr.mxu0 0.0
    %4084 = vmatpush1.msra.mxu0 %v4035
    %4085 = vmatprep.subr.mxu0 0.0
    %4086 = vmatpush2.msra.mxu0 0.0
    %4087 = vmatprep.subr.mxu0 0.0
    %4088 = vmatpush2.msra.mxu0 0.0
    %4089 = vmatprep.subr.mxu0 0.0
    %4090 = vmatpush2.msra.mxu0 0.0
    %4091 = vmatprep.subr.mxu0 0.0
    %4092 = vmatpush2.msra.mxu0 0.0
    %4093 = vmatprep.subr.mxu0 0.0
    %4094 = vmatpush2.msra.mxu0 0.0
    %4095 = vmatprep.subr.mxu0 0.0
    %4096 = vmatpush2.msra.mxu0 0.0
    %4097 = vmatprep.subr.mxu0 0.0
    %4098 = vmatpush2.msra.mxu0 0.0
    %4099 = vmatprep.subr.mxu0 0.0
    %4100 = vmatpush2.msra.mxu0 0.0
    %4101 = vmatprep.subr.mxu0 0.0
    %4102 = vmatpush2.msra.mxu0 0.0
    %4103 = vmatprep.subr.mxu0 0.0
    %4104 = vmatpush2.msra.mxu0 0.0
    %4105 = vmatprep.subr.mxu0 0.0
    %4106 = vmatpush2.msra.mxu0 0.0
    %4107 = vmatprep.subr.mxu0 0.0
    %4108 = vmatpush2.msra.mxu0 0.0
    %4109 = vmatprep.subr.mxu0 0.0
    %4110 = vmatpush2.msra.mxu0 0.0
    %4111 = vmatprep.subr.mxu0 0.0
    %4112 = vmatpush2.msra.mxu0 0.0
    %4113 = vmatprep.subr.mxu0 0.0
    %4114 = vmatpush2.msra.mxu0 0.0
    %4115 = vmatprep.subr.mxu0 0.0
    %4116 = vmatpush2.msra.mxu0 0.0
    %4117 = vmatprep.mubr.f32.mxu0 0.0
    %4118 = vmatmul.mubr.f32.gmra.mxu0 %v4048
    %v4119 = vpop.f32.mrf.mxu0
    %v4120 = vadd.f32 %v4045, %v4119
    %v4121 = vpop.f32.mrf.mxu0
    %4122 = vmatprep.mubr.f32.mxu0 0.0
    %4123 = vmatmul.mubr.f32.gmra.mxu0 %v4051
    %v4124 = vpop.f32.mrf.mxu0
    %v4125 = vadd.f32 %v4045, %v4124
    %v4126 = vpop.f32.mrf.mxu0
    %4127 = vdwg.mxu0
    %v4128 = vmul.f32 %v4120, 0.5
    %v4129 = vmul.f32 %v4125, 0.5
    %v4130 = vmul.f32 %v4120, 0.044715
    %v4131 = vmul.f32 %v4125, 0.044715
    %v4132 = vmul.f32 %v4130, %v4120
    %v4133 = vmul.f32 %v4131, %v4125
    %v4134 = vmul.f32 %v4132, %v4120
    %v4135 = vmul.f32 %v4133, %v4125
    %v4136 = vadd.f32 %v4120, %v4134
    %v4137 = vadd.f32 %v4125, %v4135
    %v4138 = vmul.f32 %v4136, 0.7978846
    %v4139 = vmul.f32 %v4137, 0.7978846
    %v4140 = vtanh.pop %v4138
    %v4141 = vtanh.pop %v4139
    %v4142 = vadd.f32 %v4140, 1.0
    %v4143 = vadd.f32 %v4141, 1.0
    %v4144 = vmul.f32 %v4128, %v4142
    %v4145 = vmul.f32 %v4129, %v4143
    %s4146 = scalar_lea.vmem %s12, 64
    %v4147 = vld [vmem:[%s4146] sm:$0xff]
    %v4148 = vld [vmem:[%s4146 + $0x8] sm:$0xff]
    %v4149 = vld [vmem:[%s4146 + $0x10] sm:$0xff]
    %v4150 = vld [vmem:[%s4146 + $0x18] sm:$0xff]
    %v4151 = vld [vmem:[%s4146 + $0x20] sm:$0xff]
    %v4152 = vld [vmem:[%s4146 + $0x28] sm:$0xff]
    %v4153 = vld [vmem:[%s4146 + $0x30] sm:$0xff]
    %v4154 = vld [vmem:[%s4146 + $0x38] sm:$0xff]
    %s4155 = scalar_lea.vmem %s13, 1
    %v4156 = vld [vmem:[%s4155] sm:$0x1]
    %v4158 = vlaneseq
    %v4159 = vshrl.u32 %v4158, 7
    %v4160 = vsub.s32 0, %v4159
    %v4161 = vrot.slane %v4156, %v4160
    %v4164 = vsel %vm2087, %v4144, 0
    %v4167 = vsel %vm2087, %v4145, 0
    %4169 = vmatprep.subr.mxu0 0.0
    %4170 = vmatpush1.msra.mxu0 0.0
    %4171 = vmatprep.subr.mxu0 0.0
    %4172 = vmatpush1.msra.mxu0 0.0
    %4173 = vmatprep.subr.mxu0 0.0
    %4174 = vmatpush1.msra.mxu0 0.0
    %4175 = vmatprep.subr.mxu0 0.0
    %4176 = vmatpush1.msra.mxu0 0.0
    %4177 = vmatprep.subr.mxu0 0.0
    %4178 = vmatpush1.msra.mxu0 0.0
    %4179 = vmatprep.subr.mxu0 0.0
    %4180 = vmatpush1.msra.mxu0 0.0
    %4181 = vmatprep.subr.mxu0 0.0
    %4182 = vmatpush1.msra.mxu0 0.0
    %4183 = vmatprep.subr.mxu0 0.0
    %4184 = vmatpush1.msra.mxu0 0.0
    %4185 = vmatprep.subr.mxu0 0.0
    %4186 = vmatpush1.msra.mxu0 %v4154
    %4187 = vmatprep.subr.mxu0 0.0
    %4188 = vmatpush1.msra.mxu0 %v4153
    %4189 = vmatprep.subr.mxu0 0.0
    %4190 = vmatpush1.msra.mxu0 %v4152
    %4191 = vmatprep.subr.mxu0 0.0
    %4192 = vmatpush1.msra.mxu0 %v4151
    %4193 = vmatprep.subr.mxu0 0.0
    %4194 = vmatpush1.msra.mxu0 %v4150
    %4195 = vmatprep.subr.mxu0 0.0
    %4196 = vmatpush1.msra.mxu0 %v4149
    %4197 = vmatprep.subr.mxu0 0.0
    %4198 = vmatpush1.msra.mxu0 %v4148
    %4199 = vmatprep.subr.mxu0 0.0
    %4200 = vmatpush1.msra.mxu0 %v4147
    %4201 = vmatprep.subr.mxu0 0.0
    %4202 = vmatpush2.msra.mxu0 0.0
    %4203 = vmatprep.subr.mxu0 0.0
    %4204 = vmatpush2.msra.mxu0 0.0
    %4205 = vmatprep.subr.mxu0 0.0
    %4206 = vmatpush2.msra.mxu0 0.0
    %4207 = vmatprep.subr.mxu0 0.0
    %4208 = vmatpush2.msra.mxu0 0.0
    %4209 = vmatprep.subr.mxu0 0.0
    %4210 = vmatpush2.msra.mxu0 0.0
    %4211 = vmatprep.subr.mxu0 0.0
    %4212 = vmatpush2.msra.mxu0 0.0
    %4213 = vmatprep.subr.mxu0 0.0
    %4214 = vmatpush2.msra.mxu0 0.0
    %4215 = vmatprep.subr.mxu0 0.0
    %4216 = vmatpush2.msra.mxu0 0.0
    %4217 = vmatprep.subr.mxu0 0.0
    %4218 = vmatpush2.msra.mxu0 0.0
    %4219 = vmatprep.subr.mxu0 0.0
    %4220 = vmatpush2.msra.mxu0 0.0
    %4221 = vmatprep.subr.mxu0 0.0
    %4222 = vmatpush2.msra.mxu0 0.0
    %4223 = vmatprep.subr.mxu0 0.0
    %4224 = vmatpush2.msra.mxu0 0.0
    %4225 = vmatprep.subr.mxu0 0.0
    %4226 = vmatpush2.msra.mxu0 0.0
    %4227 = vmatprep.subr.mxu0 0.0
    %4228 = vmatpush2.msra.mxu0 0.0
    %4229 = vmatprep.subr.mxu0 0.0
    %4230 = vmatpush2.msra.mxu0 0.0
    %4231 = vmatprep.subr.mxu0 0.0
    %4232 = vmatpush2.msra.mxu0 0.0
    %4233 = vmatprep.mubr.f32.mxu0 0.0
    %4234 = vmatmul.mubr.f32.gmra.mxu0 %v4164
    %v4235 = vpop.f32.mrf.mxu0
    %v4236 = vadd.f32 %v4161, %v4235
    %v4237 = vpop.f32.mrf.mxu0
    %4238 = vmatprep.mubr.f32.mxu0 0.0
    %4239 = vmatmul.mubr.f32.gmra.mxu0 %v4167
    %v4240 = vpop.f32.mrf.mxu0
    %v4241 = vadd.f32 %v4161, %v4240
    %v4242 = vpop.f32.mrf.mxu0
    %4243 = vdwg.mxu0
    %v4244 = vadd.f32 %v4236, %v4032
    %v4245 = vadd.f32 %v4241, %v4033
    %s4246 = scalar_lea.vmem %s14, 1
    %v4247 = vld [vmem:[%s4246] sm:$0x1]
    %s4248 = scalar_lea.vmem %s15, 1
    %v4249 = vld [vmem:[%s4248] sm:$0x1]
    %v4250 = vsel %vm70, %v4244, 0.0
    %4251 = vadd.xlane.f32.xlu0 %v4250
    %v4252 = vpop.xlane.xlu0 %4251
    %v4253 = vsel %vm70, %v4245, 0.0
    %4254 = vadd.xlane.f32.xlu0 %v4253
    %v4255 = vpop.xlane.xlu0 %4254
    %v4256 = vmul.f32 %v4252, %v77
    %v4257 = vmul.f32 %v4255, %v77
    %v4258 = vsub.f32 %v4244, %v4256
    %v4259 = vsub.f32 %v4245, %v4257
    %v4260 = vmul.f32 %v4258, %v4258
    %v4261 = vmul.f32 %v4259, %v4259
    %v4262 = vsel %vm70, %v4260, 0.0
    %4263 = vadd.xlane.f32.xlu0 %v4262
    %v4264 = vpop.xlane.xlu0 %4263
    %v4265 = vsel %vm70, %v4261, 0.0
    %4266 = vadd.xlane.f32.xlu0 %v4265
    %v4267 = vpop.xlane.xlu0 %4266
    %v4268 = vmul.f32 %v4264, %v77
    %v4269 = vmul.f32 %v4267, %v77
    %v4270 = vadd.f32 %v4268, 1e-12
    %v4271 = vadd.f32 %v4269, 1e-12
    %v4272 = vrsqrt.pop %v4270
    %v4273 = vrsqrt.pop %v4271
    %v4274 = vmul.f32 %v4258, %v4272
    %v4275 = vmul.f32 %v4259, %v4273
    %v4277 = vlaneseq
    %v4278 = vshrl.u32 %v4277, 7
    %v4279 = vsub.s32 0, %v4278
    %v4280 = vrot.slane %v4247, %v4279
    %v4282 = vmul.f32 %v4274, %v4280
    %v4283 = vmul.f32 %v4275, %v4280
    %v4285 = vlaneseq
    %v4286 = vshrl.u32 %v4285, 7
    %v4287 = vsub.s32 0, %v4286
    %v4288 = vrot.slane %v4249, %v4287
    %v4290 = vadd.f32 %v4282, %v4288
    %v4291 = vadd.f32 %v4283, %v4288
    %v4292 = vld [vmem:[%s16] sm:$0xff]
    %v4293 = vld [vmem:[%s16 + $0x8] sm:$0xff]
    %v4294 = vld [vmem:[%s16 + $0x10] sm:$0xff]
    %v4295 = vld [vmem:[%s16 + $0x18] sm:$0xff]
    %v4296 = vld [vmem:[%s17] sm:$0x1]
    %v4298 = vlaneseq
    %v4299 = vshrl.u32 %v4298, 7
    %v4300 = vsub.s32 0, %v4299
    %v4301 = vrot.slane %v4296, %v4300
    %v4305 = vrot.slane %v4291, 7
    %vm4306 = vcmask 1041409
    %v4307 = vsel %vm4306, %v4305, %v4290
    %v4308 = vsel %vm70, %v4307, 0
    %4310 = vmatprep.subr.mxu0 0.0
    %4311 = vmatpush1.msra.mxu0 0.0
    %4312 = vmatprep.subr.mxu0 0.0
    %4313 = vmatpush1.msra.mxu0 0.0
    %4314 = vmatprep.subr.mxu0 0.0
    %4315 = vmatpush1.msra.mxu0 0.0
    %4316 = vmatprep.subr.mxu0 0.0
    %4317 = vmatpush1.msra.mxu0 0.0
    %4318 = vmatprep.subr.mxu0 0.0
    %4319 = vmatpush1.msra.mxu0 0.0
    %4320 = vmatprep.subr.mxu0 0.0
    %4321 = vmatpush1.msra.mxu0 0.0
    %4322 = vmatprep.subr.mxu0 0.0
    %4323 = vmatpush1.msra.mxu0 0.0
    %4324 = vmatprep.subr.mxu0 0.0
    %4325 = vmatpush1.msra.mxu0 0.0
    %4326 = vmatprep.subr.mxu0 0.0
    %4327 = vmatpush1.msra.mxu0 0.0
    %4328 = vmatprep.subr.mxu0 0.0
    %4329 = vmatpush1.msra.mxu0 0.0
    %4330 = vmatprep.subr.mxu0 0.0
    %4331 = vmatpush1.msra.mxu0 0.0
    %4332 = vmatprep.subr.mxu0 0.0
    %4333 = vmatpush1.msra.mxu0 0.0
    %4334 = vmatprep.subr.mxu0 0.0
    %4335 = vmatpush1.msra.mxu0 %v4295
    %4336 = vmatprep.subr.mxu0 0.0
    %4337 = vmatpush1.msra.mxu0 %v4294
    %4338 = vmatprep.subr.mxu0 0.0
    %4339 = vmatpush1.msra.mxu0 %v4293
    %4340 = vmatprep.subr.mxu0 0.0
    %4341 = vmatpush1.msra.mxu0 %v4292
    %4342 = vmatprep.subr.mxu0 0.0
    %4343 = vmatpush2.msra.mxu0 0.0
    %4344 = vmatprep.subr.mxu0 0.0
    %4345 = vmatpush2.msra.mxu0 0.0
    %4346 = vmatprep.subr.mxu0 0.0
    %4347 = vmatpush2.msra.mxu0 0.0
    %4348 = vmatprep.subr.mxu0 0.0
    %4349 = vmatpush2.msra.mxu0 0.0
    %4350 = vmatprep.subr.mxu0 0.0
    %4351 = vmatpush2.msra.mxu0 0.0
    %4352 = vmatprep.subr.mxu0 0.0
    %4353 = vmatpush2.msra.mxu0 0.0
    %4354 = vmatprep.subr.mxu0 0.0
    %4355 = vmatpush2.msra.mxu0 0.0
    %4356 = vmatprep.subr.mxu0 0.0
    %4357 = vmatpush2.msra.mxu0 0.0
    %4358 = vmatprep.subr.mxu0 0.0
    %4359 = vmatpush2.msra.mxu0 0.0
    %4360 = vmatprep.subr.mxu0 0.0
    %4361 = vmatpush2.msra.mxu0 0.0
    %4362 = vmatprep.subr.mxu0 0.0
    %4363 = vmatpush2.msra.mxu0 0.0
    %4364 = vmatprep.subr.mxu0 0.0
    %4365 = vmatpush2.msra.mxu0 0.0
    %4366 = vmatprep.subr.mxu0 0.0
    %4367 = vmatpush2.msra.mxu0 0.0
    %4368 = vmatprep.subr.mxu0 0.0
    %4369 = vmatpush2.msra.mxu0 0.0
    %4370 = vmatprep.subr.mxu0 0.0
    %4371 = vmatpush2.msra.mxu0 0.0
    %4372 = vmatprep.subr.mxu0 0.0
    %4373 = vmatpush2.msra.mxu0 0.0
    %4374 = vmatprep.mubr.f32.mxu0 0.0
    %4375 = vmatmul.mubr.f32.gmra.mxu0 %v4308
    %v4376 = vpop.f32.mrf.mxu0
    %v4377 = vadd.f32 %v4301, %v4376
    %v4378 = vpop.f32.mrf.mxu0
    %4379 = vdwg.mxu0
    %v4380 = vtanh.pop %v4377
    %v4381 = vld [vmem:[%s18] sm:$0xff]
    %v4382 = vld [vmem:[%s18 + $0x8] sm:$0xff]
    %v4383 = vld [vmem:[%s18 + $0x10] sm:$0xff]
    %v4384 = vld [vmem:[%s18 + $0x18] sm:$0xff]
    %v4385 = vld [vmem:[%s19] sm:$0x1]
    %v4387 = vlaneseq
    %v4388 = vshrl.u32 %v4387, 7
    %v4389 = vsub.s32 0, %v4388
    %v4390 = vrot.slane %v4385, %v4389
    %v4393 = vsel %vm70, %v4380, 0
    %4395 = vmatprep.subr.mxu0 0.0
    %4396 = vmatpush1.msra.mxu0 0.0
    %4397 = vmatprep.subr.mxu0 0.0
    %4398 = vmatpush1.msra.mxu0 0.0
    %4399 = vmatprep.subr.mxu0 0.0
    %4400 = vmatpush1.msra.mxu0 0.0
    %4401 = vmatprep.subr.mxu0 0.0
    %4402 = vmatpush1.msra.mxu0 0.0
    %4403 = vmatprep.subr.mxu0 0.0
    %4404 = vmatpush1.msra.mxu0 0.0
    %4405 = vmatprep.subr.mxu0 0.0
    %4406 = vmatpush1.msra.mxu0 0.0
    %4407 = vmatprep.subr.mxu0 0.0
    %4408 = vmatpush1.msra.mxu0 0.0
    %4409 = vmatprep.subr.mxu0 0.0
    %4410 = vmatpush1.msra.mxu0 0.0
    %4411 = vmatprep.subr.mxu0 0.0
    %4412 = vmatpush1.msra.mxu0 0.0
    %4413 = vmatprep.subr.mxu0 0.0
    %4414 = vmatpush1.msra.mxu0 0.0
    %4415 = vmatprep.subr.mxu0 0.0
    %4416 = vmatpush1.msra.mxu0 0.0
    %4417 = vmatprep.subr.mxu0 0.0
    %4418 = vmatpush1.msra.mxu0 0.0
    %4419 = vmatprep.subr.mxu0 0.0
    %4420 = vmatpush1.msra.mxu0 %v4384
    %4421 = vmatprep.subr.mxu0 0.0
    %4422 = vmatpush1.msra.mxu0 %v4383
    %4423 = vmatprep.subr.mxu0 0.0
    %4424 = vmatpush1.msra.mxu0 %v4382
    %4425 = vmatprep.subr.mxu0 0.0
    %4426 = vmatpush1.msra.mxu0 %v4381
    %4427 = vmatprep.subr.mxu0 0.0
    %4428 = vmatpush2.msra.mxu0 0.0
    %4429 = vmatprep.subr.mxu0 0.0
    %4430 = vmatpush2.msra.mxu0 0.0
    %4431 = vmatprep.subr.mxu0 0.0
    %4432 = vmatpush2.msra.mxu0 0.0
    %4433 = vmatprep.subr.mxu0 0.0
    %4434 = vmatpush2.msra.mxu0 0.0
    %4435 = vmatprep.subr.mxu0 0.0
    %4436 = vmatpush2.msra.mxu0 0.0
    %4437 = vmatprep.subr.mxu0 0.0
    %4438 = vmatpush2.msra.mxu0 0.0
    %4439 = vmatprep.subr.mxu0 0.0
    %4440 = vmatpush2.msra.mxu0 0.0
    %4441 = vmatprep.subr.mxu0 0.0
    %4442 = vmatpush2.msra.mxu0 0.0
    %4443 = vmatprep.subr.mxu0 0.0
    %4444 = vmatpush2.msra.mxu0 0.0
    %4445 = vmatprep.subr.mxu0 0.0
    %4446 = vmatpush2.msra.mxu0 0.0
    %4447 = vmatprep.subr.mxu0 0.0
    %4448 = vmatpush2.msra.mxu0 0.0
    %4449 = vmatprep.subr.mxu0 0.0
    %4450 = vmatpush2.msra.mxu0 0.0
    %4451 = vmatprep.subr.mxu0 0.0
    %4452 = vmatpush2.msra.mxu0 0.0
    %4453 = vmatprep.subr.mxu0 0.0
    %4454 = vmatpush2.msra.mxu0 0.0
    %4455 = vmatprep.subr.mxu0 0.0
    %4456 = vmatpush2.msra.mxu0 0.0
    %4457 = vmatprep.subr.mxu0 0.0
    %4458 = vmatpush2.msra.mxu0 0.0
    %4459 = vmatprep.mubr.f32.mxu0 0.0
    %4460 = vmatmul.mubr.f32.gmra.mxu0 %v4393
    %v4461 = vpop.f32.mrf.mxu0
    %v4462 = vadd.f32 %v4390, %v4461
    %v4463 = vpop.f32.mrf.mxu0
    %4464 = vdwg.mxu0
    %vm4465 = vcmask 17408
    %4466 = vst.msk [vmem:[#allocation2] sm:$0x3] %vm4465, %v4462
    // Predicated region
    $region82: #{interest_classifier_forward.1} parent=1 // pred_check
      _
    $region83: #{interest_classifier_forward.1} parent=1 // pred_check_branch
      %4468 = sbr.rel (0) target = $region85
    $region84: #{interest_classifier_forward.1} parent=1 // pred_region
      %s4470 = ssub.s32 32, 32
      %4471 = vsyncadd [#allocation3], %s4470
      %s4473 = sshll.u32 [#allocation2], 4
      %s4474 = int_to_ptr.vmem [resolvable:$true] %s4473
      %4476 = dma.vmem_to_hbm [thread:$0]  %s4474, 32, %s20, [#allocation3]
    $region85: #{interest_classifier_forward.1} parent=1 // pred_fallthru
      _
    // Predicated region
    $region86: #{interest_classifier_forward.1} parent=1 // pred_check
      _
    $region87: #{interest_classifier_forward.1} parent=1 // pred_check_branch
      %4478 = sbr.rel (0) target = $region89
    $region88: #{interest_classifier_forward.1} parent=1 // pred_region
      %4479 = dma.done [#allocation3], 32
    $region89: #{interest_classifier_forward.1} parent=1 // pred_fallthru
      _
    %4480 = vsyncpa [#allocation3], 1

</llo_original>
